<compile_context>
chip_gen: v7x
topology: tpu7x:2x2x1
jax: 0.10.0
libtpu: 0.0.40
codegen_flags: <defaults>
</compile_context>

<pallas_src>
import functools

import jax
import jax.numpy as jnp
from jax.experimental import pallas as pl
from jax.experimental.pallas import tpu as pltpu


def _round_up(x, m):
    return (x + m - 1) // m * m


def _cdiv(a, b):
    return (a + b - 1) // b


def _vmem_capacity_bytes():
    try:
        return int(pltpu.get_tpu_info().vmem_capacity_bytes)
    except Exception:
        return 64 * 1024 * 1024  # conservative: v7x per-core VMEM


def _lstm_kernel(x_ref, m_ref, wih_ref, whh_ref, b_ref,
                 out_ref, hn_ref, cn_ref, xg_ref, *,
                 hidden, batch_block, time_steps, out_width, unroll):
    """One grid step == one (batch-block, time-chunk) tile.

    x_ref   : (TS, BB, D)   bf16  input chunk (time-major)
    m_ref   : (TS, BB, 1)   f32   precomputed validity mask (t < length)
    wih_ref : (D, Gp)       bf16  W_ih^T, gates packed [i|f|o|g] at width H
    whh_ref : (H, Gp)       bf16  W_hh^T, same packing
    b_ref   : (1, Gp)       f32   b_ih + b_hh, same packing
    out_ref : (TS, BB, Hp)  bf16  per-step hidden output (zero past length)
    hn_ref  : (BB, H)       f32   resident carried hidden state / final h_n
    cn_ref  : (BB, H)       f32   resident carried cell state / final c_n
    xg_ref  : (TS, BB, Gp)  bf16  VMEM scratch: hoisted input-gate projection
    """
    H, BB, TS, Hp = hidden, batch_block, time_steps, out_width
    D = x_ref.shape[-1]
    Gp = xg_ref.shape[-1]
    c_idx = pl.program_id(1)                       # time-chunk index (inner axis)

    @pl.when(c_idx == 0)
    def _init():
        hn_ref[...] = jnp.zeros_like(hn_ref)
        cn_ref[...] = jnp.zeros_like(cn_ref)

    # Hoisted input projection: ONE (TS*BB, D) x (D, Gp) MXU matmul per chunk,
    # bias added in f32, result stored bf16 (halves the scratch VMEM).
    x2d = x_ref[...].reshape(TS * BB, D)
    proj = jnp.dot(x2d, wih_ref[...],
                   preferred_element_type=jnp.float32) + b_ref[...]
    xg_ref[...] = proj.astype(jnp.bfloat16).reshape(TS, BB, Gp)

    whh = whh_ref[...]                             # loop-invariant bf16 weights
    # TODO(synk): weight-stationary MXU driving (pltpu.matmul_push_rhs /
    # matmul_acc_lhs) could keep W_hh^T resident across all TS steps.

    def step(s, carry):
        h, c = carry
        # Only the recurrent matmul remains on the serial path.
        gates = xg_ref[s].astype(jnp.float32) + jnp.dot(
            h.astype(jnp.bfloat16), whh, preferred_element_type=jnp.float32)

        # Packed gate order [i | f | o | g], each slice H lanes wide.
        # sigmoid(x) = 0.5*(tanh(0.5*x)+1): one EUP pass covers i, f and o.
        sg = jnp.tanh(gates[:, :3 * H] * 0.5) * 0.5 + 0.5
        i_g = sg[:, 0 * H:1 * H]
        f_g = sg[:, 1 * H:2 * H]
        o_g = sg[:, 2 * H:3 * H]
        g_g = jnp.tanh(gates[:, 3 * H:4 * H])

        c_new = f_g * c + i_g * g_g
        h_new = o_g * jnp.tanh(c_new)

        # Hoisted mask: one cheap slice + one broadcast per step, reused 3x.
        valid = jnp.broadcast_to(m_ref[s] > 0.0, (BB, H))
        h = jnp.where(valid, h_new, h)
        c = jnp.where(valid, c_new, c)

        out_val = jnp.where(valid, h_new, 0.0).astype(out_ref.dtype)
        if H == Hp:
            out_ref[s] = out_val
        else:
            # pad to the lane-dense output width so the store stays unmasked
            out_ref[s] = jnp.concatenate(
                [out_val, jnp.zeros((BB, Hp - H), out_ref.dtype)], axis=-1)
        return h, c

    h, c = jax.lax.fori_loop(0, TS, step, (hn_ref[...], cn_ref[...]),
                             unroll=unroll)
    hn_ref[...] = h
    cn_ref[...] = c


def lstm_forward_pallas(x_btd, lengths, w_ih, w_hh, b_ih, b_hh, *,
                        time_chunk=None, batch_block=None):
    """x_btd: (B, T, D), lengths: (B,) int with max(lengths) == T.

    Returns (out (B,T,H), last_timestep (B,H), (h_n (1,B,H), c_n (1,B,H)))
    matching mmlatch RNN.forward for a unidirectional 1-layer LSTM, dropout=0.
    """
    B, T, D = x_btd.shape
    H = w_hh.shape[1]

    LANE, SUB = 128, 16                     # 16 sublanes: bf16 output packing
    G = 4 * H
    Gp = _round_up(G, LANE)                 # packed gate width (lane aligned)
    Hpad = _round_up(H, LANE)               # lane-dense output width

    # ---- batch blocking (parallel grid axis; 2 blocks feed v7x's 2 TCs) ----
    Bp0 = _round_up(B, SUB)
    if batch_block is None:
        if Bp0 <= SUB:
            BB = Bp0
        elif (Bp0 // 2) % SUB == 0:
            BB = Bp0 // 2
        else:
            BB = SUB
    else:
        BB = _round_up(min(int(batch_block), Bp0), SUB)
    NB = _cdiv(Bp0, BB)
    Bp = NB * BB

    # ---- VMEM-budgeted time chunk + explicit scoped-VMEM limit -------------
    cap = _vmem_capacity_bytes()
    vmem_limit = int(min(cap * 3 // 4, 100 * 1024 * 1024))
    if time_chunk is not None:
        TS = max(1, min(int(time_chunk), T))
    else:
        bytes_per_step = BB * (
            2 * D * 2            # x block, bf16, double-buffered
            + 2 * Hpad * 2       # out block, bf16, double-buffered
            + Gp * 2             # xg scratch, bf16
            + 2 * LANE * 4       # mask block (lane-padded), f32, double-buffered
        )
        const_bytes = 2 * ((D + H) * Gp * 2 + Gp * 4 + BB * LANE * 4)
        TS = (vmem_limit // 2 - const_bytes) // max(bytes_per_step, 1)
        TS = int(max(1, min(T, 128, TS)))
        if TS >= 8:
            TS -= TS % 8
    Tp = _round_up(T, TS)
    NC = Tp // TS
    unroll = max(u for u in (8, 4, 2, 1) if TS % u == 0)

    # ---- gate-packed ([i|f|o|g]) transposed weights, bf16 for the MXU ------
    perm = jnp.array((0, 1, 3, 2), dtype=jnp.int32)   # PyTorch [i,f,g,o]

    def pack_T(w, in_dim):
        wg = w.astype(jnp.float32).reshape(4, H, in_dim)[perm]   # (4, H, in)
        wg = jnp.transpose(wg, (2, 0, 1)).reshape(in_dim, G)     # (in, 4H)
        return jnp.pad(wg, ((0, 0), (0, Gp - G)))

    wih_t = pack_T(w_ih, D).astype(jnp.bfloat16)                 # (D, Gp)
    whh_t = pack_T(w_hh, H).astype(jnp.bfloat16)                 # (H, Gp)
    bias_p = jnp.pad(
        (b_ih + b_hh).astype(jnp.float32).reshape(4, H)[perm].reshape(1, G),
        ((0, 0), (0, Gp - G)))                                   # (1, Gp)

    # ---- time-major padded input + hoisted validity mask -------------------
    x_p = jnp.pad(x_btd.astype(jnp.float32),
                  ((0, Bp - B), (0, Tp - T), (0, 0)))            # (Bp, Tp, D)
    x_p = jnp.transpose(x_p, (1, 0, 2)).astype(jnp.bfloat16)     # (Tp, Bp, D)

    lens_p = jnp.pad(lengths.astype(jnp.int32), (0, Bp - B))
    mask_p = (jnp.arange(Tp, dtype=jnp.int32)[:, None]
              < lens_p[None, :]).astype(jnp.float32)[:, :, None]  # (Tp, Bp, 1)

    kernel = functools.partial(
        _lstm_kernel, hidden=H, batch_block=BB, time_steps=TS,
        out_width=Hpad, unroll=unroll)

    out_shapes = (
        jax.ShapeDtypeStruct((Tp, Bp, Hpad), jnp.bfloat16),      # per-step out
        jax.ShapeDtypeStruct((Bp, H), jnp.float32),              # h_n
        jax.ShapeDtypeStruct((Bp, H), jnp.float32),              # c_n
    )

    def _run(single_buffer_consts):
        # Constant operands never change (index map (0,0)); single-buffering
        # them avoids a second full weight copy in VMEM.
        const_kw = (dict(pipeline_mode=pl.Buffered(buffer_count=1))
                    if single_buffer_consts else {})
        grid_spec = pltpu.PrefetchScalarGridSpec(
            num_scalar_prefetch=0,
            grid=(NB, NC),
            in_specs=[
                pl.BlockSpec((TS, BB, D), lambda b, c: (c, b, 0)),   # x chunk
                pl.BlockSpec((TS, BB, 1), lambda b, c: (c, b, 0)),   # mask
                pl.BlockSpec((D, Gp), lambda b, c: (0, 0), **const_kw),
                pl.BlockSpec((H, Gp), lambda b, c: (0, 0), **const_kw),
                pl.BlockSpec((1, Gp), lambda b, c: (0, 0), **const_kw),
            ],
            out_specs=[
                pl.BlockSpec((TS, BB, Hpad), lambda b, c: (c, b, 0)),
                pl.BlockSpec((BB, H), lambda b, c: (b, 0)),          # resident
                pl.BlockSpec((BB, H), lambda b, c: (b, 0)),          # resident
            ],
            scratch_shapes=[pltpu.VMEM((TS, BB, Gp), jnp.bfloat16)],
        )
        return pl.pallas_call(
            kernel,
            out_shape=out_shapes,
            grid_spec=grid_spec,
            compiler_params=pltpu.CompilerParams(
                # batch blocks are independent -> parallel; time is serial.
                dimension_semantics=("parallel", "arbitrary"),
                vmem_limit_bytes=vmem_limit),
        )(x_p, mask_p, wih_t, whh_t, bias_p)

    try:
        out_p, hn_p, cn_p = _run(True)
    except Exception:
        # pl.Buffered(1) single-buffering not supported on this jax build.
        out_p, hn_p, cn_p = _run(False)

    # Module API is batch-first; XLA does the (cheap, one-shot) relayout here.
    out = jnp.transpose(out_p[:T, :B, :H].astype(jnp.float32), (1, 0, 2))
    h_n = hn_p[:B, :]
    c_n = cn_p[:B, :]

    # dropout(p=0) identity; _select_last_unpadded gather (clamped for len 0).
    gather_idx = jnp.maximum(lengths.astype(jnp.int32) - 1, 0)[:, None, None]
    gather_idx = jnp.broadcast_to(gather_idx, (B, 1, H))
    last_timestep = jnp.take_along_axis(out, gather_idx, axis=1)[:, 0, :]

    hidden = (h_n[None, :, :], c_n[None, :, :])                  # (1, B, H) each
    return out, last_timestep, hidden


def _lstm_reference(x_btd, lengths, w_ih, w_hh, b_ih, b_hh):
    """Pure-JAX f32 reference (masked lax.scan) for validation."""
    B, T, D = x_btd.shape
    H = w_hh.shape[1]
    x_tbd = jnp.transpose(x_btd.astype(jnp.float32), (1, 0, 2))
    hi = jax.lax.Precision.HIGHEST

    def step(carry, inputs):
        h, c = carry
        x_t, t = inputs
        gates = (jnp.dot(x_t, w_ih.T, precision=hi)
                 + jnp.dot(h, w_hh.T, precision=hi) + b_ih + b_hh)
        i_g = jax.nn.sigmoid(gates[:, 0:H])
        f_g = jax.nn.sigmoid(gates[:, H:2 * H])
        g_g = jnp.tanh(gates[:, 2 * H:3 * H])
        o_g = jax.nn.sigmoid(gates[:, 3 * H:4 * H])
        c_new = f_g * c + i_g * g_g
        h_new = o_g * jnp.tanh(c_new)
        mask = (t < lengths)[:, None].astype(jnp.float32)
        h2 = mask * h_new + (1.0 - mask) * h
        c2 = mask * c_new + (1.0 - mask) * c
        return (h2, c2), mask * h_new

    init = (jnp.zeros((B, H), jnp.float32), jnp.zeros((B, H), jnp.float32))
    (h_n, c_n), out_tbh = jax.lax.scan(step, init, (x_tbd, jnp.arange(T)))
    return jnp.transpose(out_tbh, (1, 0, 2)), h_n, c_n


def _check(x, lengths, w_ih, w_hh, b_ih, b_hh, **kw):
    B, T, _ = x.shape
    H = w_hh.shape[1]
    ref_out, ref_hn, ref_cn = _lstm_reference(x, lengths, w_ih, w_hh, b_ih, b_hh)
    ref_last = jnp.take_along_axis(
        ref_out,
        jnp.broadcast_to(jnp.maximum(lengths - 1, 0)[:, None, None], (B, 1, H)),
        axis=1)[:, 0, :]

    out, last_timestep, (h_n, c_n) = lstm_forward_pallas(
        x, lengths, w_ih, w_hh, b_ih, b_hh, **kw)
    jax.block_until_ready((out, last_timestep, h_n, c_n))

    # bf16 MXU inputs / bf16 gate scratch with f32 accumulation and f32 state.
    TOL = dict(rtol=2e-2, atol=2e-2)
    assert jnp.allclose(out, ref_out, **TOL)
    assert jnp.allclose(h_n[0], ref_hn, **TOL)
    assert jnp.allclose(c_n[0], ref_cn, **TOL)
    assert jnp.allclose(last_timestep, ref_last, **TOL)


if __name__ == "__main__":
    # Small shapes consistent with the module: batch=4, seq=8, input=16, hidden=32.
    B, T, D, H = 4, 8, 16, 32

    key = jax.random.PRNGKey(0)
    kx, k1, k2, k3, k4, kx2, kl2 = jax.random.split(key, 7)

    x = jax.random.normal(kx, (B, T, D), dtype=jnp.float32)
    lengths = jnp.array([8, 5, 3, 7], dtype=jnp.int32)        # max == T

    # PyTorch LSTM default init: U(-1/sqrt(H), 1/sqrt(H))
    k_init = 1.0 / jnp.sqrt(jnp.float32(H))
    w_ih = jax.random.uniform(k1, (4 * H, D), jnp.float32, -k_init, k_init)
    w_hh = jax.random.uniform(k2, (4 * H, H), jnp.float32, -k_init, k_init)
    b_ih = jax.random.uniform(k3, (4 * H,), jnp.float32, -k_init, k_init)
    b_hh = jax.random.uniform(k4, (4 * H,), jnp.float32, -k_init, k_init)

    # Single-chunk path (VMEM-budgeted TS == T) and multi-chunk path
    # (TS=4: exercises cross-chunk state carry in the resident h_n/c_n blocks).
    _check(x, lengths, w_ih, w_hh, b_ih, b_hh)
    _check(x, lengths, w_ih, w_hh, b_ih, b_hh, time_chunk=4)

    # Larger batch: exercises the leading "parallel" batch-block grid axis
    # (2 batch blocks -> sharded across the 2 TensorCores on v7x).
    B2 = 20
    x2 = jax.random.normal(kx2, (B2, T, D), dtype=jnp.float32)
    lengths2 = jnp.concatenate([
        jnp.array([8], dtype=jnp.int32),
        jax.random.randint(kl2, (B2 - 1,), 1, 9).astype(jnp.int32)])
    _check(x2, lengths2, w_ih, w_hh, b_ih, b_hh)

    print("KERNEL_OK")
</pallas_src>

<mosaic_0001>
module attributes {stable_mosaic.version = 11 : i64} {
  func.func @_lstm_kernel(%arg0: i32, %arg1: i32, %arg2: memref<8x16x16xbf16, #tpu.memory_space<vmem>>, %arg3: memref<8x16x1xf32, #tpu.memory_space<vmem>>, %arg4: memref<16x128xbf16, #tpu.memory_space<vmem>>, %arg5: memref<32x128xbf16, #tpu.memory_space<vmem>>, %arg6: memref<1x128xf32, #tpu.memory_space<vmem>>, %arg7: memref<8x16x128xbf16, #tpu.memory_space<vmem>>, %arg8: memref<16x32xf32, #tpu.memory_space<vmem>>, %arg9: memref<16x32xf32, #tpu.memory_space<vmem>>, %arg10: memref<8x16x128xbf16, #tpu.memory_space<vmem>>) attributes {dimension_semantics = [#tpu.dimension_semantics<parallel>, #tpu.dimension_semantics<arbitrary>], iteration_bounds = array<i64: 1, 1>, scalar_prefetch = 0 : i64, scratch_operands = 1 : i64, tpu.core_type = #tpu.core_type<tc>, window_params = [{transform_indices = @transform_0, window_bounds = array<i64: 8, 16, 16>}, {transform_indices = @transform_1, window_bounds = array<i64: 8, 16, 1>}, {pipeline_mode = #tpu.pipeline_mode<synchronous>, transform_indices = @transform_2, window_bounds = array<i64: 16, 128>}, {pipeline_mode = #tpu.pipeline_mode<synchronous>, transform_indices = @transform_3, window_bounds = array<i64: 32, 128>}, {pipeline_mode = #tpu.pipeline_mode<synchronous>, transform_indices = @transform_4, window_bounds = array<i64: 1, 128>}, {transform_indices = @transform_5, window_bounds = array<i64: 8, 16, 128>}, {transform_indices = @transform_6, window_bounds = array<i64: 16, 32>}, {transform_indices = @transform_7, window_bounds = array<i64: 16, 32>}]} {
    %c0_i32 = arith.constant 0 : i32
    %0 = arith.cmpi eq, %arg1, %c0_i32 : i32
    %1 = arith.extui %0 : i1 to i32
    %c0_i32_0 = arith.constant 0 : i32
    %2 = arith.cmpi ne, %1, %c0_i32_0 : i32
    scf.if %2 {
      %cst_125 = arith.constant 0.000000e+00 : f32
      %362 = vector.broadcast %cst_125 : f32 to vector<16x32xf32>
      %c0_126 = arith.constant 0 : index
      %c0_127 = arith.constant 0 : index
      %363 = vector.load %arg8[%c0_126, %c0_127] : memref<16x32xf32, #tpu.memory_space<vmem>>, vector<16x32xf32>
      tpu.vector_store %arg8[%c0_126, %c0_127], %362 {strides = array<i32>} : memref<16x32xf32, #tpu.memory_space<vmem>>, vector<16x32xf32>,
      %cst_128 = arith.constant 0.000000e+00 : f32
      %364 = vector.broadcast %cst_128 : f32 to vector<16x32xf32>
      %c0_129 = arith.constant 0 : index
      %c0_130 = arith.constant 0 : index
      %365 = vector.load %arg9[%c0_129, %c0_130] : memref<16x32xf32, #tpu.memory_space<vmem>>, vector<16x32xf32>
      tpu.vector_store %arg9[%c0_129, %c0_130], %364 {strides = array<i32>} : memref<16x32xf32, #tpu.memory_space<vmem>>, vector<16x32xf32>,
    } else {
    }
    %c0 = arith.constant 0 : index
    %c0_1 = arith.constant 0 : index
    %c0_2 = arith.constant 0 : index
    %3 = vector.load %arg2[%c0, %c0_1, %c0_2] : memref<8x16x16xbf16, #tpu.memory_space<vmem>>, vector<8x16x16xbf16>
    %4 = vector.shape_cast %3 : vector<8x16x16xbf16> to vector<128x16xbf16>
    %c0_3 = arith.constant 0 : index
    %c0_4 = arith.constant 0 : index
    %5 = vector.load %arg4[%c0_3, %c0_4] : memref<16x128xbf16, #tpu.memory_space<vmem>>, vector<16x128xbf16>
    %cst = arith.constant dense<0.000000e+00> : vector<128x128xf32>
    %6 = tpu.matmul %4, %5, %cst {dimension_numbers = #tpu.dot_dimension_numbers<[1], [0], [0], [1], [0, 0, 1, 1], [], []>} : vector<128x16xbf16>, vector<16x128xbf16>, vector<128x128xf32> -> vector<128x128xf32>
    %c0_5 = arith.constant 0 : index
    %c0_6 = arith.constant 0 : index
    %7 = vector.load %arg6[%c0_5, %c0_6] : memref<1x128xf32, #tpu.memory_space<vmem>>, vector<1x128xf32>
    %8 = vector.broadcast %7 : vector<1x128xf32> to vector<128x128xf32>
    %9 = arith.addf %6, %8 : vector<128x128xf32>
    %10 = arith.truncf %9 : vector<128x128xf32> to vector<128x128xbf16>
    %11 = vector.shape_cast %10 : vector<128x128xbf16> to vector<8x16x128xbf16>
    %c0_7 = arith.constant 0 : index
    %c0_8 = arith.constant 0 : index
    %c0_9 = arith.constant 0 : index
    %12 = vector.load %arg10[%c0_7, %c0_8, %c0_9] : memref<8x16x128xbf16, #tpu.memory_space<vmem>>, vector<8x16x128xbf16>
    tpu.vector_store %arg10[%c0_7, %c0_8, %c0_9], %11 {strides = array<i32>} : memref<8x16x128xbf16, #tpu.memory_space<vmem>>, vector<8x16x128xbf16>,
    %c0_10 = arith.constant 0 : index
    %c0_11 = arith.constant 0 : index
    %13 = vector.load %arg5[%c0_10, %c0_11] : memref<32x128xbf16, #tpu.memory_space<vmem>>, vector<32x128xbf16>
    %c0_12 = arith.constant 0 : index
    %c0_13 = arith.constant 0 : index
    %14 = vector.load %arg8[%c0_12, %c0_13] : memref<16x32xf32, #tpu.memory_space<vmem>>, vector<16x32xf32>
    %c0_14 = arith.constant 0 : index
    %c0_15 = arith.constant 0 : index
    %15 = vector.load %arg9[%c0_14, %c0_15] : memref<16x32xf32, #tpu.memory_space<vmem>>, vector<16x32xf32>
    %c0_i32_16 = arith.constant 0 : i32
    %16 = arith.index_cast %c0_i32_16 : i32 to index
    %c0_17 = arith.constant 0 : index
    %c0_18 = arith.constant 0 : index
    %17 = vector.load %arg10[%16, %c0_17, %c0_18] : memref<8x16x128xbf16, #tpu.memory_space<vmem>>, vector<1x16x128xbf16>
    %18 = vector.shape_cast %17 : vector<1x16x128xbf16> to vector<16x128xbf16>
    %19 = arith.extf %18 : vector<16x128xbf16> to vector<16x128xf32>
    %20 = arith.truncf %14 : vector<16x32xf32> to vector<16x32xbf16>
    %cst_19 = arith.constant dense<0.000000e+00> : vector<16x128xf32>
    %21 = tpu.matmul %20, %13, %cst_19 {dimension_numbers = #tpu.dot_dimension_numbers<[1], [0], [0], [1], [0, 0, 1, 1], [], []>} : vector<16x32xbf16>, vector<32x128xbf16>, vector<16x128xf32> -> vector<16x128xf32>
    %22 = arith.addf %19, %21 : vector<16x128xf32>
    %23 = vector.extract_strided_slice %22 {offsets = [0, 0], sizes = [16, 96], strides = [1, 1]} : vector<16x128xf32> to vector<16x96xf32>
    %cst_20 = arith.constant 5.000000e-01 : f32
    %24 = vector.broadcast %cst_20 : f32 to vector<16x96xf32>
    %25 = arith.mulf %23, %24 : vector<16x96xf32>
    %26 = math.tanh %25 : vector<16x96xf32>
    %cst_21 = arith.constant 5.000000e-01 : f32
    %27 = vector.broadcast %cst_21 : f32 to vector<16x96xf32>
    %28 = arith.mulf %26, %27 : vector<16x96xf32>
    %cst_22 = arith.constant 5.000000e-01 : f32
    %29 = vector.broadcast %cst_22 : f32 to vector<16x96xf32>
    %30 = arith.addf %28, %29 : vector<16x96xf32>
    %31 = vector.extract_strided_slice %30 {offsets = [0, 0], sizes = [16, 32], strides = [1, 1]} : vector<16x96xf32> to vector<16x32xf32>
    %32 = vector.extract_strided_slice %30 {offsets = [0, 32], sizes = [16, 32], strides = [1, 1]} : vector<16x96xf32> to vector<16x32xf32>
    %33 = vector.extract_strided_slice %30 {offsets = [0, 64], sizes = [16, 32], strides = [1, 1]} : vector<16x96xf32> to vector<16x32xf32>
    %34 = vector.extract_strided_slice %22 {offsets = [0, 96], sizes = [16, 32], strides = [1, 1]} : vector<16x128xf32> to vector<16x32xf32>
    %35 = math.tanh %34 : vector<16x32xf32>
    %36 = arith.mulf %32, %15 : vector<16x32xf32>
    %37 = arith.mulf %31, %35 : vector<16x32xf32>
    %38 = arith.addf %36, %37 : vector<16x32xf32>
    %39 = math.tanh %38 : vector<16x32xf32>
    %40 = arith.mulf %33, %39 : vector<16x32xf32>
    %41 = arith.index_cast %c0_i32_16 : i32 to index
    %c0_23 = arith.constant 0 : index
    %c0_24 = arith.constant 0 : index
    %42 = vector.load %arg3[%41, %c0_23, %c0_24] : memref<8x16x1xf32, #tpu.memory_space<vmem>>, vector<1x16x1xf32>
    %43 = vector.shape_cast %42 : vector<1x16x1xf32> to vector<16x1xf32>
    %cst_25 = arith.constant 0.000000e+00 : f32
    %44 = vector.broadcast %cst_25 : f32 to vector<16x1xf32>
    %45 = arith.cmpf ogt, %43, %44 : vector<16x1xf32>
    %46 = vector.shape_cast %45 : vector<16x1xi1> to vector<16x1xi1>
    %47 = vector.broadcast %46 : vector<16x1xi1> to vector<16x32xi1>
    %48 = arith.select %47, %40, %14 : vector<16x32xi1>, vector<16x32xf32>
    %49 = arith.select %47, %38, %15 : vector<16x32xi1>, vector<16x32xf32>
    %cst_26 = arith.constant 0.000000e+00 : f32
    %50 = vector.broadcast %cst_26 : f32 to vector<16x32xf32>
    %51 = arith.select %47, %40, %50 : vector<16x32xi1>, vector<16x32xf32>
    %52 = arith.truncf %51 : vector<16x32xf32> to vector<16x32xbf16>
    %cst_27 = arith.constant 0.000000e+00 : bf16
    %53 = vector.broadcast %cst_27 : bf16 to vector<16x96xbf16>
    %54 = tpu.concatenate %52, %53 in 1 : vector<16x32xbf16>, vector<16x96xbf16> -> vector<16x128xbf16>
    %55 = arith.index_cast %c0_i32_16 : i32 to index
    %c0_28 = arith.constant 0 : index
    %c0_29 = arith.constant 0 : index
    %56 = vector.load %arg7[%55, %c0_28, %c0_29] : memref<8x16x128xbf16, #tpu.memory_space<vmem>>, vector<1x16x128xbf16>
    %57 = vector.shape_cast %56 : vector<1x16x128xbf16> to vector<16x128xbf16>
    %58 = vector.shape_cast %54 : vector<16x128xbf16> to vector<1x16x128xbf16>
    tpu.vector_store %arg7[%55, %c0_28, %c0_29], %58 {strides = array<i32>} : memref<8x16x128xbf16, #tpu.memory_space<vmem>>, vector<1x16x128xbf16>,
    %c1_i32 = arith.constant 1 : i32
    %59 = arith.index_cast %c1_i32 : i32 to index
    %c0_30 = arith.constant 0 : index
    %c0_31 = arith.constant 0 : index
    %60 = vector.load %arg10[%59, %c0_30, %c0_31] : memref<8x16x128xbf16, #tpu.memory_space<vmem>>, vector<1x16x128xbf16>
    %61 = vector.shape_cast %60 : vector<1x16x128xbf16> to vector<16x128xbf16>
    %62 = arith.extf %61 : vector<16x128xbf16> to vector<16x128xf32>
    %63 = arith.truncf %48 : vector<16x32xf32> to vector<16x32xbf16>
    %cst_32 = arith.constant dense<0.000000e+00> : vector<16x128xf32>
    %64 = tpu.matmul %63, %13, %cst_32 {dimension_numbers = #tpu.dot_dimension_numbers<[1], [0], [0], [1], [0, 0, 1, 1], [], []>} : vector<16x32xbf16>, vector<32x128xbf16>, vector<16x128xf32> -> vector<16x128xf32>
    %65 = arith.addf %62, %64 : vector<16x128xf32>
    %66 = vector.extract_strided_slice %65 {offsets = [0, 0], sizes = [16, 96], strides = [1, 1]} : vector<16x128xf32> to vector<16x96xf32>
    %cst_33 = arith.constant 5.000000e-01 : f32
    %67 = vector.broadcast %cst_33 : f32 to vector<16x96xf32>
    %68 = arith.mulf %66, %67 : vector<16x96xf32>
    %69 = math.tanh %68 : vector<16x96xf32>
    %cst_34 = arith.constant 5.000000e-01 : f32
    %70 = vector.broadcast %cst_34 : f32 to vector<16x96xf32>
    %71 = arith.mulf %69, %70 : vector<16x96xf32>
    %cst_35 = arith.constant 5.000000e-01 : f32
    %72 = vector.broadcast %cst_35 : f32 to vector<16x96xf32>
    %73 = arith.addf %71, %72 : vector<16x96xf32>
    %74 = vector.extract_strided_slice %73 {offsets = [0, 0], sizes = [16, 32], strides = [1, 1]} : vector<16x96xf32> to vector<16x32xf32>
    %75 = vector.extract_strided_slice %73 {offsets = [0, 32], sizes = [16, 32], strides = [1, 1]} : vector<16x96xf32> to vector<16x32xf32>
    %76 = vector.extract_strided_slice %73 {offsets = [0, 64], sizes = [16, 32], strides = [1, 1]} : vector<16x96xf32> to vector<16x32xf32>
    %77 = vector.extract_strided_slice %65 {offsets = [0, 96], sizes = [16, 32], strides = [1, 1]} : vector<16x128xf32> to vector<16x32xf32>
    %78 = math.tanh %77 : vector<16x32xf32>
    %79 = arith.mulf %75, %49 : vector<16x32xf32>
    %80 = arith.mulf %74, %78 : vector<16x32xf32>
    %81 = arith.addf %79, %80 : vector<16x32xf32>
    %82 = math.tanh %81 : vector<16x32xf32>
    %83 = arith.mulf %76, %82 : vector<16x32xf32>
    %84 = arith.index_cast %c1_i32 : i32 to index
    %c0_36 = arith.constant 0 : index
    %c0_37 = arith.constant 0 : index
    %85 = vector.load %arg3[%84, %c0_36, %c0_37] : memref<8x16x1xf32, #tpu.memory_space<vmem>>, vector<1x16x1xf32>
    %86 = vector.shape_cast %85 : vector<1x16x1xf32> to vector<16x1xf32>
    %cst_38 = arith.constant 0.000000e+00 : f32
    %87 = vector.broadcast %cst_38 : f32 to vector<16x1xf32>
    %88 = arith.cmpf ogt, %86, %87 : vector<16x1xf32>
    %89 = vector.shape_cast %88 : vector<16x1xi1> to vector<16x1xi1>
    %90 = vector.broadcast %89 : vector<16x1xi1> to vector<16x32xi1>
    %91 = arith.select %90, %83, %48 : vector<16x32xi1>, vector<16x32xf32>
    %92 = arith.select %90, %81, %49 : vector<16x32xi1>, vector<16x32xf32>
    %cst_39 = arith.constant 0.000000e+00 : f32
    %93 = vector.broadcast %cst_39 : f32 to vector<16x32xf32>
    %94 = arith.select %90, %83, %93 : vector<16x32xi1>, vector<16x32xf32>
    %95 = arith.truncf %94 : vector<16x32xf32> to vector<16x32xbf16>
    %cst_40 = arith.constant 0.000000e+00 : bf16
    %96 = vector.broadcast %cst_40 : bf16 to vector<16x96xbf16>
    %97 = tpu.concatenate %95, %96 in 1 : vector<16x32xbf16>, vector<16x96xbf16> -> vector<16x128xbf16>
    %98 = arith.index_cast %c1_i32 : i32 to index
    %c0_41 = arith.constant 0 : index
    %c0_42 = arith.constant 0 : index
    %99 = vector.load %arg7[%98, %c0_41, %c0_42] : memref<8x16x128xbf16, #tpu.memory_space<vmem>>, vector<1x16x128xbf16>
    %100 = vector.shape_cast %99 : vector<1x16x128xbf16> to vector<16x128xbf16>
    %101 = vector.shape_cast %97 : vector<16x128xbf16> to vector<1x16x128xbf16>
    tpu.vector_store %arg7[%98, %c0_41, %c0_42], %101 {strides = array<i32>} : memref<8x16x128xbf16, #tpu.memory_space<vmem>>, vector<1x16x128xbf16>,
    %c2_i32 = arith.constant 2 : i32
    %102 = arith.index_cast %c2_i32 : i32 to index
    %c0_43 = arith.constant 0 : index
    %c0_44 = arith.constant 0 : index
    %103 = vector.load %arg10[%102, %c0_43, %c0_44] : memref<8x16x128xbf16, #tpu.memory_space<vmem>>, vector<1x16x128xbf16>
    %104 = vector.shape_cast %103 : vector<1x16x128xbf16> to vector<16x128xbf16>
    %105 = arith.extf %104 : vector<16x128xbf16> to vector<16x128xf32>
    %106 = arith.truncf %91 : vector<16x32xf32> to vector<16x32xbf16>
    %cst_45 = arith.constant dense<0.000000e+00> : vector<16x128xf32>
    %107 = tpu.matmul %106, %13, %cst_45 {dimension_numbers = #tpu.dot_dimension_numbers<[1], [0], [0], [1], [0, 0, 1, 1], [], []>} : vector<16x32xbf16>, vector<32x128xbf16>, vector<16x128xf32> -> vector<16x128xf32>
    %108 = arith.addf %105, %107 : vector<16x128xf32>
    %109 = vector.extract_strided_slice %108 {offsets = [0, 0], sizes = [16, 96], strides = [1, 1]} : vector<16x128xf32> to vector<16x96xf32>
    %cst_46 = arith.constant 5.000000e-01 : f32
    %110 = vector.broadcast %cst_46 : f32 to vector<16x96xf32>
    %111 = arith.mulf %109, %110 : vector<16x96xf32>
    %112 = math.tanh %111 : vector<16x96xf32>
    %cst_47 = arith.constant 5.000000e-01 : f32
    %113 = vector.broadcast %cst_47 : f32 to vector<16x96xf32>
    %114 = arith.mulf %112, %113 : vector<16x96xf32>
    %cst_48 = arith.constant 5.000000e-01 : f32
    %115 = vector.broadcast %cst_48 : f32 to vector<16x96xf32>
    %116 = arith.addf %114, %115 : vector<16x96xf32>
    %117 = vector.extract_strided_slice %116 {offsets = [0, 0], sizes = [16, 32], strides = [1, 1]} : vector<16x96xf32> to vector<16x32xf32>
    %118 = vector.extract_strided_slice %116 {offsets = [0, 32], sizes = [16, 32], strides = [1, 1]} : vector<16x96xf32> to vector<16x32xf32>
    %119 = vector.extract_strided_slice %116 {offsets = [0, 64], sizes = [16, 32], strides = [1, 1]} : vector<16x96xf32> to vector<16x32xf32>
    %120 = vector.extract_strided_slice %108 {offsets = [0, 96], sizes = [16, 32], strides = [1, 1]} : vector<16x128xf32> to vector<16x32xf32>
    %121 = math.tanh %120 : vector<16x32xf32>
    %122 = arith.mulf %118, %92 : vector<16x32xf32>
    %123 = arith.mulf %117, %121 : vector<16x32xf32>
    %124 = arith.addf %122, %123 : vector<16x32xf32>
    %125 = math.tanh %124 : vector<16x32xf32>
    %126 = arith.mulf %119, %125 : vector<16x32xf32>
    %127 = arith.index_cast %c2_i32 : i32 to index
    %c0_49 = arith.constant 0 : index
    %c0_50 = arith.constant 0 : index
    %128 = vector.load %arg3[%127, %c0_49, %c0_50] : memref<8x16x1xf32, #tpu.memory_space<vmem>>, vector<1x16x1xf32>
    %129 = vector.shape_cast %128 : vector<1x16x1xf32> to vector<16x1xf32>
    %cst_51 = arith.constant 0.000000e+00 : f32
    %130 = vector.broadcast %cst_51 : f32 to vector<16x1xf32>
    %131 = arith.cmpf ogt, %129, %130 : vector<16x1xf32>
    %132 = vector.shape_cast %131 : vector<16x1xi1> to vector<16x1xi1>
    %133 = vector.broadcast %132 : vector<16x1xi1> to vector<16x32xi1>
    %134 = arith.select %133, %126, %91 : vector<16x32xi1>, vector<16x32xf32>
    %135 = arith.select %133, %124, %92 : vector<16x32xi1>, vector<16x32xf32>
    %cst_52 = arith.constant 0.000000e+00 : f32
    %136 = vector.broadcast %cst_52 : f32 to vector<16x32xf32>
    %137 = arith.select %133, %126, %136 : vector<16x32xi1>, vector<16x32xf32>
    %138 = arith.truncf %137 : vector<16x32xf32> to vector<16x32xbf16>
    %cst_53 = arith.constant 0.000000e+00 : bf16
    %139 = vector.broadcast %cst_53 : bf16 to vector<16x96xbf16>
    %140 = tpu.concatenate %138, %139 in 1 : vector<16x32xbf16>, vector<16x96xbf16> -> vector<16x128xbf16>
    %141 = arith.index_cast %c2_i32 : i32 to index
    %c0_54 = arith.constant 0 : index
    %c0_55 = arith.constant 0 : index
    %142 = vector.load %arg7[%141, %c0_54, %c0_55] : memref<8x16x128xbf16, #tpu.memory_space<vmem>>, vector<1x16x128xbf16>
    %143 = vector.shape_cast %142 : vector<1x16x128xbf16> to vector<16x128xbf16>
    %144 = vector.shape_cast %140 : vector<16x128xbf16> to vector<1x16x128xbf16>
    tpu.vector_store %arg7[%141, %c0_54, %c0_55], %144 {strides = array<i32>} : memref<8x16x128xbf16, #tpu.memory_space<vmem>>, vector<1x16x128xbf16>,
    %c3_i32 = arith.constant 3 : i32
    %145 = arith.index_cast %c3_i32 : i32 to index
    %c0_56 = arith.constant 0 : index
    %c0_57 = arith.constant 0 : index
    %146 = vector.load %arg10[%145, %c0_56, %c0_57] : memref<8x16x128xbf16, #tpu.memory_space<vmem>>, vector<1x16x128xbf16>
    %147 = vector.shape_cast %146 : vector<1x16x128xbf16> to vector<16x128xbf16>
    %148 = arith.extf %147 : vector<16x128xbf16> to vector<16x128xf32>
    %149 = arith.truncf %134 : vector<16x32xf32> to vector<16x32xbf16>
    %cst_58 = arith.constant dense<0.000000e+00> : vector<16x128xf32>
    %150 = tpu.matmul %149, %13, %cst_58 {dimension_numbers = #tpu.dot_dimension_numbers<[1], [0], [0], [1], [0, 0, 1, 1], [], []>} : vector<16x32xbf16>, vector<32x128xbf16>, vector<16x128xf32> -> vector<16x128xf32>
    %151 = arith.addf %148, %150 : vector<16x128xf32>
    %152 = vector.extract_strided_slice %151 {offsets = [0, 0], sizes = [16, 96], strides = [1, 1]} : vector<16x128xf32> to vector<16x96xf32>
    %cst_59 = arith.constant 5.000000e-01 : f32
    %153 = vector.broadcast %cst_59 : f32 to vector<16x96xf32>
    %154 = arith.mulf %152, %153 : vector<16x96xf32>
    %155 = math.tanh %154 : vector<16x96xf32>
    %cst_60 = arith.constant 5.000000e-01 : f32
    %156 = vector.broadcast %cst_60 : f32 to vector<16x96xf32>
    %157 = arith.mulf %155, %156 : vector<16x96xf32>
    %cst_61 = arith.constant 5.000000e-01 : f32
    %158 = vector.broadcast %cst_61 : f32 to vector<16x96xf32>
    %159 = arith.addf %157, %158 : vector<16x96xf32>
    %160 = vector.extract_strided_slice %159 {offsets = [0, 0], sizes = [16, 32], strides = [1, 1]} : vector<16x96xf32> to vector<16x32xf32>
    %161 = vector.extract_strided_slice %159 {offsets = [0, 32], sizes = [16, 32], strides = [1, 1]} : vector<16x96xf32> to vector<16x32xf32>
    %162 = vector.extract_strided_slice %159 {offsets = [0, 64], sizes = [16, 32], strides = [1, 1]} : vector<16x96xf32> to vector<16x32xf32>
    %163 = vector.extract_strided_slice %151 {offsets = [0, 96], sizes = [16, 32], strides = [1, 1]} : vector<16x128xf32> to vector<16x32xf32>
    %164 = math.tanh %163 : vector<16x32xf32>
    %165 = arith.mulf %161, %135 : vector<16x32xf32>
    %166 = arith.mulf %160, %164 : vector<16x32xf32>
    %167 = arith.addf %165, %166 : vector<16x32xf32>
    %168 = math.tanh %167 : vector<16x32xf32>
    %169 = arith.mulf %162, %168 : vector<16x32xf32>
    %170 = arith.index_cast %c3_i32 : i32 to index
    %c0_62 = arith.constant 0 : index
    %c0_63 = arith.constant 0 : index
    %171 = vector.load %arg3[%170, %c0_62, %c0_63] : memref<8x16x1xf32, #tpu.memory_space<vmem>>, vector<1x16x1xf32>
    %172 = vector.shape_cast %171 : vector<1x16x1xf32> to vector<16x1xf32>
    %cst_64 = arith.constant 0.000000e+00 : f32
    %173 = vector.broadcast %cst_64 : f32 to vector<16x1xf32>
    %174 = arith.cmpf ogt, %172, %173 : vector<16x1xf32>
    %175 = vector.shape_cast %174 : vector<16x1xi1> to vector<16x1xi1>
    %176 = vector.broadcast %175 : vector<16x1xi1> to vector<16x32xi1>
    %177 = arith.select %176, %169, %134 : vector<16x32xi1>, vector<16x32xf32>
    %178 = arith.select %176, %167, %135 : vector<16x32xi1>, vector<16x32xf32>
    %cst_65 = arith.constant 0.000000e+00 : f32
    %179 = vector.broadcast %cst_65 : f32 to vector<16x32xf32>
    %180 = arith.select %176, %169, %179 : vector<16x32xi1>, vector<16x32xf32>
    %181 = arith.truncf %180 : vector<16x32xf32> to vector<16x32xbf16>
    %cst_66 = arith.constant 0.000000e+00 : bf16
    %182 = vector.broadcast %cst_66 : bf16 to vector<16x96xbf16>
    %183 = tpu.concatenate %181, %182 in 1 : vector<16x32xbf16>, vector<16x96xbf16> -> vector<16x128xbf16>
    %184 = arith.index_cast %c3_i32 : i32 to index
    %c0_67 = arith.constant 0 : index
    %c0_68 = arith.constant 0 : index
    %185 = vector.load %arg7[%184, %c0_67, %c0_68] : memref<8x16x128xbf16, #tpu.memory_space<vmem>>, vector<1x16x128xbf16>
    %186 = vector.shape_cast %185 : vector<1x16x128xbf16> to vector<16x128xbf16>
    %187 = vector.shape_cast %183 : vector<16x128xbf16> to vector<1x16x128xbf16>
    tpu.vector_store %arg7[%184, %c0_67, %c0_68], %187 {strides = array<i32>} : memref<8x16x128xbf16, #tpu.memory_space<vmem>>, vector<1x16x128xbf16>,
    %c4_i32 = arith.constant 4 : i32
    %188 = arith.index_cast %c4_i32 : i32 to index
    %c0_69 = arith.constant 0 : index
    %c0_70 = arith.constant 0 : index
    %189 = vector.load %arg10[%188, %c0_69, %c0_70] : memref<8x16x128xbf16, #tpu.memory_space<vmem>>, vector<1x16x128xbf16>
    %190 = vector.shape_cast %189 : vector<1x16x128xbf16> to vector<16x128xbf16>
    %191 = arith.extf %190 : vector<16x128xbf16> to vector<16x128xf32>
    %192 = arith.truncf %177 : vector<16x32xf32> to vector<16x32xbf16>
    %cst_71 = arith.constant dense<0.000000e+00> : vector<16x128xf32>
    %193 = tpu.matmul %192, %13, %cst_71 {dimension_numbers = #tpu.dot_dimension_numbers<[1], [0], [0], [1], [0, 0, 1, 1], [], []>} : vector<16x32xbf16>, vector<32x128xbf16>, vector<16x128xf32> -> vector<16x128xf32>
    %194 = arith.addf %191, %193 : vector<16x128xf32>
    %195 = vector.extract_strided_slice %194 {offsets = [0, 0], sizes = [16, 96], strides = [1, 1]} : vector<16x128xf32> to vector<16x96xf32>
    %cst_72 = arith.constant 5.000000e-01 : f32
    %196 = vector.broadcast %cst_72 : f32 to vector<16x96xf32>
    %197 = arith.mulf %195, %196 : vector<16x96xf32>
    %198 = math.tanh %197 : vector<16x96xf32>
    %cst_73 = arith.constant 5.000000e-01 : f32
    %199 = vector.broadcast %cst_73 : f32 to vector<16x96xf32>
    %200 = arith.mulf %198, %199 : vector<16x96xf32>
    %cst_74 = arith.constant 5.000000e-01 : f32
    %201 = vector.broadcast %cst_74 : f32 to vector<16x96xf32>
    %202 = arith.addf %200, %201 : vector<16x96xf32>
    %203 = vector.extract_strided_slice %202 {offsets = [0, 0], sizes = [16, 32], strides = [1, 1]} : vector<16x96xf32> to vector<16x32xf32>
    %204 = vector.extract_strided_slice %202 {offsets = [0, 32], sizes = [16, 32], strides = [1, 1]} : vector<16x96xf32> to vector<16x32xf32>
    %205 = vector.extract_strided_slice %202 {offsets = [0, 64], sizes = [16, 32], strides = [1, 1]} : vector<16x96xf32> to vector<16x32xf32>
    %206 = vector.extract_strided_slice %194 {offsets = [0, 96], sizes = [16, 32], strides = [1, 1]} : vector<16x128xf32> to vector<16x32xf32>
    %207 = math.tanh %206 : vector<16x32xf32>
    %208 = arith.mulf %204, %178 : vector<16x32xf32>
    %209 = arith.mulf %203, %207 : vector<16x32xf32>
    %210 = arith.addf %208, %209 : vector<16x32xf32>
    %211 = math.tanh %210 : vector<16x32xf32>
    %212 = arith.mulf %205, %211 : vector<16x32xf32>
    %213 = arith.index_cast %c4_i32 : i32 to index
    %c0_75 = arith.constant 0 : index
    %c0_76 = arith.constant 0 : index
    %214 = vector.load %arg3[%213, %c0_75, %c0_76] : memref<8x16x1xf32, #tpu.memory_space<vmem>>, vector<1x16x1xf32>
    %215 = vector.shape_cast %214 : vector<1x16x1xf32> to vector<16x1xf32>
    %cst_77 = arith.constant 0.000000e+00 : f32
    %216 = vector.broadcast %cst_77 : f32 to vector<16x1xf32>
    %217 = arith.cmpf ogt, %215, %216 : vector<16x1xf32>
    %218 = vector.shape_cast %217 : vector<16x1xi1> to vector<16x1xi1>
    %219 = vector.broadcast %218 : vector<16x1xi1> to vector<16x32xi1>
    %220 = arith.select %219, %212, %177 : vector<16x32xi1>, vector<16x32xf32>
    %221 = arith.select %219, %210, %178 : vector<16x32xi1>, vector<16x32xf32>
    %cst_78 = arith.constant 0.000000e+00 : f32
    %222 = vector.broadcast %cst_78 : f32 to vector<16x32xf32>
    %223 = arith.select %219, %212, %222 : vector<16x32xi1>, vector<16x32xf32>
    %224 = arith.truncf %223 : vector<16x32xf32> to vector<16x32xbf16>
    %cst_79 = arith.constant 0.000000e+00 : bf16
    %225 = vector.broadcast %cst_79 : bf16 to vector<16x96xbf16>
    %226 = tpu.concatenate %224, %225 in 1 : vector<16x32xbf16>, vector<16x96xbf16> -> vector<16x128xbf16>
    %227 = arith.index_cast %c4_i32 : i32 to index
    %c0_80 = arith.constant 0 : index
    %c0_81 = arith.constant 0 : index
    %228 = vector.load %arg7[%227, %c0_80, %c0_81] : memref<8x16x128xbf16, #tpu.memory_space<vmem>>, vector<1x16x128xbf16>
    %229 = vector.shape_cast %228 : vector<1x16x128xbf16> to vector<16x128xbf16>
    %230 = vector.shape_cast %226 : vector<16x128xbf16> to vector<1x16x128xbf16>
    tpu.vector_store %arg7[%227, %c0_80, %c0_81], %230 {strides = array<i32>} : memref<8x16x128xbf16, #tpu.memory_space<vmem>>, vector<1x16x128xbf16>,
    %c5_i32 = arith.constant 5 : i32
    %231 = arith.index_cast %c5_i32 : i32 to index
    %c0_82 = arith.constant 0 : index
    %c0_83 = arith.constant 0 : index
    %232 = vector.load %arg10[%231, %c0_82, %c0_83] : memref<8x16x128xbf16, #tpu.memory_space<vmem>>, vector<1x16x128xbf16>
    %233 = vector.shape_cast %232 : vector<1x16x128xbf16> to vector<16x128xbf16>
    %234 = arith.extf %233 : vector<16x128xbf16> to vector<16x128xf32>
    %235 = arith.truncf %220 : vector<16x32xf32> to vector<16x32xbf16>
    %cst_84 = arith.constant dense<0.000000e+00> : vector<16x128xf32>
    %236 = tpu.matmul %235, %13, %cst_84 {dimension_numbers = #tpu.dot_dimension_numbers<[1], [0], [0], [1], [0, 0, 1, 1], [], []>} : vector<16x32xbf16>, vector<32x128xbf16>, vector<16x128xf32> -> vector<16x128xf32>
    %237 = arith.addf %234, %236 : vector<16x128xf32>
    %238 = vector.extract_strided_slice %237 {offsets = [0, 0], sizes = [16, 96], strides = [1, 1]} : vector<16x128xf32> to vector<16x96xf32>
    %cst_85 = arith.constant 5.000000e-01 : f32
    %239 = vector.broadcast %cst_85 : f32 to vector<16x96xf32>
    %240 = arith.mulf %238, %239 : vector<16x96xf32>
    %241 = math.tanh %240 : vector<16x96xf32>
    %cst_86 = arith.constant 5.000000e-01 : f32
    %242 = vector.broadcast %cst_86 : f32 to vector<16x96xf32>
    %243 = arith.mulf %241, %242 : vector<16x96xf32>
    %cst_87 = arith.constant 5.000000e-01 : f32
    %244 = vector.broadcast %cst_87 : f32 to vector<16x96xf32>
    %245 = arith.addf %243, %244 : vector<16x96xf32>
    %246 = vector.extract_strided_slice %245 {offsets = [0, 0], sizes = [16, 32], strides = [1, 1]} : vector<16x96xf32> to vector<16x32xf32>
    %247 = vector.extract_strided_slice %245 {offsets = [0, 32], sizes = [16, 32], strides = [1, 1]} : vector<16x96xf32> to vector<16x32xf32>
    %248 = vector.extract_strided_slice %245 {offsets = [0, 64], sizes = [16, 32], strides = [1, 1]} : vector<16x96xf32> to vector<16x32xf32>
    %249 = vector.extract_strided_slice %237 {offsets = [0, 96], sizes = [16, 32], strides = [1, 1]} : vector<16x128xf32> to vector<16x32xf32>
    %250 = math.tanh %249 : vector<16x32xf32>
    %251 = arith.mulf %247, %221 : vector<16x32xf32>
    %252 = arith.mulf %246, %250 : vector<16x32xf32>
    %253 = arith.addf %251, %252 : vector<16x32xf32>
    %254 = math.tanh %253 : vector<16x32xf32>
    %255 = arith.mulf %248, %254 : vector<16x32xf32>
    %256 = arith.index_cast %c5_i32 : i32 to index
    %c0_88 = arith.constant 0 : index
    %c0_89 = arith.constant 0 : index
    %257 = vector.load %arg3[%256, %c0_88, %c0_89] : memref<8x16x1xf32, #tpu.memory_space<vmem>>, vector<1x16x1xf32>
    %258 = vector.shape_cast %257 : vector<1x16x1xf32> to vector<16x1xf32>
    %cst_90 = arith.constant 0.000000e+00 : f32
    %259 = vector.broadcast %cst_90 : f32 to vector<16x1xf32>
    %260 = arith.cmpf ogt, %258, %259 : vector<16x1xf32>
    %261 = vector.shape_cast %260 : vector<16x1xi1> to vector<16x1xi1>
    %262 = vector.broadcast %261 : vector<16x1xi1> to vector<16x32xi1>
    %263 = arith.select %262, %255, %220 : vector<16x32xi1>, vector<16x32xf32>
    %264 = arith.select %262, %253, %221 : vector<16x32xi1>, vector<16x32xf32>
    %cst_91 = arith.constant 0.000000e+00 : f32
    %265 = vector.broadcast %cst_91 : f32 to vector<16x32xf32>
    %266 = arith.select %262, %255, %265 : vector<16x32xi1>, vector<16x32xf32>
    %267 = arith.truncf %266 : vector<16x32xf32> to vector<16x32xbf16>
    %cst_92 = arith.constant 0.000000e+00 : bf16
    %268 = vector.broadcast %cst_92 : bf16 to vector<16x96xbf16>
    %269 = tpu.concatenate %267, %268 in 1 : vector<16x32xbf16>, vector<16x96xbf16> -> vector<16x128xbf16>
    %270 = arith.index_cast %c5_i32 : i32 to index
    %c0_93 = arith.constant 0 : index
    %c0_94 = arith.constant 0 : index
    %271 = vector.load %arg7[%270, %c0_93, %c0_94] : memref<8x16x128xbf16, #tpu.memory_space<vmem>>, vector<1x16x128xbf16>
    %272 = vector.shape_cast %271 : vector<1x16x128xbf16> to vector<16x128xbf16>
    %273 = vector.shape_cast %269 : vector<16x128xbf16> to vector<1x16x128xbf16>
    tpu.vector_store %arg7[%270, %c0_93, %c0_94], %273 {strides = array<i32>} : memref<8x16x128xbf16, #tpu.memory_space<vmem>>, vector<1x16x128xbf16>,
    %c6_i32 = arith.constant 6 : i32
    %274 = arith.index_cast %c6_i32 : i32 to index
    %c0_95 = arith.constant 0 : index
    %c0_96 = arith.constant 0 : index
    %275 = vector.load %arg10[%274, %c0_95, %c0_96] : memref<8x16x128xbf16, #tpu.memory_space<vmem>>, vector<1x16x128xbf16>
    %276 = vector.shape_cast %275 : vector<1x16x128xbf16> to vector<16x128xbf16>
    %277 = arith.extf %276 : vector<16x128xbf16> to vector<16x128xf32>
    %278 = arith.truncf %263 : vector<16x32xf32> to vector<16x32xbf16>
    %cst_97 = arith.constant dense<0.000000e+00> : vector<16x128xf32>
    %279 = tpu.matmul %278, %13, %cst_97 {dimension_numbers = #tpu.dot_dimension_numbers<[1], [0], [0], [1], [0, 0, 1, 1], [], []>} : vector<16x32xbf16>, vector<32x128xbf16>, vector<16x128xf32> -> vector<16x128xf32>
    %280 = arith.addf %277, %279 : vector<16x128xf32>
    %281 = vector.extract_strided_slice %280 {offsets = [0, 0], sizes = [16, 96], strides = [1, 1]} : vector<16x128xf32> to vector<16x96xf32>
    %cst_98 = arith.constant 5.000000e-01 : f32
    %282 = vector.broadcast %cst_98 : f32 to vector<16x96xf32>
    %283 = arith.mulf %281, %282 : vector<16x96xf32>
    %284 = math.tanh %283 : vector<16x96xf32>
    %cst_99 = arith.constant 5.000000e-01 : f32
    %285 = vector.broadcast %cst_99 : f32 to vector<16x96xf32>
    %286 = arith.mulf %284, %285 : vector<16x96xf32>
    %cst_100 = arith.constant 5.000000e-01 : f32
    %287 = vector.broadcast %cst_100 : f32 to vector<16x96xf32>
    %288 = arith.addf %286, %287 : vector<16x96xf32>
    %289 = vector.extract_strided_slice %288 {offsets = [0, 0], sizes = [16, 32], strides = [1, 1]} : vector<16x96xf32> to vector<16x32xf32>
    %290 = vector.extract_strided_slice %288 {offsets = [0, 32], sizes = [16, 32], strides = [1, 1]} : vector<16x96xf32> to vector<16x32xf32>
    %291 = vector.extract_strided_slice %288 {offsets = [0, 64], sizes = [16, 32], strides = [1, 1]} : vector<16x96xf32> to vector<16x32xf32>
    %292 = vector.extract_strided_slice %280 {offsets = [0, 96], sizes = [16, 32], strides = [1, 1]} : vector<16x128xf32> to vector<16x32xf32>
    %293 = math.tanh %292 : vector<16x32xf32>
    %294 = arith.mulf %290, %264 : vector<16x32xf32>
    %295 = arith.mulf %289, %293 : vector<16x32xf32>
    %296 = arith.addf %294, %295 : vector<16x32xf32>
    %297 = math.tanh %296 : vector<16x32xf32>
    %298 = arith.mulf %291, %297 : vector<16x32xf32>
    %299 = arith.index_cast %c6_i32 : i32 to index
    %c0_101 = arith.constant 0 : index
    %c0_102 = arith.constant 0 : index
    %300 = vector.load %arg3[%299, %c0_101, %c0_102] : memref<8x16x1xf32, #tpu.memory_space<vmem>>, vector<1x16x1xf32>
    %301 = vector.shape_cast %300 : vector<1x16x1xf32> to vector<16x1xf32>
    %cst_103 = arith.constant 0.000000e+00 : f32
    %302 = vector.broadcast %cst_103 : f32 to vector<16x1xf32>
    %303 = arith.cmpf ogt, %301, %302 : vector<16x1xf32>
    %304 = vector.shape_cast %303 : vector<16x1xi1> to vector<16x1xi1>
    %305 = vector.broadcast %304 : vector<16x1xi1> to vector<16x32xi1>
    %306 = arith.select %305, %298, %263 : vector<16x32xi1>, vector<16x32xf32>
    %307 = arith.select %305, %296, %264 : vector<16x32xi1>, vector<16x32xf32>
    %cst_104 = arith.constant 0.000000e+00 : f32
    %308 = vector.broadcast %cst_104 : f32 to vector<16x32xf32>
    %309 = arith.select %305, %298, %308 : vector<16x32xi1>, vector<16x32xf32>
    %310 = arith.truncf %309 : vector<16x32xf32> to vector<16x32xbf16>
    %cst_105 = arith.constant 0.000000e+00 : bf16
    %311 = vector.broadcast %cst_105 : bf16 to vector<16x96xbf16>
    %312 = tpu.concatenate %310, %311 in 1 : vector<16x32xbf16>, vector<16x96xbf16> -> vector<16x128xbf16>
    %313 = arith.index_cast %c6_i32 : i32 to index
    %c0_106 = arith.constant 0 : index
    %c0_107 = arith.constant 0 : index
    %314 = vector.load %arg7[%313, %c0_106, %c0_107] : memref<8x16x128xbf16, #tpu.memory_space<vmem>>, vector<1x16x128xbf16>
    %315 = vector.shape_cast %314 : vector<1x16x128xbf16> to vector<16x128xbf16>
    %316 = vector.shape_cast %312 : vector<16x128xbf16> to vector<1x16x128xbf16>
    tpu.vector_store %arg7[%313, %c0_106, %c0_107], %316 {strides = array<i32>} : memref<8x16x128xbf16, #tpu.memory_space<vmem>>, vector<1x16x128xbf16>,
    %c7_i32 = arith.constant 7 : i32
    %317 = arith.index_cast %c7_i32 : i32 to index
    %c0_108 = arith.constant 0 : index
    %c0_109 = arith.constant 0 : index
    %318 = vector.load %arg10[%317, %c0_108, %c0_109] : memref<8x16x128xbf16, #tpu.memory_space<vmem>>, vector<1x16x128xbf16>
    %319 = vector.shape_cast %318 : vector<1x16x128xbf16> to vector<16x128xbf16>
    %320 = arith.extf %319 : vector<16x128xbf16> to vector<16x128xf32>
    %321 = arith.truncf %306 : vector<16x32xf32> to vector<16x32xbf16>
    %cst_110 = arith.constant dense<0.000000e+00> : vector<16x128xf32>
    %322 = tpu.matmul %321, %13, %cst_110 {dimension_numbers = #tpu.dot_dimension_numbers<[1], [0], [0], [1], [0, 0, 1, 1], [], []>} : vector<16x32xbf16>, vector<32x128xbf16>, vector<16x128xf32> -> vector<16x128xf32>
    %323 = arith.addf %320, %322 : vector<16x128xf32>
    %324 = vector.extract_strided_slice %323 {offsets = [0, 0], sizes = [16, 96], strides = [1, 1]} : vector<16x128xf32> to vector<16x96xf32>
    %cst_111 = arith.constant 5.000000e-01 : f32
    %325 = vector.broadcast %cst_111 : f32 to vector<16x96xf32>
    %326 = arith.mulf %324, %325 : vector<16x96xf32>
    %327 = math.tanh %326 : vector<16x96xf32>
    %cst_112 = arith.constant 5.000000e-01 : f32
    %328 = vector.broadcast %cst_112 : f32 to vector<16x96xf32>
    %329 = arith.mulf %327, %328 : vector<16x96xf32>
    %cst_113 = arith.constant 5.000000e-01 : f32
    %330 = vector.broadcast %cst_113 : f32 to vector<16x96xf32>
    %331 = arith.addf %329, %330 : vector<16x96xf32>
    %332 = vector.extract_strided_slice %331 {offsets = [0, 0], sizes = [16, 32], strides = [1, 1]} : vector<16x96xf32> to vector<16x32xf32>
    %333 = vector.extract_strided_slice %331 {offsets = [0, 32], sizes = [16, 32], strides = [1, 1]} : vector<16x96xf32> to vector<16x32xf32>
    %334 = vector.extract_strided_slice %331 {offsets = [0, 64], sizes = [16, 32], strides = [1, 1]} : vector<16x96xf32> to vector<16x32xf32>
    %335 = vector.extract_strided_slice %323 {offsets = [0, 96], sizes = [16, 32], strides = [1, 1]} : vector<16x128xf32> to vector<16x32xf32>
    %336 = math.tanh %335 : vector<16x32xf32>
    %337 = arith.mulf %333, %307 : vector<16x32xf32>
    %338 = arith.mulf %332, %336 : vector<16x32xf32>
    %339 = arith.addf %337, %338 : vector<16x32xf32>
    %340 = math.tanh %339 : vector<16x32xf32>
    %341 = arith.mulf %334, %340 : vector<16x32xf32>
    %342 = arith.index_cast %c7_i32 : i32 to index
    %c0_114 = arith.constant 0 : index
    %c0_115 = arith.constant 0 : index
    %343 = vector.load %arg3[%342, %c0_114, %c0_115] : memref<8x16x1xf32, #tpu.memory_space<vmem>>, vector<1x16x1xf32>
    %344 = vector.shape_cast %343 : vector<1x16x1xf32> to vector<16x1xf32>
    %cst_116 = arith.constant 0.000000e+00 : f32
    %345 = vector.broadcast %cst_116 : f32 to vector<16x1xf32>
    %346 = arith.cmpf ogt, %344, %345 : vector<16x1xf32>
    %347 = vector.shape_cast %346 : vector<16x1xi1> to vector<16x1xi1>
    %348 = vector.broadcast %347 : vector<16x1xi1> to vector<16x32xi1>
    %349 = arith.select %348, %341, %306 : vector<16x32xi1>, vector<16x32xf32>
    %350 = arith.select %348, %339, %307 : vector<16x32xi1>, vector<16x32xf32>
    %cst_117 = arith.constant 0.000000e+00 : f32
    %351 = vector.broadcast %cst_117 : f32 to vector<16x32xf32>
    %352 = arith.select %348, %341, %351 : vector<16x32xi1>, vector<16x32xf32>
    %353 = arith.truncf %352 : vector<16x32xf32> to vector<16x32xbf16>
    %cst_118 = arith.constant 0.000000e+00 : bf16
    %354 = vector.broadcast %cst_118 : bf16 to vector<16x96xbf16>
    %355 = tpu.concatenate %353, %354 in 1 : vector<16x32xbf16>, vector<16x96xbf16> -> vector<16x128xbf16>
    %356 = arith.index_cast %c7_i32 : i32 to index
    %c0_119 = arith.constant 0 : index
    %c0_120 = arith.constant 0 : index
    %357 = vector.load %arg7[%356, %c0_119, %c0_120] : memref<8x16x128xbf16, #tpu.memory_space<vmem>>, vector<1x16x128xbf16>
    %358 = vector.shape_cast %357 : vector<1x16x128xbf16> to vector<16x128xbf16>
    %359 = vector.shape_cast %355 : vector<16x128xbf16> to vector<1x16x128xbf16>
    tpu.vector_store %arg7[%356, %c0_119, %c0_120], %359 {strides = array<i32>} : memref<8x16x128xbf16, #tpu.memory_space<vmem>>, vector<1x16x128xbf16>,
    %c8_i32 = arith.constant 8 : i32
    %c0_121 = arith.constant 0 : index
    %c0_122 = arith.constant 0 : index
    %360 = vector.load %arg8[%c0_121, %c0_122] : memref<16x32xf32, #tpu.memory_space<vmem>>, vector<16x32xf32>
    tpu.vector_store %arg8[%c0_121, %c0_122], %349 {strides = array<i32>} : memref<16x32xf32, #tpu.memory_space<vmem>>, vector<16x32xf32>,
    %c0_123 = arith.constant 0 : index
    %c0_124 = arith.constant 0 : index
    %361 = vector.load %arg9[%c0_123, %c0_124] : memref<16x32xf32, #tpu.memory_space<vmem>>, vector<16x32xf32>
    tpu.vector_store %arg9[%c0_123, %c0_124], %350 {strides = array<i32>} : memref<16x32xf32, #tpu.memory_space<vmem>>, vector<16x32xf32>,
    return
  }
  func.func @transform_0(%arg0: i32, %arg1: i32) -> (i32, i32, i32) {
    %c0_i32 = arith.constant 0 : i32
    %c0_i32_0 = arith.constant 0 : i32
    return %arg1, %arg0, %c0_i32 : i32, i32, i32
  }
  func.func @transform_1(%arg0: i32, %arg1: i32) -> (i32, i32, i32) {
    %c0_i32 = arith.constant 0 : i32
    %c0_i32_0 = arith.constant 0 : i32
    return %arg1, %arg0, %c0_i32 : i32, i32, i32
  }
  func.func @transform_2(%arg0: i32, %arg1: i32) -> (i32, i32) {
    %c0_i32 = arith.constant 0 : i32
    %c0_i32_0 = arith.constant 0 : i32
    %c0_i32_1 = arith.constant 0 : i32
    return %c0_i32, %c0_i32_0 : i32, i32
  }
  func.func @transform_3(%arg0: i32, %arg1: i32) -> (i32, i32) {
    %c0_i32 = arith.constant 0 : i32
    %c0_i32_0 = arith.constant 0 : i32
    %c0_i32_1 = arith.constant 0 : i32
    return %c0_i32, %c0_i32_0 : i32, i32
  }
  func.func @transform_4(%arg0: i32, %arg1: i32) -> (i32, i32) {
    %c0_i32 = arith.constant 0 : i32
    %c0_i32_0 = arith.constant 0 : i32
    %c0_i32_1 = arith.constant 0 : i32
    return %c0_i32, %c0_i32_0 : i32, i32
  }
  func.func @transform_5(%arg0: i32, %arg1: i32) -> (i32, i32, i32) {
    %c0_i32 = arith.constant 0 : i32
    %c0_i32_0 = arith.constant 0 : i32
    return %arg1, %arg0, %c0_i32 : i32, i32, i32
  }
  func.func @transform_6(%arg0: i32, %arg1: i32) -> (i32, i32) {
    %c0_i32 = arith.constant 0 : i32
    %c0_i32_0 = arith.constant 0 : i32
    return %arg0, %c0_i32 : i32, i32
  }
  func.func @transform_7(%arg0: i32, %arg1: i32) -> (i32, i32) {
    %c0_i32 = arith.constant 0 : i32
    %c0_i32_0 = arith.constant 0 : i32
    return %arg0, %c0_i32 : i32, i32
  }
}

module attributes {stable_mosaic.version = 11 : i64} {
  func.func @_lstm_kernel(%arg0: i32, %arg1: i32, %arg2: memref<8x16x16xbf16, #tpu.memory_space<vmem>>, %arg3: memref<8x16x1xf32, #tpu.memory_space<vmem>>, %arg4: memref<16x128xbf16, #tpu.memory_space<vmem>>, %arg5: memref<32x128xbf16, #tpu.memory_space<vmem>>, %arg6: memref<1x128xf32, #tpu.memory_space<vmem>>, %arg7: memref<8x16x128xbf16, #tpu.memory_space<vmem>>, %arg8: memref<16x32xf32, #tpu.memory_space<vmem>>, %arg9: memref<16x32xf32, #tpu.memory_space<vmem>>, %arg10: memref<8x16x128xbf16, #tpu.memory_space<vmem>>) attributes {dimension_semantics = [#tpu.dimension_semantics<parallel>, #tpu.dimension_semantics<arbitrary>], iteration_bounds = array<i64: 1, 1>, scalar_prefetch = 0 : i64, scratch_operands = 1 : i64, tpu.core_type = #tpu.core_type<tc>, window_params = [{transform_indices = @transform_0, window_bounds = array<i64: 8, 16, 16>}, {transform_indices = @transform_1, window_bounds = array<i64: 8, 16, 1>}, {pipeline_mode = #tpu.pipeline_mode<synchronous>, transform_indices = @transform_2, window_bounds = array<i64: 16, 128>}, {pipeline_mode = #tpu.pipeline_mode<synchronous>, transform_indices = @transform_3, window_bounds = array<i64: 32, 128>}, {pipeline_mode = #tpu.pipeline_mode<synchronous>, transform_indices = @transform_4, window_bounds = array<i64: 1, 128>}, {transform_indices = @transform_5, window_bounds = array<i64: 8, 16, 128>}, {transform_indices = @transform_6, window_bounds = array<i64: 16, 32>}, {transform_indices = @transform_7, window_bounds = array<i64: 16, 32>}]} {
    %c0_i32 = arith.constant 0 : i32
    %0 = arith.cmpi eq, %arg1, %c0_i32 : i32
    %1 = arith.extui %0 : i1 to i32
    %c0_i32_0 = arith.constant 0 : i32
    %2 = arith.cmpi ne, %1, %c0_i32_0 : i32
    scf.if %2 {
      %cst_125 = arith.constant 0.000000e+00 : f32
      %362 = vector.broadcast %cst_125 : f32 to vector<16x32xf32>
      %c0_126 = arith.constant 0 : index
      %c0_127 = arith.constant 0 : index
      %363 = vector.load %arg8[%c0_126, %c0_127] : memref<16x32xf32, #tpu.memory_space<vmem>>, vector<16x32xf32>
      tpu.vector_store %arg8[%c0_126, %c0_127], %362 {strides = array<i32>} : memref<16x32xf32, #tpu.memory_space<vmem>>, vector<16x32xf32>,
      %cst_128 = arith.constant 0.000000e+00 : f32
      %364 = vector.broadcast %cst_128 : f32 to vector<16x32xf32>
      %c0_129 = arith.constant 0 : index
      %c0_130 = arith.constant 0 : index
      %365 = vector.load %arg9[%c0_129, %c0_130] : memref<16x32xf32, #tpu.memory_space<vmem>>, vector<16x32xf32>
      tpu.vector_store %arg9[%c0_129, %c0_130], %364 {strides = array<i32>} : memref<16x32xf32, #tpu.memory_space<vmem>>, vector<16x32xf32>,
    } else {
    }
    %c0 = arith.constant 0 : index
    %c0_1 = arith.constant 0 : index
    %c0_2 = arith.constant 0 : index
    %3 = vector.load %arg2[%c0, %c0_1, %c0_2] : memref<8x16x16xbf16, #tpu.memory_space<vmem>>, vector<8x16x16xbf16>
    %4 = vector.shape_cast %3 : vector<8x16x16xbf16> to vector<128x16xbf16>
    %c0_3 = arith.constant 0 : index
    %c0_4 = arith.constant 0 : index
    %5 = vector.load %arg4[%c0_3, %c0_4] : memref<16x128xbf16, #tpu.memory_space<vmem>>, vector<16x128xbf16>
    %cst = arith.constant dense<0.000000e+00> : vector<128x128xf32>
    %6 = tpu.matmul %4, %5, %cst {dimension_numbers = #tpu.dot_dimension_numbers<[1], [0], [0], [1], [0, 0, 1, 1], [], []>} : vector<128x16xbf16>, vector<16x128xbf16>, vector<128x128xf32> -> vector<128x128xf32>
    %c0_5 = arith.constant 0 : index
    %c0_6 = arith.constant 0 : index
    %7 = vector.load %arg6[%c0_5, %c0_6] : memref<1x128xf32, #tpu.memory_space<vmem>>, vector<1x128xf32>
    %8 = vector.broadcast %7 : vector<1x128xf32> to vector<128x128xf32>
    %9 = arith.addf %6, %8 : vector<128x128xf32>
    %10 = arith.truncf %9 : vector<128x128xf32> to vector<128x128xbf16>
    %11 = vector.shape_cast %10 : vector<128x128xbf16> to vector<8x16x128xbf16>
    %c0_7 = arith.constant 0 : index
    %c0_8 = arith.constant 0 : index
    %c0_9 = arith.constant 0 : index
    %12 = vector.load %arg10[%c0_7, %c0_8, %c0_9] : memref<8x16x128xbf16, #tpu.memory_space<vmem>>, vector<8x16x128xbf16>
    tpu.vector_store %arg10[%c0_7, %c0_8, %c0_9], %11 {strides = array<i32>} : memref<8x16x128xbf16, #tpu.memory_space<vmem>>, vector<8x16x128xbf16>,
    %c0_10 = arith.constant 0 : index
    %c0_11 = arith.constant 0 : index
    %13 = vector.load %arg5[%c0_10, %c0_11] : memref<32x128xbf16, #tpu.memory_space<vmem>>, vector<32x128xbf16>
    %c0_12 = arith.constant 0 : index
    %c0_13 = arith.constant 0 : index
    %14 = vector.load %arg8[%c0_12, %c0_13] : memref<16x32xf32, #tpu.memory_space<vmem>>, vector<16x32xf32>
    %c0_14 = arith.constant 0 : index
    %c0_15 = arith.constant 0 : index
    %15 = vector.load %arg9[%c0_14, %c0_15] : memref<16x32xf32, #tpu.memory_space<vmem>>, vector<16x32xf32>
    %c0_i32_16 = arith.constant 0 : i32
    %16 = arith.index_cast %c0_i32_16 : i32 to index
    %c0_17 = arith.constant 0 : index
    %c0_18 = arith.constant 0 : index
    %17 = vector.load %arg10[%16, %c0_17, %c0_18] : memref<8x16x128xbf16, #tpu.memory_space<vmem>>, vector<1x16x128xbf16>
    %18 = vector.shape_cast %17 : vector<1x16x128xbf16> to vector<16x128xbf16>
    %19 = arith.extf %18 : vector<16x128xbf16> to vector<16x128xf32>
    %20 = arith.truncf %14 : vector<16x32xf32> to vector<16x32xbf16>
    %cst_19 = arith.constant dense<0.000000e+00> : vector<16x128xf32>
    %21 = tpu.matmul %20, %13, %cst_19 {dimension_numbers = #tpu.dot_dimension_numbers<[1], [0], [0], [1], [0, 0, 1, 1], [], []>} : vector<16x32xbf16>, vector<32x128xbf16>, vector<16x128xf32> -> vector<16x128xf32>
    %22 = arith.addf %19, %21 : vector<16x128xf32>
    %23 = vector.extract_strided_slice %22 {offsets = [0, 0], sizes = [16, 96], strides = [1, 1]} : vector<16x128xf32> to vector<16x96xf32>
    %cst_20 = arith.constant 5.000000e-01 : f32
    %24 = vector.broadcast %cst_20 : f32 to vector<16x96xf32>
    %25 = arith.mulf %23, %24 : vector<16x96xf32>
    %26 = math.tanh %25 : vector<16x96xf32>
    %cst_21 = arith.constant 5.000000e-01 : f32
    %27 = vector.broadcast %cst_21 : f32 to vector<16x96xf32>
    %28 = arith.mulf %26, %27 : vector<16x96xf32>
    %cst_22 = arith.constant 5.000000e-01 : f32
    %29 = vector.broadcast %cst_22 : f32 to vector<16x96xf32>
    %30 = arith.addf %28, %29 : vector<16x96xf32>
    %31 = vector.extract_strided_slice %30 {offsets = [0, 0], sizes = [16, 32], strides = [1, 1]} : vector<16x96xf32> to vector<16x32xf32>
    %32 = vector.extract_strided_slice %30 {offsets = [0, 32], sizes = [16, 32], strides = [1, 1]} : vector<16x96xf32> to vector<16x32xf32>
    %33 = vector.extract_strided_slice %30 {offsets = [0, 64], sizes = [16, 32], strides = [1, 1]} : vector<16x96xf32> to vector<16x32xf32>
    %34 = vector.extract_strided_slice %22 {offsets = [0, 96], sizes = [16, 32], strides = [1, 1]} : vector<16x128xf32> to vector<16x32xf32>
    %35 = math.tanh %34 : vector<16x32xf32>
    %36 = arith.mulf %32, %15 : vector<16x32xf32>
    %37 = arith.mulf %31, %35 : vector<16x32xf32>
    %38 = arith.addf %36, %37 : vector<16x32xf32>
    %39 = math.tanh %38 : vector<16x32xf32>
    %40 = arith.mulf %33, %39 : vector<16x32xf32>
    %41 = arith.index_cast %c0_i32_16 : i32 to index
    %c0_23 = arith.constant 0 : index
    %c0_24 = arith.constant 0 : index
    %42 = vector.load %arg3[%41, %c0_23, %c0_24] : memref<8x16x1xf32, #tpu.memory_space<vmem>>, vector<1x16x1xf32>
    %43 = vector.shape_cast %42 : vector<1x16x1xf32> to vector<16x1xf32>
    %cst_25 = arith.constant 0.000000e+00 : f32
    %44 = vector.broadcast %cst_25 : f32 to vector<16x1xf32>
    %45 = arith.cmpf ogt, %43, %44 : vector<16x1xf32>
    %46 = vector.shape_cast %45 : vector<16x1xi1> to vector<16x1xi1>
    %47 = vector.broadcast %46 : vector<16x1xi1> to vector<16x32xi1>
    %48 = arith.select %47, %40, %14 : vector<16x32xi1>, vector<16x32xf32>
    %49 = arith.select %47, %38, %15 : vector<16x32xi1>, vector<16x32xf32>
    %cst_26 = arith.constant 0.000000e+00 : f32
    %50 = vector.broadcast %cst_26 : f32 to vector<16x32xf32>
    %51 = arith.select %47, %40, %50 : vector<16x32xi1>, vector<16x32xf32>
    %52 = arith.truncf %51 : vector<16x32xf32> to vector<16x32xbf16>
    %cst_27 = arith.constant 0.000000e+00 : bf16
    %53 = vector.broadcast %cst_27 : bf16 to vector<16x96xbf16>
    %54 = tpu.concatenate %52, %53 in 1 : vector<16x32xbf16>, vector<16x96xbf16> -> vector<16x128xbf16>
    %55 = arith.index_cast %c0_i32_16 : i32 to index
    %c0_28 = arith.constant 0 : index
    %c0_29 = arith.constant 0 : index
    %56 = vector.load %arg7[%55, %c0_28, %c0_29] : memref<8x16x128xbf16, #tpu.memory_space<vmem>>, vector<1x16x128xbf16>
    %57 = vector.shape_cast %56 : vector<1x16x128xbf16> to vector<16x128xbf16>
    %58 = vector.shape_cast %54 : vector<16x128xbf16> to vector<1x16x128xbf16>
    tpu.vector_store %arg7[%55, %c0_28, %c0_29], %58 {strides = array<i32>} : memref<8x16x128xbf16, #tpu.memory_space<vmem>>, vector<1x16x128xbf16>,
    %c1_i32 = arith.constant 1 : i32
    %59 = arith.index_cast %c1_i32 : i32 to index
    %c0_30 = arith.constant 0 : index
    %c0_31 = arith.constant 0 : index
    %60 = vector.load %arg10[%59, %c0_30, %c0_31] : memref<8x16x128xbf16, #tpu.memory_space<vmem>>, vector<1x16x128xbf16>
    %61 = vector.shape_cast %60 : vector<1x16x128xbf16> to vector<16x128xbf16>
    %62 = arith.extf %61 : vector<16x128xbf16> to vector<16x128xf32>
    %63 = arith.truncf %48 : vector<16x32xf32> to vector<16x32xbf16>
    %cst_32 = arith.constant dense<0.000000e+00> : vector<16x128xf32>
    %64 = tpu.matmul %63, %13, %cst_32 {dimension_numbers = #tpu.dot_dimension_numbers<[1], [0], [0], [1], [0, 0, 1, 1], [], []>} : vector<16x32xbf16>, vector<32x128xbf16>, vector<16x128xf32> -> vector<16x128xf32>
    %65 = arith.addf %62, %64 : vector<16x128xf32>
    %66 = vector.extract_strided_slice %65 {offsets = [0, 0], sizes = [16, 96], strides = [1, 1]} : vector<16x128xf32> to vector<16x96xf32>
    %cst_33 = arith.constant 5.000000e-01 : f32
    %67 = vector.broadcast %cst_33 : f32 to vector<16x96xf32>
    %68 = arith.mulf %66, %67 : vector<16x96xf32>
    %69 = math.tanh %68 : vector<16x96xf32>
    %cst_34 = arith.constant 5.000000e-01 : f32
    %70 = vector.broadcast %cst_34 : f32 to vector<16x96xf32>
    %71 = arith.mulf %69, %70 : vector<16x96xf32>
    %cst_35 = arith.constant 5.000000e-01 : f32
    %72 = vector.broadcast %cst_35 : f32 to vector<16x96xf32>
    %73 = arith.addf %71, %72 : vector<16x96xf32>
    %74 = vector.extract_strided_slice %73 {offsets = [0, 0], sizes = [16, 32], strides = [1, 1]} : vector<16x96xf32> to vector<16x32xf32>
    %75 = vector.extract_strided_slice %73 {offsets = [0, 32], sizes = [16, 32], strides = [1, 1]} : vector<16x96xf32> to vector<16x32xf32>
    %76 = vector.extract_strided_slice %73 {offsets = [0, 64], sizes = [16, 32], strides = [1, 1]} : vector<16x96xf32> to vector<16x32xf32>
    %77 = vector.extract_strided_slice %65 {offsets = [0, 96], sizes = [16, 32], strides = [1, 1]} : vector<16x128xf32> to vector<16x32xf32>
    %78 = math.tanh %77 : vector<16x32xf32>
    %79 = arith.mulf %75, %49 : vector<16x32xf32>
    %80 = arith.mulf %74, %78 : vector<16x32xf32>
    %81 = arith.addf %79, %80 : vector<16x32xf32>
    %82 = math.tanh %81 : vector<16x32xf32>
    %83 = arith.mulf %76, %82 : vector<16x32xf32>
    %84 = arith.index_cast %c1_i32 : i32 to index
    %c0_36 = arith.constant 0 : index
    %c0_37 = arith.constant 0 : index
    %85 = vector.load %arg3[%84, %c0_36, %c0_37] : memref<8x16x1xf32, #tpu.memory_space<vmem>>, vector<1x16x1xf32>
    %86 = vector.shape_cast %85 : vector<1x16x1xf32> to vector<16x1xf32>
    %cst_38 = arith.constant 0.000000e+00 : f32
    %87 = vector.broadcast %cst_38 : f32 to vector<16x1xf32>
    %88 = arith.cmpf ogt, %86, %87 : vector<16x1xf32>
    %89 = vector.shape_cast %88 : vector<16x1xi1> to vector<16x1xi1>
    %90 = vector.broadcast %89 : vector<16x1xi1> to vector<16x32xi1>
    %91 = arith.select %90, %83, %48 : vector<16x32xi1>, vector<16x32xf32>
    %92 = arith.select %90, %81, %49 : vector<16x32xi1>, vector<16x32xf32>
    %cst_39 = arith.constant 0.000000e+00 : f32
    %93 = vector.broadcast %cst_39 : f32 to vector<16x32xf32>
    %94 = arith.select %90, %83, %93 : vector<16x32xi1>, vector<16x32xf32>
    %95 = arith.truncf %94 : vector<16x32xf32> to vector<16x32xbf16>
    %cst_40 = arith.constant 0.000000e+00 : bf16
    %96 = vector.broadcast %cst_40 : bf16 to vector<16x96xbf16>
    %97 = tpu.concatenate %95, %96 in 1 : vector<16x32xbf16>, vector<16x96xbf16> -> vector<16x128xbf16>
    %98 = arith.index_cast %c1_i32 : i32 to index
    %c0_41 = arith.constant 0 : index
    %c0_42 = arith.constant 0 : index
    %99 = vector.load %arg7[%98, %c0_41, %c0_42] : memref<8x16x128xbf16, #tpu.memory_space<vmem>>, vector<1x16x128xbf16>
    %100 = vector.shape_cast %99 : vector<1x16x128xbf16> to vector<16x128xbf16>
    %101 = vector.shape_cast %97 : vector<16x128xbf16> to vector<1x16x128xbf16>
    tpu.vector_store %arg7[%98, %c0_41, %c0_42], %101 {strides = array<i32>} : memref<8x16x128xbf16, #tpu.memory_space<vmem>>, vector<1x16x128xbf16>,
    %c2_i32 = arith.constant 2 : i32
    %102 = arith.index_cast %c2_i32 : i32 to index
    %c0_43 = arith.constant 0 : index
    %c0_44 = arith.constant 0 : index
    %103 = vector.load %arg10[%102, %c0_43, %c0_44] : memref<8x16x128xbf16, #tpu.memory_space<vmem>>, vector<1x16x128xbf16>
    %104 = vector.shape_cast %103 : vector<1x16x128xbf16> to vector<16x128xbf16>
    %105 = arith.extf %104 : vector<16x128xbf16> to vector<16x128xf32>
    %106 = arith.truncf %91 : vector<16x32xf32> to vector<16x32xbf16>
    %cst_45 = arith.constant dense<0.000000e+00> : vector<16x128xf32>
    %107 = tpu.matmul %106, %13, %cst_45 {dimension_numbers = #tpu.dot_dimension_numbers<[1], [0], [0], [1], [0, 0, 1, 1], [], []>} : vector<16x32xbf16>, vector<32x128xbf16>, vector<16x128xf32> -> vector<16x128xf32>
    %108 = arith.addf %105, %107 : vector<16x128xf32>
    %109 = vector.extract_strided_slice %108 {offsets = [0, 0], sizes = [16, 96], strides = [1, 1]} : vector<16x128xf32> to vector<16x96xf32>
    %cst_46 = arith.constant 5.000000e-01 : f32
    %110 = vector.broadcast %cst_46 : f32 to vector<16x96xf32>
    %111 = arith.mulf %109, %110 : vector<16x96xf32>
    %112 = math.tanh %111 : vector<16x96xf32>
    %cst_47 = arith.constant 5.000000e-01 : f32
    %113 = vector.broadcast %cst_47 : f32 to vector<16x96xf32>
    %114 = arith.mulf %112, %113 : vector<16x96xf32>
    %cst_48 = arith.constant 5.000000e-01 : f32
    %115 = vector.broadcast %cst_48 : f32 to vector<16x96xf32>
    %116 = arith.addf %114, %115 : vector<16x96xf32>
    %117 = vector.extract_strided_slice %116 {offsets = [0, 0], sizes = [16, 32], strides = [1, 1]} : vector<16x96xf32> to vector<16x32xf32>
    %118 = vector.extract_strided_slice %116 {offsets = [0, 32], sizes = [16, 32], strides = [1, 1]} : vector<16x96xf32> to vector<16x32xf32>
    %119 = vector.extract_strided_slice %116 {offsets = [0, 64], sizes = [16, 32], strides = [1, 1]} : vector<16x96xf32> to vector<16x32xf32>
    %120 = vector.extract_strided_slice %108 {offsets = [0, 96], sizes = [16, 32], strides = [1, 1]} : vector<16x128xf32> to vector<16x32xf32>
    %121 = math.tanh %120 : vector<16x32xf32>
    %122 = arith.mulf %118, %92 : vector<16x32xf32>
    %123 = arith.mulf %117, %121 : vector<16x32xf32>
    %124 = arith.addf %122, %123 : vector<16x32xf32>
    %125 = math.tanh %124 : vector<16x32xf32>
    %126 = arith.mulf %119, %125 : vector<16x32xf32>
    %127 = arith.index_cast %c2_i32 : i32 to index
    %c0_49 = arith.constant 0 : index
    %c0_50 = arith.constant 0 : index
    %128 = vector.load %arg3[%127, %c0_49, %c0_50] : memref<8x16x1xf32, #tpu.memory_space<vmem>>, vector<1x16x1xf32>
    %129 = vector.shape_cast %128 : vector<1x16x1xf32> to vector<16x1xf32>
    %cst_51 = arith.constant 0.000000e+00 : f32
    %130 = vector.broadcast %cst_51 : f32 to vector<16x1xf32>
    %131 = arith.cmpf ogt, %129, %130 : vector<16x1xf32>
    %132 = vector.shape_cast %131 : vector<16x1xi1> to vector<16x1xi1>
    %133 = vector.broadcast %132 : vector<16x1xi1> to vector<16x32xi1>
    %134 = arith.select %133, %126, %91 : vector<16x32xi1>, vector<16x32xf32>
    %135 = arith.select %133, %124, %92 : vector<16x32xi1>, vector<16x32xf32>
    %cst_52 = arith.constant 0.000000e+00 : f32
    %136 = vector.broadcast %cst_52 : f32 to vector<16x32xf32>
    %137 = arith.select %133, %126, %136 : vector<16x32xi1>, vector<16x32xf32>
    %138 = arith.truncf %137 : vector<16x32xf32> to vector<16x32xbf16>
    %cst_53 = arith.constant 0.000000e+00 : bf16
    %139 = vector.broadcast %cst_53 : bf16 to vector<16x96xbf16>
    %140 = tpu.concatenate %138, %139 in 1 : vector<16x32xbf16>, vector<16x96xbf16> -> vector<16x128xbf16>
    %141 = arith.index_cast %c2_i32 : i32 to index
    %c0_54 = arith.constant 0 : index
    %c0_55 = arith.constant 0 : index
    %142 = vector.load %arg7[%141, %c0_54, %c0_55] : memref<8x16x128xbf16, #tpu.memory_space<vmem>>, vector<1x16x128xbf16>
    %143 = vector.shape_cast %142 : vector<1x16x128xbf16> to vector<16x128xbf16>
    %144 = vector.shape_cast %140 : vector<16x128xbf16> to vector<1x16x128xbf16>
    tpu.vector_store %arg7[%141, %c0_54, %c0_55], %144 {strides = array<i32>} : memref<8x16x128xbf16, #tpu.memory_space<vmem>>, vector<1x16x128xbf16>,
    %c3_i32 = arith.constant 3 : i32
    %145 = arith.index_cast %c3_i32 : i32 to index
    %c0_56 = arith.constant 0 : index
    %c0_57 = arith.constant 0 : index
    %146 = vector.load %arg10[%145, %c0_56, %c0_57] : memref<8x16x128xbf16, #tpu.memory_space<vmem>>, vector<1x16x128xbf16>
    %147 = vector.shape_cast %146 : vector<1x16x128xbf16> to vector<16x128xbf16>
    %148 = arith.extf %147 : vector<16x128xbf16> to vector<16x128xf32>
    %149 = arith.truncf %134 : vector<16x32xf32> to vector<16x32xbf16>
    %cst_58 = arith.constant dense<0.000000e+00> : vector<16x128xf32>
    %150 = tpu.matmul %149, %13, %cst_58 {dimension_numbers = #tpu.dot_dimension_numbers<[1], [0], [0], [1], [0, 0, 1, 1], [], []>} : vector<16x32xbf16>, vector<32x128xbf16>, vector<16x128xf32> -> vector<16x128xf32>
    %151 = arith.addf %148, %150 : vector<16x128xf32>
    %152 = vector.extract_strided_slice %151 {offsets = [0, 0], sizes = [16, 96], strides = [1, 1]} : vector<16x128xf32> to vector<16x96xf32>
    %cst_59 = arith.constant 5.000000e-01 : f32
    %153 = vector.broadcast %cst_59 : f32 to vector<16x96xf32>
    %154 = arith.mulf %152, %153 : vector<16x96xf32>
    %155 = math.tanh %154 : vector<16x96xf32>
    %cst_60 = arith.constant 5.000000e-01 : f32
    %156 = vector.broadcast %cst_60 : f32 to vector<16x96xf32>
    %157 = arith.mulf %155, %156 : vector<16x96xf32>
    %cst_61 = arith.constant 5.000000e-01 : f32
    %158 = vector.broadcast %cst_61 : f32 to vector<16x96xf32>
    %159 = arith.addf %157, %158 : vector<16x96xf32>
    %160 = vector.extract_strided_slice %159 {offsets = [0, 0], sizes = [16, 32], strides = [1, 1]} : vector<16x96xf32> to vector<16x32xf32>
    %161 = vector.extract_strided_slice %159 {offsets = [0, 32], sizes = [16, 32], strides = [1, 1]} : vector<16x96xf32> to vector<16x32xf32>
    %162 = vector.extract_strided_slice %159 {offsets = [0, 64], sizes = [16, 32], strides = [1, 1]} : vector<16x96xf32> to vector<16x32xf32>
    %163 = vector.extract_strided_slice %151 {offsets = [0, 96], sizes = [16, 32], strides = [1, 1]} : vector<16x128xf32> to vector<16x32xf32>
    %164 = math.tanh %163 : vector<16x32xf32>
    %165 = arith.mulf %161, %135 : vector<16x32xf32>
    %166 = arith.mulf %160, %164 : vector<16x32xf32>
    %167 = arith.addf %165, %166 : vector<16x32xf32>
    %168 = math.tanh %167 : vector<16x32xf32>
    %169 = arith.mulf %162, %168 : vector<16x32xf32>
    %170 = arith.index_cast %c3_i32 : i32 to index
    %c0_62 = arith.constant 0 : index
    %c0_63 = arith.constant 0 : index
    %171 = vector.load %arg3[%170, %c0_62, %c0_63] : memref<8x16x1xf32, #tpu.memory_space<vmem>>, vector<1x16x1xf32>
    %172 = vector.shape_cast %171 : vector<1x16x1xf32> to vector<16x1xf32>
    %cst_64 = arith.constant 0.000000e+00 : f32
    %173 = vector.broadcast %cst_64 : f32 to vector<16x1xf32>
    %174 = arith.cmpf ogt, %172, %173 : vector<16x1xf32>
    %175 = vector.shape_cast %174 : vector<16x1xi1> to vector<16x1xi1>
    %176 = vector.broadcast %175 : vector<16x1xi1> to vector<16x32xi1>
    %177 = arith.select %176, %169, %134 : vector<16x32xi1>, vector<16x32xf32>
    %178 = arith.select %176, %167, %135 : vector<16x32xi1>, vector<16x32xf32>
    %cst_65 = arith.constant 0.000000e+00 : f32
    %179 = vector.broadcast %cst_65 : f32 to vector<16x32xf32>
    %180 = arith.select %176, %169, %179 : vector<16x32xi1>, vector<16x32xf32>
    %181 = arith.truncf %180 : vector<16x32xf32> to vector<16x32xbf16>
    %cst_66 = arith.constant 0.000000e+00 : bf16
    %182 = vector.broadcast %cst_66 : bf16 to vector<16x96xbf16>
    %183 = tpu.concatenate %181, %182 in 1 : vector<16x32xbf16>, vector<16x96xbf16> -> vector<16x128xbf16>
    %184 = arith.index_cast %c3_i32 : i32 to index
    %c0_67 = arith.constant 0 : index
    %c0_68 = arith.constant 0 : index
    %185 = vector.load %arg7[%184, %c0_67, %c0_68] : memref<8x16x128xbf16, #tpu.memory_space<vmem>>, vector<1x16x128xbf16>
    %186 = vector.shape_cast %185 : vector<1x16x128xbf16> to vector<16x128xbf16>
    %187 = vector.shape_cast %183 : vector<16x128xbf16> to vector<1x16x128xbf16>
    tpu.vector_store %arg7[%184, %c0_67, %c0_68], %187 {strides = array<i32>} : memref<8x16x128xbf16, #tpu.memory_space<vmem>>, vector<1x16x128xbf16>,
    %c4_i32 = arith.constant 4 : i32
    %188 = arith.index_cast %c4_i32 : i32 to index
    %c0_69 = arith.constant 0 : index
    %c0_70 = arith.constant 0 : index
    %189 = vector.load %arg10[%188, %c0_69, %c0_70] : memref<8x16x128xbf16, #tpu.memory_space<vmem>>, vector<1x16x128xbf16>
    %190 = vector.shape_cast %189 : vector<1x16x128xbf16> to vector<16x128xbf16>
    %191 = arith.extf %190 : vector<16x128xbf16> to vector<16x128xf32>
    %192 = arith.truncf %177 : vector<16x32xf32> to vector<16x32xbf16>
    %cst_71 = arith.constant dense<0.000000e+00> : vector<16x128xf32>
    %193 = tpu.matmul %192, %13, %cst_71 {dimension_numbers = #tpu.dot_dimension_numbers<[1], [0], [0], [1], [0, 0, 1, 1], [], []>} : vector<16x32xbf16>, vector<32x128xbf16>, vector<16x128xf32> -> vector<16x128xf32>
    %194 = arith.addf %191, %193 : vector<16x128xf32>
    %195 = vector.extract_strided_slice %194 {offsets = [0, 0], sizes = [16, 96], strides = [1, 1]} : vector<16x128xf32> to vector<16x96xf32>
    %cst_72 = arith.constant 5.000000e-01 : f32
    %196 = vector.broadcast %cst_72 : f32 to vector<16x96xf32>
    %197 = arith.mulf %195, %196 : vector<16x96xf32>
    %198 = math.tanh %197 : vector<16x96xf32>
    %cst_73 = arith.constant 5.000000e-01 : f32
    %199 = vector.broadcast %cst_73 : f32 to vector<16x96xf32>
    %200 = arith.mulf %198, %199 : vector<16x96xf32>
    %cst_74 = arith.constant 5.000000e-01 : f32
    %201 = vector.broadcast %cst_74 : f32 to vector<16x96xf32>
    %202 = arith.addf %200, %201 : vector<16x96xf32>
    %203 = vector.extract_strided_slice %202 {offsets = [0, 0], sizes = [16, 32], strides = [1, 1]} : vector<16x96xf32> to vector<16x32xf32>
    %204 = vector.extract_strided_slice %202 {offsets = [0, 32], sizes = [16, 32], strides = [1, 1]} : vector<16x96xf32> to vector<16x32xf32>
    %205 = vector.extract_strided_slice %202 {offsets = [0, 64], sizes = [16, 32], strides = [1, 1]} : vector<16x96xf32> to vector<16x32xf32>
    %206 = vector.extract_strided_slice %194 {offsets = [0, 96], sizes = [16, 32], strides = [1, 1]} : vector<16x128xf32> to vector<16x32xf32>
    %207 = math.tanh %206 : vector<16x32xf32>
    %208 = arith.mulf %204, %178 : vector<16x32xf32>
    %209 = arith.mulf %203, %207 : vector<16x32xf32>
    %210 = arith.addf %208, %209 : vector<16x32xf32>
    %211 = math.tanh %210 : vector<16x32xf32>
    %212 = arith.mulf %205, %211 : vector<16x32xf32>
    %213 = arith.index_cast %c4_i32 : i32 to index
    %c0_75 = arith.constant 0 : index
    %c0_76 = arith.constant 0 : index
    %214 = vector.load %arg3[%213, %c0_75, %c0_76] : memref<8x16x1xf32, #tpu.memory_space<vmem>>, vector<1x16x1xf32>
    %215 = vector.shape_cast %214 : vector<1x16x1xf32> to vector<16x1xf32>
    %cst_77 = arith.constant 0.000000e+00 : f32
    %216 = vector.broadcast %cst_77 : f32 to vector<16x1xf32>
    %217 = arith.cmpf ogt, %215, %216 : vector<16x1xf32>
    %218 = vector.shape_cast %217 : vector<16x1xi1> to vector<16x1xi1>
    %219 = vector.broadcast %218 : vector<16x1xi1> to vector<16x32xi1>
    %220 = arith.select %219, %212, %177 : vector<16x32xi1>, vector<16x32xf32>
    %221 = arith.select %219, %210, %178 : vector<16x32xi1>, vector<16x32xf32>
    %cst_78 = arith.constant 0.000000e+00 : f32
    %222 = vector.broadcast %cst_78 : f32 to vector<16x32xf32>
    %223 = arith.select %219, %212, %222 : vector<16x32xi1>, vector<16x32xf32>
    %224 = arith.truncf %223 : vector<16x32xf32> to vector<16x32xbf16>
    %cst_79 = arith.constant 0.000000e+00 : bf16
    %225 = vector.broadcast %cst_79 : bf16 to vector<16x96xbf16>
    %226 = tpu.concatenate %224, %225 in 1 : vector<16x32xbf16>, vector<16x96xbf16> -> vector<16x128xbf16>
    %227 = arith.index_cast %c4_i32 : i32 to index
    %c0_80 = arith.constant 0 : index
    %c0_81 = arith.constant 0 : index
    %228 = vector.load %arg7[%227, %c0_80, %c0_81] : memref<8x16x128xbf16, #tpu.memory_space<vmem>>, vector<1x16x128xbf16>
    %229 = vector.shape_cast %228 : vector<1x16x128xbf16> to vector<16x128xbf16>
    %230 = vector.shape_cast %226 : vector<16x128xbf16> to vector<1x16x128xbf16>
    tpu.vector_store %arg7[%227, %c0_80, %c0_81], %230 {strides = array<i32>} : memref<8x16x128xbf16, #tpu.memory_space<vmem>>, vector<1x16x128xbf16>,
    %c5_i32 = arith.constant 5 : i32
    %231 = arith.index_cast %c5_i32 : i32 to index
    %c0_82 = arith.constant 0 : index
    %c0_83 = arith.constant 0 : index
    %232 = vector.load %arg10[%231, %c0_82, %c0_83] : memref<8x16x128xbf16, #tpu.memory_space<vmem>>, vector<1x16x128xbf16>
    %233 = vector.shape_cast %232 : vector<1x16x128xbf16> to vector<16x128xbf16>
    %234 = arith.extf %233 : vector<16x128xbf16> to vector<16x128xf32>
    %235 = arith.truncf %220 : vector<16x32xf32> to vector<16x32xbf16>
    %cst_84 = arith.constant dense<0.000000e+00> : vector<16x128xf32>
    %236 = tpu.matmul %235, %13, %cst_84 {dimension_numbers = #tpu.dot_dimension_numbers<[1], [0], [0], [1], [0, 0, 1, 1], [], []>} : vector<16x32xbf16>, vector<32x128xbf16>, vector<16x128xf32> -> vector<16x128xf32>
    %237 = arith.addf %234, %236 : vector<16x128xf32>
    %238 = vector.extract_strided_slice %237 {offsets = [0, 0], sizes = [16, 96], strides = [1, 1]} : vector<16x128xf32> to vector<16x96xf32>
    %cst_85 = arith.constant 5.000000e-01 : f32
    %239 = vector.broadcast %cst_85 : f32 to vector<16x96xf32>
    %240 = arith.mulf %238, %239 : vector<16x96xf32>
    %241 = math.tanh %240 : vector<16x96xf32>
    %cst_86 = arith.constant 5.000000e-01 : f32
    %242 = vector.broadcast %cst_86 : f32 to vector<16x96xf32>
    %243 = arith.mulf %241, %242 : vector<16x96xf32>
    %cst_87 = arith.constant 5.000000e-01 : f32
    %244 = vector.broadcast %cst_87 : f32 to vector<16x96xf32>
    %245 = arith.addf %243, %244 : vector<16x96xf32>
    %246 = vector.extract_strided_slice %245 {offsets = [0, 0], sizes = [16, 32], strides = [1, 1]} : vector<16x96xf32> to vector<16x32xf32>
    %247 = vector.extract_strided_slice %245 {offsets = [0, 32], sizes = [16, 32], strides = [1, 1]} : vector<16x96xf32> to vector<16x32xf32>
    %248 = vector.extract_strided_slice %245 {offsets = [0, 64], sizes = [16, 32], strides = [1, 1]} : vector<16x96xf32> to vector<16x32xf32>
    %249 = vector.extract_strided_slice %237 {offsets = [0, 96], sizes = [16, 32], strides = [1, 1]} : vector<16x128xf32> to vector<16x32xf32>
    %250 = math.tanh %249 : vector<16x32xf32>
    %251 = arith.mulf %247, %221 : vector<16x32xf32>
    %252 = arith.mulf %246, %250 : vector<16x32xf32>
    %253 = arith.addf %251, %252 : vector<16x32xf32>
    %254 = math.tanh %253 : vector<16x32xf32>
    %255 = arith.mulf %248, %254 : vector<16x32xf32>
    %256 = arith.index_cast %c5_i32 : i32 to index
    %c0_88 = arith.constant 0 : index
    %c0_89 = arith.constant 0 : index
    %257 = vector.load %arg3[%256, %c0_88, %c0_89] : memref<8x16x1xf32, #tpu.memory_space<vmem>>, vector<1x16x1xf32>
    %258 = vector.shape_cast %257 : vector<1x16x1xf32> to vector<16x1xf32>
    %cst_90 = arith.constant 0.000000e+00 : f32
    %259 = vector.broadcast %cst_90 : f32 to vector<16x1xf32>
    %260 = arith.cmpf ogt, %258, %259 : vector<16x1xf32>
    %261 = vector.shape_cast %260 : vector<16x1xi1> to vector<16x1xi1>
    %262 = vector.broadcast %261 : vector<16x1xi1> to vector<16x32xi1>
    %263 = arith.select %262, %255, %220 : vector<16x32xi1>, vector<16x32xf32>
    %264 = arith.select %262, %253, %221 : vector<16x32xi1>, vector<16x32xf32>
    %cst_91 = arith.constant 0.000000e+00 : f32
    %265 = vector.broadcast %cst_91 : f32 to vector<16x32xf32>
    %266 = arith.select %262, %255, %265 : vector<16x32xi1>, vector<16x32xf32>
    %267 = arith.truncf %266 : vector<16x32xf32> to vector<16x32xbf16>
    %cst_92 = arith.constant 0.000000e+00 : bf16
    %268 = vector.broadcast %cst_92 : bf16 to vector<16x96xbf16>
    %269 = tpu.concatenate %267, %268 in 1 : vector<16x32xbf16>, vector<16x96xbf16> -> vector<16x128xbf16>
    %270 = arith.index_cast %c5_i32 : i32 to index
    %c0_93 = arith.constant 0 : index
    %c0_94 = arith.constant 0 : index
    %271 = vector.load %arg7[%270, %c0_93, %c0_94] : memref<8x16x128xbf16, #tpu.memory_space<vmem>>, vector<1x16x128xbf16>
    %272 = vector.shape_cast %271 : vector<1x16x128xbf16> to vector<16x128xbf16>
    %273 = vector.shape_cast %269 : vector<16x128xbf16> to vector<1x16x128xbf16>
    tpu.vector_store %arg7[%270, %c0_93, %c0_94], %273 {strides = array<i32>} : memref<8x16x128xbf16, #tpu.memory_space<vmem>>, vector<1x16x128xbf16>,
    %c6_i32 = arith.constant 6 : i32
    %274 = arith.index_cast %c6_i32 : i32 to index
    %c0_95 = arith.constant 0 : index
    %c0_96 = arith.constant 0 : index
    %275 = vector.load %arg10[%274, %c0_95, %c0_96] : memref<8x16x128xbf16, #tpu.memory_space<vmem>>, vector<1x16x128xbf16>
    %276 = vector.shape_cast %275 : vector<1x16x128xbf16> to vector<16x128xbf16>
    %277 = arith.extf %276 : vector<16x128xbf16> to vector<16x128xf32>
    %278 = arith.truncf %263 : vector<16x32xf32> to vector<16x32xbf16>
    %cst_97 = arith.constant dense<0.000000e+00> : vector<16x128xf32>
    %279 = tpu.matmul %278, %13, %cst_97 {dimension_numbers = #tpu.dot_dimension_numbers<[1], [0], [0], [1], [0, 0, 1, 1], [], []>} : vector<16x32xbf16>, vector<32x128xbf16>, vector<16x128xf32> -> vector<16x128xf32>
    %280 = arith.addf %277, %279 : vector<16x128xf32>
    %281 = vector.extract_strided_slice %280 {offsets = [0, 0], sizes = [16, 96], strides = [1, 1]} : vector<16x128xf32> to vector<16x96xf32>
    %cst_98 = arith.constant 5.000000e-01 : f32
    %282 = vector.broadcast %cst_98 : f32 to vector<16x96xf32>
    %283 = arith.mulf %281, %282 : vector<16x96xf32>
    %284 = math.tanh %283 : vector<16x96xf32>
    %cst_99 = arith.constant 5.000000e-01 : f32
    %285 = vector.broadcast %cst_99 : f32 to vector<16x96xf32>
    %286 = arith.mulf %284, %285 : vector<16x96xf32>
    %cst_100 = arith.constant 5.000000e-01 : f32
    %287 = vector.broadcast %cst_100 : f32 to vector<16x96xf32>
    %288 = arith.addf %286, %287 : vector<16x96xf32>
    %289 = vector.extract_strided_slice %288 {offsets = [0, 0], sizes = [16, 32], strides = [1, 1]} : vector<16x96xf32> to vector<16x32xf32>
    %290 = vector.extract_strided_slice %288 {offsets = [0, 32], sizes = [16, 32], strides = [1, 1]} : vector<16x96xf32> to vector<16x32xf32>
    %291 = vector.extract_strided_slice %288 {offsets = [0, 64], sizes = [16, 32], strides = [1, 1]} : vector<16x96xf32> to vector<16x32xf32>
    %292 = vector.extract_strided_slice %280 {offsets = [0, 96], sizes = [16, 32], strides = [1, 1]} : vector<16x128xf32> to vector<16x32xf32>
    %293 = math.tanh %292 : vector<16x32xf32>
    %294 = arith.mulf %290, %264 : vector<16x32xf32>
    %295 = arith.mulf %289, %293 : vector<16x32xf32>
    %296 = arith.addf %294, %295 : vector<16x32xf32>
    %297 = math.tanh %296 : vector<16x32xf32>
    %298 = arith.mulf %291, %297 : vector<16x32xf32>
    %299 = arith.index_cast %c6_i32 : i32 to index
    %c0_101 = arith.constant 0 : index
    %c0_102 = arith.constant 0 : index
    %300 = vector.load %arg3[%299, %c0_101, %c0_102] : memref<8x16x1xf32, #tpu.memory_space<vmem>>, vector<1x16x1xf32>
    %301 = vector.shape_cast %300 : vector<1x16x1xf32> to vector<16x1xf32>
    %cst_103 = arith.constant 0.000000e+00 : f32
    %302 = vector.broadcast %cst_103 : f32 to vector<16x1xf32>
    %303 = arith.cmpf ogt, %301, %302 : vector<16x1xf32>
    %304 = vector.shape_cast %303 : vector<16x1xi1> to vector<16x1xi1>
    %305 = vector.broadcast %304 : vector<16x1xi1> to vector<16x32xi1>
    %306 = arith.select %305, %298, %263 : vector<16x32xi1>, vector<16x32xf32>
    %307 = arith.select %305, %296, %264 : vector<16x32xi1>, vector<16x32xf32>
    %cst_104 = arith.constant 0.000000e+00 : f32
    %308 = vector.broadcast %cst_104 : f32 to vector<16x32xf32>
    %309 = arith.select %305, %298, %308 : vector<16x32xi1>, vector<16x32xf32>
    %310 = arith.truncf %309 : vector<16x32xf32> to vector<16x32xbf16>
    %cst_105 = arith.constant 0.000000e+00 : bf16
    %311 = vector.broadcast %cst_105 : bf16 to vector<16x96xbf16>
    %312 = tpu.concatenate %310, %311 in 1 : vector<16x32xbf16>, vector<16x96xbf16> -> vector<16x128xbf16>
    %313 = arith.index_cast %c6_i32 : i32 to index
    %c0_106 = arith.constant 0 : index
    %c0_107 = arith.constant 0 : index
    %314 = vector.load %arg7[%313, %c0_106, %c0_107] : memref<8x16x128xbf16, #tpu.memory_space<vmem>>, vector<1x16x128xbf16>
    %315 = vector.shape_cast %314 : vector<1x16x128xbf16> to vector<16x128xbf16>
    %316 = vector.shape_cast %312 : vector<16x128xbf16> to vector<1x16x128xbf16>
    tpu.vector_store %arg7[%313, %c0_106, %c0_107], %316 {strides = array<i32>} : memref<8x16x128xbf16, #tpu.memory_space<vmem>>, vector<1x16x128xbf16>,
    %c7_i32 = arith.constant 7 : i32
    %317 = arith.index_cast %c7_i32 : i32 to index
    %c0_108 = arith.constant 0 : index
    %c0_109 = arith.constant 0 : index
    %318 = vector.load %arg10[%317, %c0_108, %c0_109] : memref<8x16x128xbf16, #tpu.memory_space<vmem>>, vector<1x16x128xbf16>
    %319 = vector.shape_cast %318 : vector<1x16x128xbf16> to vector<16x128xbf16>
    %320 = arith.extf %319 : vector<16x128xbf16> to vector<16x128xf32>
    %321 = arith.truncf %306 : vector<16x32xf32> to vector<16x32xbf16>
    %cst_110 = arith.constant dense<0.000000e+00> : vector<16x128xf32>
    %322 = tpu.matmul %321, %13, %cst_110 {dimension_numbers = #tpu.dot_dimension_numbers<[1], [0], [0], [1], [0, 0, 1, 1], [], []>} : vector<16x32xbf16>, vector<32x128xbf16>, vector<16x128xf32> -> vector<16x128xf32>
    %323 = arith.addf %320, %322 : vector<16x128xf32>
    %324 = vector.extract_strided_slice %323 {offsets = [0, 0], sizes = [16, 96], strides = [1, 1]} : vector<16x128xf32> to vector<16x96xf32>
    %cst_111 = arith.constant 5.000000e-01 : f32
    %325 = vector.broadcast %cst_111 : f32 to vector<16x96xf32>
    %326 = arith.mulf %324, %325 : vector<16x96xf32>
    %327 = math.tanh %326 : vector<16x96xf32>
    %cst_112 = arith.constant 5.000000e-01 : f32
    %328 = vector.broadcast %cst_112 : f32 to vector<16x96xf32>
    %329 = arith.mulf %327, %328 : vector<16x96xf32>
    %cst_113 = arith.constant 5.000000e-01 : f32
    %330 = vector.broadcast %cst_113 : f32 to vector<16x96xf32>
    %331 = arith.addf %329, %330 : vector<16x96xf32>
    %332 = vector.extract_strided_slice %331 {offsets = [0, 0], sizes = [16, 32], strides = [1, 1]} : vector<16x96xf32> to vector<16x32xf32>
    %333 = vector.extract_strided_slice %331 {offsets = [0, 32], sizes = [16, 32], strides = [1, 1]} : vector<16x96xf32> to vector<16x32xf32>
    %334 = vector.extract_strided_slice %331 {offsets = [0, 64], sizes = [16, 32], strides = [1, 1]} : vector<16x96xf32> to vector<16x32xf32>
    %335 = vector.extract_strided_slice %323 {offsets = [0, 96], sizes = [16, 32], strides = [1, 1]} : vector<16x128xf32> to vector<16x32xf32>
    %336 = math.tanh %335 : vector<16x32xf32>
    %337 = arith.mulf %333, %307 : vector<16x32xf32>
    %338 = arith.mulf %332, %336 : vector<16x32xf32>
    %339 = arith.addf %337, %338 : vector<16x32xf32>
    %340 = math.tanh %339 : vector<16x32xf32>
    %341 = arith.mulf %334, %340 : vector<16x32xf32>
    %342 = arith.index_cast %c7_i32 : i32 to index
    %c0_114 = arith.constant 0 : index
    %c0_115 = arith.constant 0 : index
    %343 = vector.load %arg3[%342, %c0_114, %c0_115] : memref<8x16x1xf32, #tpu.memory_space<vmem>>, vector<1x16x1xf32>
    %344 = vector.shape_cast %343 : vector<1x16x1xf32> to vector<16x1xf32>
    %cst_116 = arith.constant 0.000000e+00 : f32
    %345 = vector.broadcast %cst_116 : f32 to vector<16x1xf32>
    %346 = arith.cmpf ogt, %344, %345 : vector<16x1xf32>
    %347 = vector.shape_cast %346 : vector<16x1xi1> to vector<16x1xi1>
    %348 = vector.broadcast %347 : vector<16x1xi1> to vector<16x32xi1>
    %349 = arith.select %348, %341, %306 : vector<16x32xi1>, vector<16x32xf32>
    %350 = arith.select %348, %339, %307 : vector<16x32xi1>, vector<16x32xf32>
    %cst_117 = arith.constant 0.000000e+00 : f32
    %351 = vector.broadcast %cst_117 : f32 to vector<16x32xf32>
    %352 = arith.select %348, %341, %351 : vector<16x32xi1>, vector<16x32xf32>
    %353 = arith.truncf %352 : vector<16x32xf32> to vector<16x32xbf16>
    %cst_118 = arith.constant 0.000000e+00 : bf16
    %354 = vector.broadcast %cst_118 : bf16 to vector<16x96xbf16>
    %355 = tpu.concatenate %353, %354 in 1 : vector<16x32xbf16>, vector<16x96xbf16> -> vector<16x128xbf16>
    %356 = arith.index_cast %c7_i32 : i32 to index
    %c0_119 = arith.constant 0 : index
    %c0_120 = arith.constant 0 : index
    %357 = vector.load %arg7[%356, %c0_119, %c0_120] : memref<8x16x128xbf16, #tpu.memory_space<vmem>>, vector<1x16x128xbf16>
    %358 = vector.shape_cast %357 : vector<1x16x128xbf16> to vector<16x128xbf16>
    %359 = vector.shape_cast %355 : vector<16x128xbf16> to vector<1x16x128xbf16>
    tpu.vector_store %arg7[%356, %c0_119, %c0_120], %359 {strides = array<i32>} : memref<8x16x128xbf16, #tpu.memory_space<vmem>>, vector<1x16x128xbf16>,
    %c8_i32 = arith.constant 8 : i32
    %c0_121 = arith.constant 0 : index
    %c0_122 = arith.constant 0 : index
    %360 = vector.load %arg8[%c0_121, %c0_122] : memref<16x32xf32, #tpu.memory_space<vmem>>, vector<16x32xf32>
    tpu.vector_store %arg8[%c0_121, %c0_122], %349 {strides = array<i32>} : memref<16x32xf32, #tpu.memory_space<vmem>>, vector<16x32xf32>,
    %c0_123 = arith.constant 0 : index
    %c0_124 = arith.constant 0 : index
    %361 = vector.load %arg9[%c0_123, %c0_124] : memref<16x32xf32, #tpu.memory_space<vmem>>, vector<16x32xf32>
    tpu.vector_store %arg9[%c0_123, %c0_124], %350 {strides = array<i32>} : memref<16x32xf32, #tpu.memory_space<vmem>>, vector<16x32xf32>,
    return
  }
  func.func @transform_0(%arg0: i32, %arg1: i32) -> (i32, i32, i32) {
    %c0_i32 = arith.constant 0 : i32
    %c0_i32_0 = arith.constant 0 : i32
    return %arg1, %arg0, %c0_i32 : i32, i32, i32
  }
  func.func @transform_1(%arg0: i32, %arg1: i32) -> (i32, i32, i32) {
    %c0_i32 = arith.constant 0 : i32
    %c0_i32_0 = arith.constant 0 : i32
    return %arg1, %arg0, %c0_i32 : i32, i32, i32
  }
  func.func @transform_2(%arg0: i32, %arg1: i32) -> (i32, i32) {
    %c0_i32 = arith.constant 0 : i32
    %c0_i32_0 = arith.constant 0 : i32
    %c0_i32_1 = arith.constant 0 : i32
    return %c0_i32, %c0_i32_0 : i32, i32
  }
  func.func @transform_3(%arg0: i32, %arg1: i32) -> (i32, i32) {
    %c0_i32 = arith.constant 0 : i32
    %c0_i32_0 = arith.constant 0 : i32
    %c0_i32_1 = arith.constant 0 : i32
    return %c0_i32, %c0_i32_0 : i32, i32
  }
  func.func @transform_4(%arg0: i32, %arg1: i32) -> (i32, i32) {
    %c0_i32 = arith.constant 0 : i32
    %c0_i32_0 = arith.constant 0 : i32
    %c0_i32_1 = arith.constant 0 : i32
    return %c0_i32, %c0_i32_0 : i32, i32
  }
  func.func @transform_5(%arg0: i32, %arg1: i32) -> (i32, i32, i32) {
    %c0_i32 = arith.constant 0 : i32
    %c0_i32_0 = arith.constant 0 : i32
    return %arg1, %arg0, %c0_i32 : i32, i32, i32
  }
  func.func @transform_6(%arg0: i32, %arg1: i32) -> (i32, i32) {
    %c0_i32 = arith.constant 0 : i32
    %c0_i32_0 = arith.constant 0 : i32
    return %arg0, %c0_i32 : i32, i32
  }
  func.func @transform_7(%arg0: i32, %arg1: i32) -> (i32, i32) {
    %c0_i32 = arith.constant 0 : i32
    %c0_i32_0 = arith.constant 0 : i32
    return %arg0, %c0_i32 : i32, i32
  }
}

</mosaic_0001>

<llo_original>
// kernel: tpu_custom_call.1
$region0: #{tpu_custom_call.1}
  #allocation0 [shape = 'u32[]', space=smem, size = 0x4, offset = 0x4, fixed_abs, tag = 'smem constant byte address 0x4 - core index']
  #allocation1 [shape = 'u32[144,128]{1,0:T(1,128)}', space=vmem, size = 0x12000, scoped, tag = 'internal scratch']
  #allocation2 [shape = 'bf16[8,16,128]{2,1,0:T(16,128)(2,1)}', space=vmem, size = 0x8000, scoped, tag = 'scratch operand']
  %s0 = inlined_call_operand.vmem [shape: bf16[8,16,16], index: 0, kind: input, shape index: {}]
  %s1 = inlined_call_operand.vmem [shape: f32[8,16,1], index: 1, kind: input, shape index: {}]
  %s2 = inlined_call_operand.vmem [shape: bf16[16,128], index: 2, kind: input, shape index: {}]
  %s3 = inlined_call_operand.vmem [shape: bf16[32,128], index: 3, kind: input, shape index: {}]
  %s4 = inlined_call_operand.vmem [shape: f32[1,128], index: 4, kind: input, shape index: {}]
  %s5 = inlined_call_operand.hbm [shape: bf16[8,16,128], index: 5, kind: output, shape index: {0}]
  %s6 = inlined_call_operand.hbm [shape: f32[16,32], index: 6, kind: output, shape index: {1}]
  %s7 = inlined_call_operand.hbm [shape: f32[16,32], index: 7, kind: output, shape index: {2}]
  %8 = xla_tuple %s5, %s6, %s7
  %s9 = sld [smem:[#allocation0]]
  $region50: #{tpu_custom_call.1} parent=0
    _
  %s11 = ssub.s32 1, %s9
  %s12 = scalar_select 0, %s11, %s9
  $region1: #{tpu_custom_call.1} parent=0
    #allocation3 [shape = 'u8[32768]{0}', space=vmem, size = 0x8000, scoped, tag = 'output window, operand 0, single buffered']
    #allocation4 [shape = 's32[1]{0}', space=sflag, size = 0x4, scoped, tag = 'scoped memory for tpu_custom_call.1']
    #allocation5 [shape = 'u8[8192]{0}', space=vmem, size = 0x2000, scoped, tag = 'output window, operand 1, single buffered']
    #allocation6 [shape = 's32[1]{0}', space=sflag, size = 0x4, scoped, tag = 'scoped memory for tpu_custom_call.1']
    #allocation7 [shape = 'u8[8192]{0}', space=vmem, size = 0x2000, scoped, tag = 'output window, operand 2, single buffered']
    %13 = vsyncpa [#allocation4], 0
    %14 = vsyncpa [#allocation6], 0
    // Predicated region
    $region2: #{tpu_custom_call.1} parent=1 // pred_check
      _
    $region3: #{tpu_custom_call.1} parent=1 // pred_check_branch
      %16 = sbr.rel (0) target = $region5
    $region4: #{tpu_custom_call.1} parent=1 // pred_region
      _
    $region5: #{tpu_custom_call.1} parent=1 // pred_fallthru
      _
    // Predicated region
    $region6: #{tpu_custom_call.1} parent=1 // pred_check
      _
    $region7: #{tpu_custom_call.1} parent=1 // pred_check_branch
      %18 = sbr.rel (0) target = $region9
    $region8: #{tpu_custom_call.1} parent=1 // pred_region
      _
    $region9: #{tpu_custom_call.1} parent=1 // pred_fallthru
      _
    // Predicated region
    $region10: #{tpu_custom_call.1} parent=1 // pred_check
      _
    $region11: #{tpu_custom_call.1} parent=1 // pred_check_branch
      %20 = sbr.rel (0) target = $region13
    $region12: #{tpu_custom_call.1} parent=1 // pred_region
      _
    $region13: #{tpu_custom_call.1} parent=1 // pred_fallthru
      _
    // Predicated region
    $region14: #{tpu_custom_call.1} parent=1 // pred_check
      _
    $region15: #{tpu_custom_call.1} parent=1 // pred_check_branch
      %22 = sbr.rel (0) target = $region17
    $region16: #{tpu_custom_call.1} parent=1 // pred_region
      _
    $region17: #{tpu_custom_call.1} parent=1 // pred_fallthru
      _
    // Predicated region
    $region18: #{tpu_custom_call.1} parent=1 // pred_check
      _
    $region19: #{tpu_custom_call.1} parent=1 // pred_check_branch
      %24 = sbr.rel (0) target = $region21
    $region20: #{tpu_custom_call.1} parent=1 // pred_region
      _
    $region21: #{tpu_custom_call.1} parent=1 // pred_fallthru
      _
    %p26 = scmp.eq.s32.totalorder 0, 0
    // Predicated region
    $region22: #{tpu_custom_call.1} parent=1 // pred_check
      %p27 = pneg %p26
    $region23: #{tpu_custom_call.1} parent=1 // pred_check_branch
      %29 = sbr.rel (%p27) target = $region25
    $region24: #{tpu_custom_call.1} parent=1 // pred_region
      %vm30 = vcmask 261120
      %31 = vst.msk [vmem:[#allocation5] sm:$0xff] %vm30, 0.0
      %32 = vst.msk [vmem:[#allocation5 + $0x8] sm:$0xff] %vm30, 0.0
      %33 = vst.msk [vmem:[#allocation7] sm:$0xff] %vm30, 0.0
      %34 = vst.msk [vmem:[#allocation7 + $0x8] sm:$0xff] %vm30, 0.0
    $region25: #{tpu_custom_call.1} parent=1 // pred_fallthru
      _
    %v35 = vld [vmem:[%s0] sm:$0xf]
    %v36 = vld [vmem:[%s0 + $0x4] sm:$0xf]
    %v37 = vld [vmem:[%s0 + $0x8] sm:$0xf]
    %v38 = vld [vmem:[%s0 + $0xc] sm:$0xf]
    %v39 = vld [vmem:[%s0 + $0x10] sm:$0xf]
    %v40 = vld [vmem:[%s0 + $0x14] sm:$0xf]
    %v41 = vld [vmem:[%s0 + $0x18] sm:$0xf]
    %v42 = vld [vmem:[%s0 + $0x1c] sm:$0xf]
    %v43 = vld [vmem:[%s0 + $0x20] sm:$0xf]
    %v44 = vld [vmem:[%s0 + $0x24] sm:$0xf]
    %v45 = vld [vmem:[%s0 + $0x28] sm:$0xf]
    %v46 = vld [vmem:[%s0 + $0x2c] sm:$0xf]
    %v47 = vld [vmem:[%s0 + $0x30] sm:$0xf]
    %v48 = vld [vmem:[%s0 + $0x34] sm:$0xf]
    %v49 = vld [vmem:[%s0 + $0x38] sm:$0xf]
    %v50 = vld [vmem:[%s0 + $0x3c] sm:$0xf]
    %v51 = vld [vmem:[%s2] sm:$0xf]
    %v52 = vld [vmem:[%s2 + $0x4] sm:$0xf]
    %v53 = vld [vmem:[%s4] sm:$0x1]
    %v55 = vlaneseq
    %v56 = vshrl.u32 %v55, 7
    %v57 = vsub.s32 0, %v56
    %v58 = vrot.slane %v53, %v57
    %v76 = vunpack.c.l.b16 %v35
    %v77 = vunpack.c.l.b16 %v36
    %v78 = vunpack.c.l.b16 %v37
    %v79 = vunpack.c.l.b16 %v38
    %v80 = vunpack.c.l.b16 %v39
    %v81 = vunpack.c.l.b16 %v40
    %v82 = vunpack.c.l.b16 %v41
    %v83 = vunpack.c.l.b16 %v42
    %v84 = vunpack.c.l.b16 %v43
    %v85 = vunpack.c.l.b16 %v44
    %v86 = vunpack.c.l.b16 %v45
    %v87 = vunpack.c.l.b16 %v46
    %v88 = vunpack.c.l.b16 %v47
    %v89 = vunpack.c.l.b16 %v48
    %v90 = vunpack.c.l.b16 %v49
    %v91 = vunpack.c.l.b16 %v50
    %v92 = vpack.c.b16 %v77, %v76
    %v93 = vpack.c.b16 %v79, %v78
    %v94 = vpack.c.b16 %v81, %v80
    %v95 = vpack.c.b16 %v83, %v82
    %v96 = vpack.c.b16 %v85, %v84
    %v97 = vpack.c.b16 %v87, %v86
    %v98 = vpack.c.b16 %v89, %v88
    %v99 = vpack.c.b16 %v91, %v90
    %v102 = vunpack.c.l.b16 %v51
    %v103 = vunpack.c.l.b16 %v52
    %v104 = vpack.c.b16 %v103, %v102
    %vm106 = vcmask 130048
    %v108 = vsel %vm106, %v92, 0
    %v111 = vsel %vm106, %v93, 0
    %v114 = vsel %vm106, %v94, 0
    %v117 = vsel %vm106, %v95, 0
    %v120 = vsel %vm106, %v96, 0
    %v123 = vsel %vm106, %v97, 0
    %v126 = vsel %vm106, %v98, 0
    %v129 = vsel %vm106, %v99, 0
    %131 = vmatprep.subr.bf16.mxu0 0
    %132 = vmatpush1.bf16.msra.mxu0 %v104
    %133 = vmatprep.subr.bf16.mxu0 0
    %134 = vmatpush1.bf16.msra.mxu0 0
    %135 = vmatprep.subr.bf16.mxu0 0
    %136 = vmatpush1.bf16.msra.mxu0 0
    %137 = vmatprep.subr.bf16.mxu0 0
    %138 = vmatpush1.bf16.msra.mxu0 0
    %139 = vmatprep.subr.bf16.mxu0 0
    %140 = vmatpush1.bf16.msra.mxu0 0
    %141 = vmatprep.subr.bf16.mxu0 0
    %142 = vmatpush1.bf16.msra.mxu0 0
    %143 = vmatprep.subr.bf16.mxu0 0
    %144 = vmatpush1.bf16.msra.mxu0 0
    %145 = vmatprep.subr.bf16.mxu0 0
    %146 = vmatpush1.bf16.msra.mxu0 0
    %147 = vmatprep.subr.bf16.mxu0 0
    %148 = vmatpush1.bf16.msra.mxu0 0
    %149 = vmatprep.subr.bf16.mxu0 0
    %150 = vmatpush1.bf16.msra.mxu0 0
    %151 = vmatprep.subr.bf16.mxu0 0
    %152 = vmatpush1.bf16.msra.mxu0 0
    %153 = vmatprep.subr.bf16.mxu0 0
    %154 = vmatpush1.bf16.msra.mxu0 0
    %155 = vmatprep.subr.bf16.mxu0 0
    %156 = vmatpush1.bf16.msra.mxu0 0
    %157 = vmatprep.subr.bf16.mxu0 0
    %158 = vmatpush1.bf16.msra.mxu0 0
    %159 = vmatprep.subr.bf16.mxu0 0
    %160 = vmatpush1.bf16.msra.mxu0 0
    %161 = vmatprep.subr.bf16.mxu0 0
    %162 = vmatpush1.bf16.msra.mxu0 0
    %163 = vmatprep.mubr.bf16.mxu0 0
    %164 = vmatmul.mubr.bf16.gmra.mrb[0].mxu0 %v108
    %v165 = vpop.f32.mrb[0].mxu0
    %v166 = vadd.f32 %v58, %v165
    %v167 = vpop.f32.mrb[0].mxu0
    %v168 = vpop.f32.mrb[0].mxu0
    %v169 = vadd.f32 %v58, %v168
    %v170 = vpop.f32.mrb[0].mxu0
    %171 = vmatprep.mubr.bf16.mxu0 0
    %172 = vmatmul.mubr.bf16.gmra.mrb[0].mxu0 %v111
    %v173 = vpop.f32.mrb[0].mxu0
    %v174 = vadd.f32 %v58, %v173
    %v175 = vpop.f32.mrb[0].mxu0
    %v176 = vpop.f32.mrb[0].mxu0
    %v177 = vadd.f32 %v58, %v176
    %v178 = vpop.f32.mrb[0].mxu0
    %179 = vmatprep.mubr.bf16.mxu0 0
    %180 = vmatmul.mubr.bf16.gmra.mrb[0].mxu0 %v114
    %v181 = vpop.f32.mrb[0].mxu0
    %v182 = vadd.f32 %v58, %v181
    %v183 = vpop.f32.mrb[0].mxu0
    %v184 = vpop.f32.mrb[0].mxu0
    %v185 = vadd.f32 %v58, %v184
    %v186 = vpop.f32.mrb[0].mxu0
    %187 = vmatprep.mubr.bf16.mxu0 0
    %188 = vmatmul.mubr.bf16.gmra.mrb[0].mxu0 %v117
    %v189 = vpop.f32.mrb[0].mxu0
    %v190 = vadd.f32 %v58, %v189
    %v191 = vpop.f32.mrb[0].mxu0
    %v192 = vpop.f32.mrb[0].mxu0
    %v193 = vadd.f32 %v58, %v192
    %v194 = vpop.f32.mrb[0].mxu0
    %195 = vmatprep.mubr.bf16.mxu0 0
    %196 = vmatmul.mubr.bf16.gmra.mrb[0].mxu0 %v120
    %v197 = vpop.f32.mrb[0].mxu0
    %v198 = vadd.f32 %v58, %v197
    %v199 = vpop.f32.mrb[0].mxu0
    %v200 = vpop.f32.mrb[0].mxu0
    %v201 = vadd.f32 %v58, %v200
    %v202 = vpop.f32.mrb[0].mxu0
    %203 = vmatprep.mubr.bf16.mxu0 0
    %204 = vmatmul.mubr.bf16.gmra.mrb[0].mxu0 %v123
    %v205 = vpop.f32.mrb[0].mxu0
    %v206 = vadd.f32 %v58, %v205
    %v207 = vpop.f32.mrb[0].mxu0
    %v208 = vpop.f32.mrb[0].mxu0
    %v209 = vadd.f32 %v58, %v208
    %v210 = vpop.f32.mrb[0].mxu0
    %211 = vmatprep.mubr.bf16.mxu0 0
    %212 = vmatmul.mubr.bf16.gmra.mrb[0].mxu0 %v126
    %v213 = vpop.f32.mrb[0].mxu0
    %v214 = vadd.f32 %v58, %v213
    %v215 = vpop.f32.mrb[0].mxu0
    %v216 = vpop.f32.mrb[0].mxu0
    %v217 = vadd.f32 %v58, %v216
    %v218 = vpop.f32.mrb[0].mxu0
    %219 = vmatprep.mubr.bf16.mxu0 0
    %220 = vmatmul.mubr.bf16.gmra.mrb[0].mxu0 %v129
    %v221 = vpop.f32.mrb[0].mxu0
    %v222 = vadd.f32 %v58, %v221
    %v223 = vpop.f32.mrb[0].mxu0
    %v224 = vpop.f32.mrb[0].mxu0
    %v225 = vadd.f32 %v58, %v224
    %v226 = vpop.f32.mrb[0].mxu0
    %227 = vdwg.mxu0
    %v228 = vpack.c.bf16 %v169, %v166
    %v229 = vpack.c.bf16 %v177, %v174
    %v230 = vpack.c.bf16 %v185, %v182
    %v231 = vpack.c.bf16 %v193, %v190
    %v232 = vpack.c.bf16 %v201, %v198
    %v233 = vpack.c.bf16 %v209, %v206
    %v234 = vpack.c.bf16 %v217, %v214
    %v235 = vpack.c.bf16 %v225, %v222
    %236 = vst [vmem:[#allocation2] sm:$0xff] %v228
    %237 = vst [vmem:[#allocation2 + $0x8] sm:$0xff] %v229
    %238 = vst [vmem:[#allocation2 + $0x10] sm:$0xff] %v230
    %239 = vst [vmem:[#allocation2 + $0x18] sm:$0xff] %v231
    %240 = vst [vmem:[#allocation2 + $0x20] sm:$0xff] %v232
    %241 = vst [vmem:[#allocation2 + $0x28] sm:$0xff] %v233
    %242 = vst [vmem:[#allocation2 + $0x30] sm:$0xff] %v234
    %243 = vst [vmem:[#allocation2 + $0x38] sm:$0xff] %v235
    %v244 = vld [vmem:[%s3] sm:$0xf]
    %v245 = vld [vmem:[%s3 + $0x4] sm:$0xf]
    %v246 = vld [vmem:[%s3 + $0x8] sm:$0xf]
    %v247 = vld [vmem:[%s3 + $0xc] sm:$0xf]
    %v248 = vld [vmem:[#allocation5] sm:$0xff]
    %v249 = vld [vmem:[#allocation5 + $0x8] sm:$0xff]
    %v250 = vld [vmem:[#allocation7] sm:$0xff]
    %v251 = vld [vmem:[#allocation7 + $0x8] sm:$0xff]
    %v252 = vld [vmem:[#allocation2] sm:$0xff]
    %v253 = vunpack.c.l.bf16 %v252
    %v254 = vunpack.c.h.bf16 %v252
    %v255 = vpack.c.bf16 %v249, %v248
    %v260 = vunpack.c.l.b16 %v244
    %v261 = vunpack.c.l.b16 %v245
    %v262 = vunpack.c.l.b16 %v246
    %v263 = vunpack.c.l.b16 %v247
    %v264 = vpack.c.b16 %v261, %v260
    %v265 = vpack.c.b16 %v263, %v262
    %vm268 = vcmask 261120
    %v270 = vsel %vm268, %v255, 0
    %272 = vmatprep.subr.bf16.mxu0 0
    %273 = vmatpush1.bf16.msra.mxu0 %v264
    %274 = vmatprep.subr.bf16.mxu0 0
    %275 = vmatpush1.bf16.msra.mxu0 %v265
    %276 = vmatprep.subr.bf16.mxu0 0
    %277 = vmatpush1.bf16.msra.mxu0 0
    %278 = vmatprep.subr.bf16.mxu0 0
    %279 = vmatpush1.bf16.msra.mxu0 0
    %280 = vmatprep.subr.bf16.mxu0 0
    %281 = vmatpush1.bf16.msra.mxu0 0
    %282 = vmatprep.subr.bf16.mxu0 0
    %283 = vmatpush1.bf16.msra.mxu0 0
    %284 = vmatprep.subr.bf16.mxu0 0
    %285 = vmatpush1.bf16.msra.mxu0 0
    %286 = vmatprep.subr.bf16.mxu0 0
    %287 = vmatpush1.bf16.msra.mxu0 0
    %288 = vmatprep.subr.bf16.mxu0 0
    %289 = vmatpush1.bf16.msra.mxu0 0
    %290 = vmatprep.subr.bf16.mxu0 0
    %291 = vmatpush1.bf16.msra.mxu0 0
    %292 = vmatprep.subr.bf16.mxu0 0
    %293 = vmatpush1.bf16.msra.mxu0 0
    %294 = vmatprep.subr.bf16.mxu0 0
    %295 = vmatpush1.bf16.msra.mxu0 0
    %296 = vmatprep.subr.bf16.mxu0 0
    %297 = vmatpush1.bf16.msra.mxu0 0
    %298 = vmatprep.subr.bf16.mxu0 0
    %299 = vmatpush1.bf16.msra.mxu0 0
    %300 = vmatprep.subr.bf16.mxu0 0
    %301 = vmatpush1.bf16.msra.mxu0 0
    %302 = vmatprep.subr.bf16.mxu0 0
    %303 = vmatpush1.bf16.msra.mxu0 0
    %304 = vmatprep.mubr.bf16.mxu0 0
    %305 = vmatmul.mubr.bf16.gmra.mrb[0].mxu0 %v270
    %v306 = vpop.f32.mrb[0].mxu0
    %v307 = vadd.f32 0.0, %v306
    %v308 = vpop.f32.mrb[0].mxu0
    %v309 = vpop.f32.mrb[0].mxu0
    %v310 = vadd.f32 0.0, %v309
    %v311 = vpop.f32.mrb[0].mxu0
    %312 = vdwg.mxu0
    %v313 = vadd.f32 %v253, %v307
    %v314 = vadd.f32 %v254, %v310
    %v315 = vmul.f32 %v313, 0.5
    %v316 = vmul.f32 %v314, 0.5
    %v317 = vtanh.pop %v315
    %v318 = vtanh.pop %v316
    %v319 = vmul.f32 %v317, 0.5
    %v320 = vmul.f32 %v318, 0.5
    %v321 = vadd.f32 %v319, 0.5
    %v322 = vadd.f32 %v320, 0.5
    %v323 = vtanh.pop %v313
    %v324 = vtanh.pop %v314
    %327 = vrot.lane.b32.xlu0 %v250, 32
    %v328 = vpop.permute.xlu0 %327
    %329 = vrot.lane.b32.xlu0 %v251, 32
    %v330 = vpop.permute.xlu0 %329
    %v333 = vmul.f32 %v321, %v328
    %v334 = vmul.f32 %v322, %v330
    %337 = vrot.lane.b32.xlu0 %v323, 32
    %v338 = vpop.permute.xlu0 %337
    %339 = vrot.lane.b32.xlu0 %v324, 32
    %v340 = vpop.permute.xlu0 %339
    %v343 = vmul.f32 %v321, %v338
    %v344 = vmul.f32 %v322, %v340
    %347 = vrot.lane.b32.xlu0 %v343, 32
    %v348 = vpop.permute.xlu0 %347
    %349 = vrot.lane.b32.xlu0 %v344, 32
    %v350 = vpop.permute.xlu0 %349
    %v353 = vadd.f32 %v333, %v348
    %v354 = vadd.f32 %v334, %v350
    %v355 = vtanh.pop %v353
    %v356 = vtanh.pop %v354
    %359 = vrot.lane.b32.xlu0 %v355, 32
    %v360 = vpop.permute.xlu0 %359
    %361 = vrot.lane.b32.xlu0 %v356, 32
    %v362 = vpop.permute.xlu0 %361
    %v365 = vmul.f32 %v321, %v360
    %v366 = vmul.f32 %v322, %v362
    %v367 = vld [vmem:[%s1] sm:$0xff]
    %v368 = vld [vmem:[%s1 + $0x8] sm:$0xff]
    %vm369 = vcmp.gt.f32.partialorder %v367, 0.0
    %vm370 = vcmp.gt.f32.partialorder %v368, 0.0
    %v371 = vsel %vm369, 1, 0
    %v372 = vsel %vm370, 1, 0
    %373 = vset.pattern.permute.xlu0 0
    %374 = vperm.xlu0 %373, %v371
    %v375 = vpop.permute.xlu0 %374
    %376 = vset.pattern.permute.xlu0 0
    %377 = vperm.xlu0 %376, %v372
    %v378 = vpop.permute.xlu0 %377
    %vm379 = vcmp.eq.s32.totalorder %v375, 1
    %vm380 = vcmp.eq.s32.totalorder %v378, 1
    %383 = vrot.lane.b32.xlu0 %v248, 64
    %v384 = vpop.permute.xlu0 %383
    %385 = vrot.lane.b32.xlu0 %v249, 64
    %v386 = vpop.permute.xlu0 %385
    %v389 = vsel %vm379, %v365, %v384
    %v390 = vsel %vm380, %v366, %v386
    %v391 = vsel %vm379, %v353, %v328
    %v392 = vsel %vm380, %v354, %v330
    %v393 = vsel %vm379, %v365, 0.0
    %v394 = vsel %vm380, %v366, 0.0
    %v395 = vpack.c.bf16 %v394, %v393
    %397 = vrot.lane.b32.xlu0 %v395, 64
    %v398 = vpop.permute.xlu0 %397
    %v401 = vsel %vm268, %v398, 0
    %v403 = vunpack.c.l.b16 %v401
    %v404 = vunpack.c.h.b16 %v401
    %v405 = vpack.c.b16 %v403, %v403
    %v406 = vpack.c.b16 %v404, %v404
    %409 = vst [vmem:[#allocation3] sm:$0xf] %v405
    %410 = vst [vmem:[#allocation3 + $0x4] sm:$0xf] %v406
    %s411 = scalar_lea.vmem [#allocation2], 8
    %v412 = vld [vmem:[%s411] sm:$0xff]
    %v413 = vunpack.c.l.bf16 %v412
    %v414 = vunpack.c.h.bf16 %v412
    %v415 = vpack.c.bf16 %v390, %v389
    %417 = vrot.lane.b32.xlu0 %v415, 64
    %v418 = vpop.permute.xlu0 %417
    %v420 = vsel %vm268, %v418, 0
    %422 = vmatprep.subr.bf16.mxu0 0
    %423 = vmatpush1.bf16.msra.mxu0 %v264
    %424 = vmatprep.subr.bf16.mxu0 0
    %425 = vmatpush1.bf16.msra.mxu0 %v265
    %426 = vmatprep.subr.bf16.mxu0 0
    %427 = vmatpush1.bf16.msra.mxu0 0
    %428 = vmatprep.subr.bf16.mxu0 0
    %429 = vmatpush1.bf16.msra.mxu0 0
    %430 = vmatprep.subr.bf16.mxu0 0
    %431 = vmatpush1.bf16.msra.mxu0 0
    %432 = vmatprep.subr.bf16.mxu0 0
    %433 = vmatpush1.bf16.msra.mxu0 0
    %434 = vmatprep.subr.bf16.mxu0 0
    %435 = vmatpush1.bf16.msra.mxu0 0
    %436 = vmatprep.subr.bf16.mxu0 0
    %437 = vmatpush1.bf16.msra.mxu0 0
    %438 = vmatprep.subr.bf16.mxu0 0
    %439 = vmatpush1.bf16.msra.mxu0 0
    %440 = vmatprep.subr.bf16.mxu0 0
    %441 = vmatpush1.bf16.msra.mxu0 0
    %442 = vmatprep.subr.bf16.mxu0 0
    %443 = vmatpush1.bf16.msra.mxu0 0
    %444 = vmatprep.subr.bf16.mxu0 0
    %445 = vmatpush1.bf16.msra.mxu0 0
    %446 = vmatprep.subr.bf16.mxu0 0
    %447 = vmatpush1.bf16.msra.mxu0 0
    %448 = vmatprep.subr.bf16.mxu0 0
    %449 = vmatpush1.bf16.msra.mxu0 0
    %450 = vmatprep.subr.bf16.mxu0 0
    %451 = vmatpush1.bf16.msra.mxu0 0
    %452 = vmatprep.subr.bf16.mxu0 0
    %453 = vmatpush1.bf16.msra.mxu0 0
    %454 = vmatprep.mubr.bf16.mxu0 0
    %455 = vmatmul.mubr.bf16.gmra.mrb[0].mxu0 %v420
    %v456 = vpop.f32.mrb[0].mxu0
    %v457 = vadd.f32 0.0, %v456
    %v458 = vpop.f32.mrb[0].mxu0
    %v459 = vpop.f32.mrb[0].mxu0
    %v460 = vadd.f32 0.0, %v459
    %v461 = vpop.f32.mrb[0].mxu0
    %462 = vdwg.mxu0
    %v463 = vadd.f32 %v413, %v457
    %v464 = vadd.f32 %v414, %v460
    %v465 = vmul.f32 %v463, 0.5
    %v466 = vmul.f32 %v464, 0.5
    %v467 = vtanh.pop %v465
    %v468 = vtanh.pop %v466
    %v469 = vmul.f32 %v467, 0.5
    %v470 = vmul.f32 %v468, 0.5
    %v471 = vadd.f32 %v469, 0.5
    %v472 = vadd.f32 %v470, 0.5
    %v473 = vtanh.pop %v463
    %v474 = vtanh.pop %v464
    %v475 = vmul.f32 %v471, %v391
    %v476 = vmul.f32 %v472, %v392
    %479 = vrot.lane.b32.xlu0 %v473, 32
    %v480 = vpop.permute.xlu0 %479
    %481 = vrot.lane.b32.xlu0 %v474, 32
    %v482 = vpop.permute.xlu0 %481
    %v485 = vmul.f32 %v471, %v480
    %v486 = vmul.f32 %v472, %v482
    %489 = vrot.lane.b32.xlu0 %v485, 32
    %v490 = vpop.permute.xlu0 %489
    %491 = vrot.lane.b32.xlu0 %v486, 32
    %v492 = vpop.permute.xlu0 %491
    %v495 = vadd.f32 %v475, %v490
    %v496 = vadd.f32 %v476, %v492
    %v497 = vtanh.pop %v495
    %v498 = vtanh.pop %v496
    %501 = vrot.lane.b32.xlu0 %v497, 32
    %v502 = vpop.permute.xlu0 %501
    %503 = vrot.lane.b32.xlu0 %v498, 32
    %v504 = vpop.permute.xlu0 %503
    %v507 = vmul.f32 %v471, %v502
    %v508 = vmul.f32 %v472, %v504
    %s509 = scalar_lea.vmem %s1, 16
    %v510 = vld [vmem:[%s509] sm:$0xff]
    %v511 = vld [vmem:[%s509 + $0x8] sm:$0xff]
    %vm512 = vcmp.gt.f32.partialorder %v510, 0.0
    %vm513 = vcmp.gt.f32.partialorder %v511, 0.0
    %v514 = vsel %vm512, 1, 0
    %v515 = vsel %vm513, 1, 0
    %516 = vset.pattern.permute.xlu0 0
    %517 = vperm.xlu0 %516, %v514
    %v518 = vpop.permute.xlu0 %517
    %519 = vset.pattern.permute.xlu0 0
    %520 = vperm.xlu0 %519, %v515
    %v521 = vpop.permute.xlu0 %520
    %vm522 = vcmp.eq.s32.totalorder %v518, 1
    %vm523 = vcmp.eq.s32.totalorder %v521, 1
    %v524 = vsel %vm522, %v507, %v389
    %v525 = vsel %vm523, %v508, %v390
    %v526 = vsel %vm522, %v495, %v391
    %v527 = vsel %vm523, %v496, %v392
    %v528 = vsel %vm522, %v507, 0.0
    %v529 = vsel %vm523, %v508, 0.0
    %v530 = vpack.c.bf16 %v529, %v528
    %532 = vrot.lane.b32.xlu0 %v530, 64
    %v533 = vpop.permute.xlu0 %532
    %v535 = vsel %vm268, %v533, 0
    %v537 = vunpack.c.l.b16 %v535
    %v538 = vunpack.c.h.b16 %v535
    %v539 = vpack.c.b16 %v537, %v537
    %v540 = vpack.c.b16 %v538, %v538
    %s543 = scalar_lea.vmem [#allocation3], 8
    %544 = vst [vmem:[%s543] sm:$0xf] %v539
    %545 = vst [vmem:[%s543 + $0x4] sm:$0xf] %v540
    %s546 = scalar_lea.vmem [#allocation2], 16
    %v547 = vld [vmem:[%s546] sm:$0xff]
    %v548 = vunpack.c.l.bf16 %v547
    %v549 = vunpack.c.h.bf16 %v547
    %v550 = vpack.c.bf16 %v525, %v524
    %552 = vrot.lane.b32.xlu0 %v550, 64
    %v553 = vpop.permute.xlu0 %552
    %v555 = vsel %vm268, %v553, 0
    %557 = vmatprep.subr.bf16.mxu0 0
    %558 = vmatpush1.bf16.msra.mxu0 %v264
    %559 = vmatprep.subr.bf16.mxu0 0
    %560 = vmatpush1.bf16.msra.mxu0 %v265
    %561 = vmatprep.subr.bf16.mxu0 0
    %562 = vmatpush1.bf16.msra.mxu0 0
    %563 = vmatprep.subr.bf16.mxu0 0
    %564 = vmatpush1.bf16.msra.mxu0 0
    %565 = vmatprep.subr.bf16.mxu0 0
    %566 = vmatpush1.bf16.msra.mxu0 0
    %567 = vmatprep.subr.bf16.mxu0 0
    %568 = vmatpush1.bf16.msra.mxu0 0
    %569 = vmatprep.subr.bf16.mxu0 0
    %570 = vmatpush1.bf16.msra.mxu0 0
    %571 = vmatprep.subr.bf16.mxu0 0
    %572 = vmatpush1.bf16.msra.mxu0 0
    %573 = vmatprep.subr.bf16.mxu0 0
    %574 = vmatpush1.bf16.msra.mxu0 0
    %575 = vmatprep.subr.bf16.mxu0 0
    %576 = vmatpush1.bf16.msra.mxu0 0
    %577 = vmatprep.subr.bf16.mxu0 0
    %578 = vmatpush1.bf16.msra.mxu0 0
    %579 = vmatprep.subr.bf16.mxu0 0
    %580 = vmatpush1.bf16.msra.mxu0 0
    %581 = vmatprep.subr.bf16.mxu0 0
    %582 = vmatpush1.bf16.msra.mxu0 0
    %583 = vmatprep.subr.bf16.mxu0 0
    %584 = vmatpush1.bf16.msra.mxu0 0
    %585 = vmatprep.subr.bf16.mxu0 0
    %586 = vmatpush1.bf16.msra.mxu0 0
    %587 = vmatprep.subr.bf16.mxu0 0
    %588 = vmatpush1.bf16.msra.mxu0 0
    %589 = vmatprep.mubr.bf16.mxu0 0
    %590 = vmatmul.mubr.bf16.gmra.mrb[0].mxu0 %v555
    %v591 = vpop.f32.mrb[0].mxu0
    %v592 = vadd.f32 0.0, %v591
    %v593 = vpop.f32.mrb[0].mxu0
    %v594 = vpop.f32.mrb[0].mxu0
    %v595 = vadd.f32 0.0, %v594
    %v596 = vpop.f32.mrb[0].mxu0
    %597 = vdwg.mxu0
    %v598 = vadd.f32 %v548, %v592
    %v599 = vadd.f32 %v549, %v595
    %v600 = vmul.f32 %v598, 0.5
    %v601 = vmul.f32 %v599, 0.5
    %v602 = vtanh.pop %v600
    %v603 = vtanh.pop %v601
    %v604 = vmul.f32 %v602, 0.5
    %v605 = vmul.f32 %v603, 0.5
    %v606 = vadd.f32 %v604, 0.5
    %v607 = vadd.f32 %v605, 0.5
    %v608 = vtanh.pop %v598
    %v609 = vtanh.pop %v599
    %v610 = vmul.f32 %v606, %v526
    %v611 = vmul.f32 %v607, %v527
    %614 = vrot.lane.b32.xlu0 %v608, 32
    %v615 = vpop.permute.xlu0 %614
    %616 = vrot.lane.b32.xlu0 %v609, 32
    %v617 = vpop.permute.xlu0 %616
    %v620 = vmul.f32 %v606, %v615
    %v621 = vmul.f32 %v607, %v617
    %624 = vrot.lane.b32.xlu0 %v620, 32
    %v625 = vpop.permute.xlu0 %624
    %626 = vrot.lane.b32.xlu0 %v621, 32
    %v627 = vpop.permute.xlu0 %626
    %v630 = vadd.f32 %v610, %v625
    %v631 = vadd.f32 %v611, %v627
    %v632 = vtanh.pop %v630
    %v633 = vtanh.pop %v631
    %636 = vrot.lane.b32.xlu0 %v632, 32
    %v637 = vpop.permute.xlu0 %636
    %638 = vrot.lane.b32.xlu0 %v633, 32
    %v639 = vpop.permute.xlu0 %638
    %v642 = vmul.f32 %v606, %v637
    %v643 = vmul.f32 %v607, %v639
    %s644 = scalar_lea.vmem %s1, 32
    %v645 = vld [vmem:[%s644] sm:$0xff]
    %v646 = vld [vmem:[%s644 + $0x8] sm:$0xff]
    %vm647 = vcmp.gt.f32.partialorder %v645, 0.0
    %vm648 = vcmp.gt.f32.partialorder %v646, 0.0
    %v649 = vsel %vm647, 1, 0
    %v650 = vsel %vm648, 1, 0
    %651 = vset.pattern.permute.xlu0 0
    %652 = vperm.xlu0 %651, %v649
    %v653 = vpop.permute.xlu0 %652
    %654 = vset.pattern.permute.xlu0 0
    %655 = vperm.xlu0 %654, %v650
    %v656 = vpop.permute.xlu0 %655
    %vm657 = vcmp.eq.s32.totalorder %v653, 1
    %vm658 = vcmp.eq.s32.totalorder %v656, 1
    %v659 = vsel %vm657, %v642, %v524
    %v660 = vsel %vm658, %v643, %v525
    %v661 = vsel %vm657, %v630, %v526
    %v662 = vsel %vm658, %v631, %v527
    %v663 = vsel %vm657, %v642, 0.0
    %v664 = vsel %vm658, %v643, 0.0
    %v665 = vpack.c.bf16 %v664, %v663
    %667 = vrot.lane.b32.xlu0 %v665, 64
    %v668 = vpop.permute.xlu0 %667
    %v670 = vsel %vm268, %v668, 0
    %v672 = vunpack.c.l.b16 %v670
    %v673 = vunpack.c.h.b16 %v670
    %v674 = vpack.c.b16 %v672, %v672
    %v675 = vpack.c.b16 %v673, %v673
    %s678 = scalar_lea.vmem [#allocation3], 16
    %679 = vst [vmem:[%s678] sm:$0xf] %v674
    %680 = vst [vmem:[%s678 + $0x4] sm:$0xf] %v675
    %s681 = scalar_lea.vmem [#allocation2], 24
    %v682 = vld [vmem:[%s681] sm:$0xff]
    %v683 = vunpack.c.l.bf16 %v682
    %v684 = vunpack.c.h.bf16 %v682
    %v685 = vpack.c.bf16 %v660, %v659
    %687 = vrot.lane.b32.xlu0 %v685, 64
    %v688 = vpop.permute.xlu0 %687
    %v690 = vsel %vm268, %v688, 0
    %692 = vmatprep.subr.bf16.mxu0 0
    %693 = vmatpush1.bf16.msra.mxu0 %v264
    %694 = vmatprep.subr.bf16.mxu0 0
    %695 = vmatpush1.bf16.msra.mxu0 %v265
    %696 = vmatprep.subr.bf16.mxu0 0
    %697 = vmatpush1.bf16.msra.mxu0 0
    %698 = vmatprep.subr.bf16.mxu0 0
    %699 = vmatpush1.bf16.msra.mxu0 0
    %700 = vmatprep.subr.bf16.mxu0 0
    %701 = vmatpush1.bf16.msra.mxu0 0
    %702 = vmatprep.subr.bf16.mxu0 0
    %703 = vmatpush1.bf16.msra.mxu0 0
    %704 = vmatprep.subr.bf16.mxu0 0
    %705 = vmatpush1.bf16.msra.mxu0 0
    %706 = vmatprep.subr.bf16.mxu0 0
    %707 = vmatpush1.bf16.msra.mxu0 0
    %708 = vmatprep.subr.bf16.mxu0 0
    %709 = vmatpush1.bf16.msra.mxu0 0
    %710 = vmatprep.subr.bf16.mxu0 0
    %711 = vmatpush1.bf16.msra.mxu0 0
    %712 = vmatprep.subr.bf16.mxu0 0
    %713 = vmatpush1.bf16.msra.mxu0 0
    %714 = vmatprep.subr.bf16.mxu0 0
    %715 = vmatpush1.bf16.msra.mxu0 0
    %716 = vmatprep.subr.bf16.mxu0 0
    %717 = vmatpush1.bf16.msra.mxu0 0
    %718 = vmatprep.subr.bf16.mxu0 0
    %719 = vmatpush1.bf16.msra.mxu0 0
    %720 = vmatprep.subr.bf16.mxu0 0
    %721 = vmatpush1.bf16.msra.mxu0 0
    %722 = vmatprep.subr.bf16.mxu0 0
    %723 = vmatpush1.bf16.msra.mxu0 0
    %724 = vmatprep.mubr.bf16.mxu0 0
    %725 = vmatmul.mubr.bf16.gmra.mrb[0].mxu0 %v690
    %v726 = vpop.f32.mrb[0].mxu0
    %v727 = vadd.f32 0.0, %v726
    %v728 = vpop.f32.mrb[0].mxu0
    %v729 = vpop.f32.mrb[0].mxu0
    %v730 = vadd.f32 0.0, %v729
    %v731 = vpop.f32.mrb[0].mxu0
    %732 = vdwg.mxu0
    %v733 = vadd.f32 %v683, %v727
    %v734 = vadd.f32 %v684, %v730
    %v735 = vmul.f32 %v733, 0.5
    %v736 = vmul.f32 %v734, 0.5
    %v737 = vtanh.pop %v735
    %v738 = vtanh.pop %v736
    %v739 = vmul.f32 %v737, 0.5
    %v740 = vmul.f32 %v738, 0.5
    %v741 = vadd.f32 %v739, 0.5
    %v742 = vadd.f32 %v740, 0.5
    %v743 = vtanh.pop %v733
    %v744 = vtanh.pop %v734
    %v745 = vmul.f32 %v741, %v661
    %v746 = vmul.f32 %v742, %v662
    %749 = vrot.lane.b32.xlu0 %v743, 32
    %v750 = vpop.permute.xlu0 %749
    %751 = vrot.lane.b32.xlu0 %v744, 32
    %v752 = vpop.permute.xlu0 %751
    %v755 = vmul.f32 %v741, %v750
    %v756 = vmul.f32 %v742, %v752
    %759 = vrot.lane.b32.xlu0 %v755, 32
    %v760 = vpop.permute.xlu0 %759
    %761 = vrot.lane.b32.xlu0 %v756, 32
    %v762 = vpop.permute.xlu0 %761
    %v765 = vadd.f32 %v745, %v760
    %v766 = vadd.f32 %v746, %v762
    %v767 = vtanh.pop %v765
    %v768 = vtanh.pop %v766
    %771 = vrot.lane.b32.xlu0 %v767, 32
    %v772 = vpop.permute.xlu0 %771
    %773 = vrot.lane.b32.xlu0 %v768, 32
    %v774 = vpop.permute.xlu0 %773
    %v777 = vmul.f32 %v741, %v772
    %v778 = vmul.f32 %v742, %v774
    %s779 = scalar_lea.vmem %s1, 48
    %v780 = vld [vmem:[%s779] sm:$0xff]
    %v781 = vld [vmem:[%s779 + $0x8] sm:$0xff]
    %vm782 = vcmp.gt.f32.partialorder %v780, 0.0
    %vm783 = vcmp.gt.f32.partialorder %v781, 0.0
    %v784 = vsel %vm782, 1, 0
    %v785 = vsel %vm783, 1, 0
    %786 = vset.pattern.permute.xlu0 0
    %787 = vperm.xlu0 %786, %v784
    %v788 = vpop.permute.xlu0 %787
    %789 = vset.pattern.permute.xlu0 0
    %790 = vperm.xlu0 %789, %v785
    %v791 = vpop.permute.xlu0 %790
    %vm792 = vcmp.eq.s32.totalorder %v788, 1
    %vm793 = vcmp.eq.s32.totalorder %v791, 1
    %v794 = vsel %vm792, %v777, %v659
    %v795 = vsel %vm793, %v778, %v660
    %v796 = vsel %vm792, %v765, %v661
    %v797 = vsel %vm793, %v766, %v662
    %v798 = vsel %vm792, %v777, 0.0
    %v799 = vsel %vm793, %v778, 0.0
    %v800 = vpack.c.bf16 %v799, %v798
    %802 = vrot.lane.b32.xlu0 %v800, 64
    %v803 = vpop.permute.xlu0 %802
    %v805 = vsel %vm268, %v803, 0
    %v807 = vunpack.c.l.b16 %v805
    %v808 = vunpack.c.h.b16 %v805
    %v809 = vpack.c.b16 %v807, %v807
    %v810 = vpack.c.b16 %v808, %v808
    %s813 = scalar_lea.vmem [#allocation3], 24
    %814 = vst [vmem:[%s813] sm:$0xf] %v809
    %815 = vst [vmem:[%s813 + $0x4] sm:$0xf] %v810
    %s816 = scalar_lea.vmem [#allocation2], 32
    %v817 = vld [vmem:[%s816] sm:$0xff]
    %v818 = vunpack.c.l.bf16 %v817
    %v819 = vunpack.c.h.bf16 %v817
    %v820 = vpack.c.bf16 %v795, %v794
    %822 = vrot.lane.b32.xlu0 %v820, 64
    %v823 = vpop.permute.xlu0 %822
    %v825 = vsel %vm268, %v823, 0
    %827 = vmatprep.subr.bf16.mxu0 0
    %828 = vmatpush1.bf16.msra.mxu0 %v264
    %829 = vmatprep.subr.bf16.mxu0 0
    %830 = vmatpush1.bf16.msra.mxu0 %v265
    %831 = vmatprep.subr.bf16.mxu0 0
    %832 = vmatpush1.bf16.msra.mxu0 0
    %833 = vmatprep.subr.bf16.mxu0 0
    %834 = vmatpush1.bf16.msra.mxu0 0
    %835 = vmatprep.subr.bf16.mxu0 0
    %836 = vmatpush1.bf16.msra.mxu0 0
    %837 = vmatprep.subr.bf16.mxu0 0
    %838 = vmatpush1.bf16.msra.mxu0 0
    %839 = vmatprep.subr.bf16.mxu0 0
    %840 = vmatpush1.bf16.msra.mxu0 0
    %841 = vmatprep.subr.bf16.mxu0 0
    %842 = vmatpush1.bf16.msra.mxu0 0
    %843 = vmatprep.subr.bf16.mxu0 0
    %844 = vmatpush1.bf16.msra.mxu0 0
    %845 = vmatprep.subr.bf16.mxu0 0
    %846 = vmatpush1.bf16.msra.mxu0 0
    %847 = vmatprep.subr.bf16.mxu0 0
    %848 = vmatpush1.bf16.msra.mxu0 0
    %849 = vmatprep.subr.bf16.mxu0 0
    %850 = vmatpush1.bf16.msra.mxu0 0
    %851 = vmatprep.subr.bf16.mxu0 0
    %852 = vmatpush1.bf16.msra.mxu0 0
    %853 = vmatprep.subr.bf16.mxu0 0
    %854 = vmatpush1.bf16.msra.mxu0 0
    %855 = vmatprep.subr.bf16.mxu0 0
    %856 = vmatpush1.bf16.msra.mxu0 0
    %857 = vmatprep.subr.bf16.mxu0 0
    %858 = vmatpush1.bf16.msra.mxu0 0
    %859 = vmatprep.mubr.bf16.mxu0 0
    %860 = vmatmul.mubr.bf16.gmra.mrb[0].mxu0 %v825
    %v861 = vpop.f32.mrb[0].mxu0
    %v862 = vadd.f32 0.0, %v861
    %v863 = vpop.f32.mrb[0].mxu0
    %v864 = vpop.f32.mrb[0].mxu0
    %v865 = vadd.f32 0.0, %v864
    %v866 = vpop.f32.mrb[0].mxu0
    %867 = vdwg.mxu0
    %v868 = vadd.f32 %v818, %v862
    %v869 = vadd.f32 %v819, %v865
    %v870 = vmul.f32 %v868, 0.5
    %v871 = vmul.f32 %v869, 0.5
    %v872 = vtanh.pop %v870
    %v873 = vtanh.pop %v871
    %v874 = vmul.f32 %v872, 0.5
    %v875 = vmul.f32 %v873, 0.5
    %v876 = vadd.f32 %v874, 0.5
    %v877 = vadd.f32 %v875, 0.5
    %v878 = vtanh.pop %v868
    %v879 = vtanh.pop %v869
    %v880 = vmul.f32 %v876, %v796
    %v881 = vmul.f32 %v877, %v797
    %884 = vrot.lane.b32.xlu0 %v878, 32
    %v885 = vpop.permute.xlu0 %884
    %886 = vrot.lane.b32.xlu0 %v879, 32
    %v887 = vpop.permute.xlu0 %886
    %v890 = vmul.f32 %v876, %v885
    %v891 = vmul.f32 %v877, %v887
    %894 = vrot.lane.b32.xlu0 %v890, 32
    %v895 = vpop.permute.xlu0 %894
    %896 = vrot.lane.b32.xlu0 %v891, 32
    %v897 = vpop.permute.xlu0 %896
    %v900 = vadd.f32 %v880, %v895
    %v901 = vadd.f32 %v881, %v897
    %v902 = vtanh.pop %v900
    %v903 = vtanh.pop %v901
    %906 = vrot.lane.b32.xlu0 %v902, 32
    %v907 = vpop.permute.xlu0 %906
    %908 = vrot.lane.b32.xlu0 %v903, 32
    %v909 = vpop.permute.xlu0 %908
    %v912 = vmul.f32 %v876, %v907
    %v913 = vmul.f32 %v877, %v909
    %s914 = scalar_lea.vmem %s1, 64
    %v915 = vld [vmem:[%s914] sm:$0xff]
    %v916 = vld [vmem:[%s914 + $0x8] sm:$0xff]
    %vm917 = vcmp.gt.f32.partialorder %v915, 0.0
    %vm918 = vcmp.gt.f32.partialorder %v916, 0.0
    %v919 = vsel %vm917, 1, 0
    %v920 = vsel %vm918, 1, 0
    %921 = vset.pattern.permute.xlu0 0
    %922 = vperm.xlu0 %921, %v919
    %v923 = vpop.permute.xlu0 %922
    %924 = vset.pattern.permute.xlu0 0
    %925 = vperm.xlu0 %924, %v920
    %v926 = vpop.permute.xlu0 %925
    %vm927 = vcmp.eq.s32.totalorder %v923, 1
    %vm928 = vcmp.eq.s32.totalorder %v926, 1
    %v929 = vsel %vm927, %v912, %v794
    %v930 = vsel %vm928, %v913, %v795
    %v931 = vsel %vm927, %v900, %v796
    %v932 = vsel %vm928, %v901, %v797
    %v933 = vsel %vm927, %v912, 0.0
    %v934 = vsel %vm928, %v913, 0.0
    %v935 = vpack.c.bf16 %v934, %v933
    %937 = vrot.lane.b32.xlu0 %v935, 64
    %v938 = vpop.permute.xlu0 %937
    %v940 = vsel %vm268, %v938, 0
    %v942 = vunpack.c.l.b16 %v940
    %v943 = vunpack.c.h.b16 %v940
    %v944 = vpack.c.b16 %v942, %v942
    %v945 = vpack.c.b16 %v943, %v943
    %s948 = scalar_lea.vmem [#allocation3], 32
    %949 = vst [vmem:[%s948] sm:$0xf] %v944
    %950 = vst [vmem:[%s948 + $0x4] sm:$0xf] %v945
    %s951 = scalar_lea.vmem [#allocation2], 40
    %v952 = vld [vmem:[%s951] sm:$0xff]
    %v953 = vunpack.c.l.bf16 %v952
    %v954 = vunpack.c.h.bf16 %v952
    %v955 = vpack.c.bf16 %v930, %v929
    %957 = vrot.lane.b32.xlu0 %v955, 64
    %v958 = vpop.permute.xlu0 %957
    %v960 = vsel %vm268, %v958, 0
    %962 = vmatprep.subr.bf16.mxu0 0
    %963 = vmatpush1.bf16.msra.mxu0 %v264
    %964 = vmatprep.subr.bf16.mxu0 0
    %965 = vmatpush1.bf16.msra.mxu0 %v265
    %966 = vmatprep.subr.bf16.mxu0 0
    %967 = vmatpush1.bf16.msra.mxu0 0
    %968 = vmatprep.subr.bf16.mxu0 0
    %969 = vmatpush1.bf16.msra.mxu0 0
    %970 = vmatprep.subr.bf16.mxu0 0
    %971 = vmatpush1.bf16.msra.mxu0 0
    %972 = vmatprep.subr.bf16.mxu0 0
    %973 = vmatpush1.bf16.msra.mxu0 0
    %974 = vmatprep.subr.bf16.mxu0 0
    %975 = vmatpush1.bf16.msra.mxu0 0
    %976 = vmatprep.subr.bf16.mxu0 0
    %977 = vmatpush1.bf16.msra.mxu0 0
    %978 = vmatprep.subr.bf16.mxu0 0
    %979 = vmatpush1.bf16.msra.mxu0 0
    %980 = vmatprep.subr.bf16.mxu0 0
    %981 = vmatpush1.bf16.msra.mxu0 0
    %982 = vmatprep.subr.bf16.mxu0 0
    %983 = vmatpush1.bf16.msra.mxu0 0
    %984 = vmatprep.subr.bf16.mxu0 0
    %985 = vmatpush1.bf16.msra.mxu0 0
    %986 = vmatprep.subr.bf16.mxu0 0
    %987 = vmatpush1.bf16.msra.mxu0 0
    %988 = vmatprep.subr.bf16.mxu0 0
    %989 = vmatpush1.bf16.msra.mxu0 0
    %990 = vmatprep.subr.bf16.mxu0 0
    %991 = vmatpush1.bf16.msra.mxu0 0
    %992 = vmatprep.subr.bf16.mxu0 0
    %993 = vmatpush1.bf16.msra.mxu0 0
    %994 = vmatprep.mubr.bf16.mxu0 0
    %995 = vmatmul.mubr.bf16.gmra.mrb[0].mxu0 %v960
    %v996 = vpop.f32.mrb[0].mxu0
    %v997 = vadd.f32 0.0, %v996
    %v998 = vpop.f32.mrb[0].mxu0
    %v999 = vpop.f32.mrb[0].mxu0
    %v1000 = vadd.f32 0.0, %v999
    %v1001 = vpop.f32.mrb[0].mxu0
    %1002 = vdwg.mxu0
    %v1003 = vadd.f32 %v953, %v997
    %v1004 = vadd.f32 %v954, %v1000
    %v1005 = vmul.f32 %v1003, 0.5
    %v1006 = vmul.f32 %v1004, 0.5
    %v1007 = vtanh.pop %v1005
    %v1008 = vtanh.pop %v1006
    %v1009 = vmul.f32 %v1007, 0.5
    %v1010 = vmul.f32 %v1008, 0.5
    %v1011 = vadd.f32 %v1009, 0.5
    %v1012 = vadd.f32 %v1010, 0.5
    %v1013 = vtanh.pop %v1003
    %v1014 = vtanh.pop %v1004
    %v1015 = vmul.f32 %v1011, %v931
    %v1016 = vmul.f32 %v1012, %v932
    %1019 = vrot.lane.b32.xlu0 %v1013, 32
    %v1020 = vpop.permute.xlu0 %1019
    %1021 = vrot.lane.b32.xlu0 %v1014, 32
    %v1022 = vpop.permute.xlu0 %1021
    %v1025 = vmul.f32 %v1011, %v1020
    %v1026 = vmul.f32 %v1012, %v1022
    %1029 = vrot.lane.b32.xlu0 %v1025, 32
    %v1030 = vpop.permute.xlu0 %1029
    %1031 = vrot.lane.b32.xlu0 %v1026, 32
    %v1032 = vpop.permute.xlu0 %1031
    %v1035 = vadd.f32 %v1015, %v1030
    %v1036 = vadd.f32 %v1016, %v1032
    %v1037 = vtanh.pop %v1035
    %v1038 = vtanh.pop %v1036
    %1041 = vrot.lane.b32.xlu0 %v1037, 32
    %v1042 = vpop.permute.xlu0 %1041
    %1043 = vrot.lane.b32.xlu0 %v1038, 32
    %v1044 = vpop.permute.xlu0 %1043
    %v1047 = vmul.f32 %v1011, %v1042
    %v1048 = vmul.f32 %v1012, %v1044
    %s1049 = scalar_lea.vmem %s1, 80
    %v1050 = vld [vmem:[%s1049] sm:$0xff]
    %v1051 = vld [vmem:[%s1049 + $0x8] sm:$0xff]
    %vm1052 = vcmp.gt.f32.partialorder %v1050, 0.0
    %vm1053 = vcmp.gt.f32.partialorder %v1051, 0.0
    %v1054 = vsel %vm1052, 1, 0
    %v1055 = vsel %vm1053, 1, 0
    %1056 = vset.pattern.permute.xlu0 0
    %1057 = vperm.xlu0 %1056, %v1054
    %v1058 = vpop.permute.xlu0 %1057
    %1059 = vset.pattern.permute.xlu0 0
    %1060 = vperm.xlu0 %1059, %v1055
    %v1061 = vpop.permute.xlu0 %1060
    %vm1062 = vcmp.eq.s32.totalorder %v1058, 1
    %vm1063 = vcmp.eq.s32.totalorder %v1061, 1
    %v1064 = vsel %vm1062, %v1047, %v929
    %v1065 = vsel %vm1063, %v1048, %v930
    %v1066 = vsel %vm1062, %v1035, %v931
    %v1067 = vsel %vm1063, %v1036, %v932
    %v1068 = vsel %vm1062, %v1047, 0.0
    %v1069 = vsel %vm1063, %v1048, 0.0
    %v1070 = vpack.c.bf16 %v1069, %v1068
    %1072 = vrot.lane.b32.xlu0 %v1070, 64
    %v1073 = vpop.permute.xlu0 %1072
    %v1075 = vsel %vm268, %v1073, 0
    %v1077 = vunpack.c.l.b16 %v1075
    %v1078 = vunpack.c.h.b16 %v1075
    %v1079 = vpack.c.b16 %v1077, %v1077
    %v1080 = vpack.c.b16 %v1078, %v1078
    %s1083 = scalar_lea.vmem [#allocation3], 40
    %1084 = vst [vmem:[%s1083] sm:$0xf] %v1079
    %1085 = vst [vmem:[%s1083 + $0x4] sm:$0xf] %v1080
    %s1086 = scalar_lea.vmem [#allocation2], 48
    %v1087 = vld [vmem:[%s1086] sm:$0xff]
    %v1088 = vunpack.c.l.bf16 %v1087
    %v1089 = vunpack.c.h.bf16 %v1087
    %v1090 = vpack.c.bf16 %v1065, %v1064
    %1092 = vrot.lane.b32.xlu0 %v1090, 64
    %v1093 = vpop.permute.xlu0 %1092
    %v1095 = vsel %vm268, %v1093, 0
    %1097 = vmatprep.subr.bf16.mxu0 0
    %1098 = vmatpush1.bf16.msra.mxu0 %v264
    %1099 = vmatprep.subr.bf16.mxu0 0
    %1100 = vmatpush1.bf16.msra.mxu0 %v265
    %1101 = vmatprep.subr.bf16.mxu0 0
    %1102 = vmatpush1.bf16.msra.mxu0 0
    %1103 = vmatprep.subr.bf16.mxu0 0
    %1104 = vmatpush1.bf16.msra.mxu0 0
    %1105 = vmatprep.subr.bf16.mxu0 0
    %1106 = vmatpush1.bf16.msra.mxu0 0
    %1107 = vmatprep.subr.bf16.mxu0 0
    %1108 = vmatpush1.bf16.msra.mxu0 0
    %1109 = vmatprep.subr.bf16.mxu0 0
    %1110 = vmatpush1.bf16.msra.mxu0 0
    %1111 = vmatprep.subr.bf16.mxu0 0
    %1112 = vmatpush1.bf16.msra.mxu0 0
    %1113 = vmatprep.subr.bf16.mxu0 0
    %1114 = vmatpush1.bf16.msra.mxu0 0
    %1115 = vmatprep.subr.bf16.mxu0 0
    %1116 = vmatpush1.bf16.msra.mxu0 0
    %1117 = vmatprep.subr.bf16.mxu0 0
    %1118 = vmatpush1.bf16.msra.mxu0 0
    %1119 = vmatprep.subr.bf16.mxu0 0
    %1120 = vmatpush1.bf16.msra.mxu0 0
    %1121 = vmatprep.subr.bf16.mxu0 0
    %1122 = vmatpush1.bf16.msra.mxu0 0
    %1123 = vmatprep.subr.bf16.mxu0 0
    %1124 = vmatpush1.bf16.msra.mxu0 0
    %1125 = vmatprep.subr.bf16.mxu0 0
    %1126 = vmatpush1.bf16.msra.mxu0 0
    %1127 = vmatprep.subr.bf16.mxu0 0
    %1128 = vmatpush1.bf16.msra.mxu0 0
    %1129 = vmatprep.mubr.bf16.mxu0 0
    %1130 = vmatmul.mubr.bf16.gmra.mrb[0].mxu0 %v1095
    %v1131 = vpop.f32.mrb[0].mxu0
    %v1132 = vadd.f32 0.0, %v1131
    %v1133 = vpop.f32.mrb[0].mxu0
    %v1134 = vpop.f32.mrb[0].mxu0
    %v1135 = vadd.f32 0.0, %v1134
    %v1136 = vpop.f32.mrb[0].mxu0
    %1137 = vdwg.mxu0
    %v1138 = vadd.f32 %v1088, %v1132
    %v1139 = vadd.f32 %v1089, %v1135
    %v1140 = vmul.f32 %v1138, 0.5
    %v1141 = vmul.f32 %v1139, 0.5
    %v1142 = vtanh.pop %v1140
    %v1143 = vtanh.pop %v1141
    %v1144 = vmul.f32 %v1142, 0.5
    %v1145 = vmul.f32 %v1143, 0.5
    %v1146 = vadd.f32 %v1144, 0.5
    %v1147 = vadd.f32 %v1145, 0.5
    %v1148 = vtanh.pop %v1138
    %v1149 = vtanh.pop %v1139
    %v1150 = vmul.f32 %v1146, %v1066
    %v1151 = vmul.f32 %v1147, %v1067
    %1154 = vrot.lane.b32.xlu0 %v1148, 32
    %v1155 = vpop.permute.xlu0 %1154
    %1156 = vrot.lane.b32.xlu0 %v1149, 32
    %v1157 = vpop.permute.xlu0 %1156
    %v1160 = vmul.f32 %v1146, %v1155
    %v1161 = vmul.f32 %v1147, %v1157
    %1164 = vrot.lane.b32.xlu0 %v1160, 32
    %v1165 = vpop.permute.xlu0 %1164
    %1166 = vrot.lane.b32.xlu0 %v1161, 32
    %v1167 = vpop.permute.xlu0 %1166
    %v1170 = vadd.f32 %v1150, %v1165
    %v1171 = vadd.f32 %v1151, %v1167
    %v1172 = vtanh.pop %v1170
    %v1173 = vtanh.pop %v1171
    %1176 = vrot.lane.b32.xlu0 %v1172, 32
    %v1177 = vpop.permute.xlu0 %1176
    %1178 = vrot.lane.b32.xlu0 %v1173, 32
    %v1179 = vpop.permute.xlu0 %1178
    %v1182 = vmul.f32 %v1146, %v1177
    %v1183 = vmul.f32 %v1147, %v1179
    %s1184 = scalar_lea.vmem %s1, 96
    %v1185 = vld [vmem:[%s1184] sm:$0xff]
    %v1186 = vld [vmem:[%s1184 + $0x8] sm:$0xff]
    %vm1187 = vcmp.gt.f32.partialorder %v1185, 0.0
    %vm1188 = vcmp.gt.f32.partialorder %v1186, 0.0
    %v1189 = vsel %vm1187, 1, 0
    %v1190 = vsel %vm1188, 1, 0
    %1191 = vset.pattern.permute.xlu0 0
    %1192 = vperm.xlu0 %1191, %v1189
    %v1193 = vpop.permute.xlu0 %1192
    %1194 = vset.pattern.permute.xlu0 0
    %1195 = vperm.xlu0 %1194, %v1190
    %v1196 = vpop.permute.xlu0 %1195
    %vm1197 = vcmp.eq.s32.totalorder %v1193, 1
    %vm1198 = vcmp.eq.s32.totalorder %v1196, 1
    %v1199 = vsel %vm1197, %v1182, %v1064
    %v1200 = vsel %vm1198, %v1183, %v1065
    %v1201 = vsel %vm1197, %v1170, %v1066
    %v1202 = vsel %vm1198, %v1171, %v1067
    %v1203 = vsel %vm1197, %v1182, 0.0
    %v1204 = vsel %vm1198, %v1183, 0.0
    %v1205 = vpack.c.bf16 %v1204, %v1203
    %1207 = vrot.lane.b32.xlu0 %v1205, 64
    %v1208 = vpop.permute.xlu0 %1207
    %v1210 = vsel %vm268, %v1208, 0
    %v1212 = vunpack.c.l.b16 %v1210
    %v1213 = vunpack.c.h.b16 %v1210
    %v1214 = vpack.c.b16 %v1212, %v1212
    %v1215 = vpack.c.b16 %v1213, %v1213
    %s1218 = scalar_lea.vmem [#allocation3], 48
    %1219 = vst [vmem:[%s1218] sm:$0xf] %v1214
    %1220 = vst [vmem:[%s1218 + $0x4] sm:$0xf] %v1215
    %s1221 = scalar_lea.vmem [#allocation2], 56
    %v1222 = vld [vmem:[%s1221] sm:$0xff]
    %v1223 = vunpack.c.l.bf16 %v1222
    %v1224 = vunpack.c.h.bf16 %v1222
    %v1225 = vpack.c.bf16 %v1200, %v1199
    %1227 = vrot.lane.b32.xlu0 %v1225, 64
    %v1228 = vpop.permute.xlu0 %1227
    %v1230 = vsel %vm268, %v1228, 0
    %1232 = vmatprep.subr.bf16.mxu0 0
    %1233 = vmatpush1.bf16.msra.mxu0 %v264
    %1234 = vmatprep.subr.bf16.mxu0 0
    %1235 = vmatpush1.bf16.msra.mxu0 %v265
    %1236 = vmatprep.subr.bf16.mxu0 0
    %1237 = vmatpush1.bf16.msra.mxu0 0
    %1238 = vmatprep.subr.bf16.mxu0 0
    %1239 = vmatpush1.bf16.msra.mxu0 0
    %1240 = vmatprep.subr.bf16.mxu0 0
    %1241 = vmatpush1.bf16.msra.mxu0 0
    %1242 = vmatprep.subr.bf16.mxu0 0
    %1243 = vmatpush1.bf16.msra.mxu0 0
    %1244 = vmatprep.subr.bf16.mxu0 0
    %1245 = vmatpush1.bf16.msra.mxu0 0
    %1246 = vmatprep.subr.bf16.mxu0 0
    %1247 = vmatpush1.bf16.msra.mxu0 0
    %1248 = vmatprep.subr.bf16.mxu0 0
    %1249 = vmatpush1.bf16.msra.mxu0 0
    %1250 = vmatprep.subr.bf16.mxu0 0
    %1251 = vmatpush1.bf16.msra.mxu0 0
    %1252 = vmatprep.subr.bf16.mxu0 0
    %1253 = vmatpush1.bf16.msra.mxu0 0
    %1254 = vmatprep.subr.bf16.mxu0 0
    %1255 = vmatpush1.bf16.msra.mxu0 0
    %1256 = vmatprep.subr.bf16.mxu0 0
    %1257 = vmatpush1.bf16.msra.mxu0 0
    %1258 = vmatprep.subr.bf16.mxu0 0
    %1259 = vmatpush1.bf16.msra.mxu0 0
    %1260 = vmatprep.subr.bf16.mxu0 0
    %1261 = vmatpush1.bf16.msra.mxu0 0
    %1262 = vmatprep.subr.bf16.mxu0 0
    %1263 = vmatpush1.bf16.msra.mxu0 0
    %1264 = vmatprep.mubr.bf16.mxu0 0
    %1265 = vmatmul.mubr.bf16.gmra.mrb[0].mxu0 %v1230
    %v1266 = vpop.f32.mrb[0].mxu0
    %v1267 = vadd.f32 0.0, %v1266
    %v1268 = vpop.f32.mrb[0].mxu0
    %v1269 = vpop.f32.mrb[0].mxu0
    %v1270 = vadd.f32 0.0, %v1269
    %v1271 = vpop.f32.mrb[0].mxu0
    %1272 = vdwg.mxu0
    %v1273 = vadd.f32 %v1223, %v1267
    %v1274 = vadd.f32 %v1224, %v1270
    %v1275 = vmul.f32 %v1273, 0.5
    %v1276 = vmul.f32 %v1274, 0.5
    %v1277 = vtanh.pop %v1275
    %v1278 = vtanh.pop %v1276
    %v1279 = vmul.f32 %v1277, 0.5
    %v1280 = vmul.f32 %v1278, 0.5
    %v1281 = vadd.f32 %v1279, 0.5
    %v1282 = vadd.f32 %v1280, 0.5
    %v1283 = vtanh.pop %v1273
    %v1284 = vtanh.pop %v1274
    %v1285 = vmul.f32 %v1281, %v1201
    %v1286 = vmul.f32 %v1282, %v1202
    %1289 = vrot.lane.b32.xlu0 %v1283, 32
    %v1290 = vpop.permute.xlu0 %1289
    %1291 = vrot.lane.b32.xlu0 %v1284, 32
    %v1292 = vpop.permute.xlu0 %1291
    %v1295 = vmul.f32 %v1281, %v1290
    %v1296 = vmul.f32 %v1282, %v1292
    %1299 = vrot.lane.b32.xlu0 %v1295, 32
    %v1300 = vpop.permute.xlu0 %1299
    %1301 = vrot.lane.b32.xlu0 %v1296, 32
    %v1302 = vpop.permute.xlu0 %1301
    %v1305 = vadd.f32 %v1285, %v1300
    %v1306 = vadd.f32 %v1286, %v1302
    %v1307 = vtanh.pop %v1305
    %v1308 = vtanh.pop %v1306
    %1311 = vrot.lane.b32.xlu0 %v1307, 32
    %v1312 = vpop.permute.xlu0 %1311
    %1313 = vrot.lane.b32.xlu0 %v1308, 32
    %v1314 = vpop.permute.xlu0 %1313
    %v1317 = vmul.f32 %v1281, %v1312
    %v1318 = vmul.f32 %v1282, %v1314
    %s1319 = scalar_lea.vmem %s1, 112
    %v1320 = vld [vmem:[%s1319] sm:$0xff]
    %v1321 = vld [vmem:[%s1319 + $0x8] sm:$0xff]
    %vm1322 = vcmp.gt.f32.partialorder %v1320, 0.0
    %vm1323 = vcmp.gt.f32.partialorder %v1321, 0.0
    %v1324 = vsel %vm1322, 1, 0
    %v1325 = vsel %vm1323, 1, 0
    %1326 = vset.pattern.permute.xlu0 0
    %1327 = vperm.xlu0 %1326, %v1324
    %v1328 = vpop.permute.xlu0 %1327
    %1329 = vset.pattern.permute.xlu0 0
    %1330 = vperm.xlu0 %1329, %v1325
    %v1331 = vpop.permute.xlu0 %1330
    %vm1332 = vcmp.eq.s32.totalorder %v1328, 1
    %vm1333 = vcmp.eq.s32.totalorder %v1331, 1
    %v1334 = vsel %vm1332, %v1317, %v1199
    %v1335 = vsel %vm1333, %v1318, %v1200
    %v1336 = vsel %vm1332, %v1305, %v1201
    %v1337 = vsel %vm1333, %v1306, %v1202
    %v1338 = vsel %vm1332, %v1317, 0.0
    %v1339 = vsel %vm1333, %v1318, 0.0
    %v1340 = vpack.c.bf16 %v1339, %v1338
    %1342 = vrot.lane.b32.xlu0 %v1340, 64
    %v1343 = vpop.permute.xlu0 %1342
    %v1345 = vsel %vm268, %v1343, 0
    %v1347 = vunpack.c.l.b16 %v1345
    %v1348 = vunpack.c.h.b16 %v1345
    %v1349 = vpack.c.b16 %v1347, %v1347
    %v1350 = vpack.c.b16 %v1348, %v1348
    %s1353 = scalar_lea.vmem [#allocation3], 56
    %1354 = vst [vmem:[%s1353] sm:$0xf] %v1349
    %1355 = vst [vmem:[%s1353 + $0x4] sm:$0xf] %v1350
    %1358 = vrot.lane.b32.xlu0 %v1334, 64
    %v1359 = vpop.permute.xlu0 %1358
    %1360 = vrot.lane.b32.xlu0 %v1335, 64
    %v1361 = vpop.permute.xlu0 %1360
    %1364 = vst.msk [vmem:[#allocation5] sm:$0xff] %vm268, %v1359
    %1365 = vst.msk [vmem:[#allocation5 + $0x8] sm:$0xff] %vm268, %v1361
    %1368 = vrot.lane.b32.xlu0 %v1336, 96
    %v1369 = vpop.permute.xlu0 %1368
    %1370 = vrot.lane.b32.xlu0 %v1337, 96
    %v1371 = vpop.permute.xlu0 %1370
    %1374 = vst.msk [vmem:[#allocation7] sm:$0xff] %vm268, %v1369
    %1375 = vst.msk [vmem:[#allocation7 + $0x8] sm:$0xff] %vm268, %v1371
    // Predicated region
    $region26: #{tpu_custom_call.1} parent=1 // pred_check
      _
    $region27: #{tpu_custom_call.1} parent=1 // pred_check_branch
      %1377 = sbr.rel (0) target = $region29
    $region28: #{tpu_custom_call.1} parent=1 // pred_region
      %s1379 = ssub.s32 1024, 1024
      %1380 = vsyncadd [#allocation4], %s1379
      %s1381 = sshll.u32 [#allocation3], 4
      %s1382 = int_to_ptr.vmem [resolvable:$true] %s1381
      %1387 = dma.vmem_to_hbm [thread:$0]  %s1382, 1024, %s5, [#allocation4], 64, 64, 4
    $region29: #{tpu_custom_call.1} parent=1 // pred_fallthru
      _
    // Predicated region
    $region30: #{tpu_custom_call.1} parent=1 // pred_check
      _
    $region31: #{tpu_custom_call.1} parent=1 // pred_check_branch
      %1389 = sbr.rel (0) target = $region33
    $region32: #{tpu_custom_call.1} parent=1 // pred_region
      %s1391 = ssub.s32 256, 256
      %1392 = vsyncadd [#allocation6], %s1391
      %s1393 = sshll.u32 [#allocation5], 4
      %s1394 = int_to_ptr.vmem [resolvable:$true] %s1393
      %1399 = dma.vmem_to_hbm [thread:$0]  %s1394, 256, %s6, [#allocation6], 128, 128, 8
    $region33: #{tpu_custom_call.1} parent=1 // pred_fallthru
      _
    // Predicated region
    $region34: #{tpu_custom_call.1} parent=1 // pred_check
      _
    $region35: #{tpu_custom_call.1} parent=1 // pred_check_branch
      %1401 = sbr.rel (0) target = $region37
    $region36: #{tpu_custom_call.1} parent=1 // pred_region
      %s1403 = ssub.s32 256, 256
      %1404 = vsyncadd [#allocation6], %s1403
      %s1405 = sshll.u32 [#allocation7], 4
      %s1406 = int_to_ptr.vmem [resolvable:$true] %s1405
      %1411 = dma.vmem_to_hbm [thread:$0]  %s1406, 256, %s7, [#allocation6], 128, 128, 8
    $region37: #{tpu_custom_call.1} parent=1 // pred_fallthru
      _
    // Predicated region
    $region38: #{tpu_custom_call.1} parent=1 // pred_check
      _
    $region39: #{tpu_custom_call.1} parent=1 // pred_check_branch
      %1413 = sbr.rel (0) target = $region41
    $region40: #{tpu_custom_call.1} parent=1 // pred_region
      %1414 = dma.done [#allocation4], 1024
    $region41: #{tpu_custom_call.1} parent=1 // pred_fallthru
      _
    // Predicated region
    $region42: #{tpu_custom_call.1} parent=1 // pred_check
      _
    $region43: #{tpu_custom_call.1} parent=1 // pred_check_branch
      %1416 = sbr.rel (0) target = $region45
    $region44: #{tpu_custom_call.1} parent=1 // pred_region
      %1417 = dma.done [#allocation6], 256
    $region45: #{tpu_custom_call.1} parent=1 // pred_fallthru
      _
    // Predicated region
    $region46: #{tpu_custom_call.1} parent=1 // pred_check
      _
    $region47: #{tpu_custom_call.1} parent=1 // pred_check_branch
      %1419 = sbr.rel (0) target = $region49
    $region48: #{tpu_custom_call.1} parent=1 // pred_region
      %1420 = dma.done [#allocation6], 256
    $region49: #{tpu_custom_call.1} parent=1 // pred_fallthru
      _
    %1421 = vsyncpa [#allocation4], 1
    %1422 = vsyncpa [#allocation6], 1

// kernel: tpu_custom_call.1
$region0: #{tpu_custom_call.1}
  #allocation0 [shape = 'u32[]', space=smem, size = 0x4, offset = 0x4, fixed_abs, tag = 'smem constant byte address 0x4 - core index']
  #allocation1 [shape = 'u32[144,128]{1,0:T(1,128)}', space=vmem, size = 0x12000, scoped, tag = 'internal scratch']
  #allocation2 [shape = 'bf16[8,16,128]{2,1,0:T(16,128)(2,1)}', space=vmem, size = 0x8000, scoped, tag = 'scratch operand']
  %s0 = inlined_call_operand.vmem [shape: bf16[8,16,16], index: 0, kind: input, shape index: {}]
  %s1 = inlined_call_operand.vmem [shape: f32[8,16,1], index: 1, kind: input, shape index: {}]
  %s2 = inlined_call_operand.vmem [shape: bf16[16,128], index: 2, kind: input, shape index: {}]
  %s3 = inlined_call_operand.vmem [shape: bf16[32,128], index: 3, kind: input, shape index: {}]
  %s4 = inlined_call_operand.vmem [shape: f32[1,128], index: 4, kind: input, shape index: {}]
  %s5 = inlined_call_operand.hbm [shape: bf16[8,16,128], index: 5, kind: output, shape index: {0}]
  %s6 = inlined_call_operand.hbm [shape: f32[16,32], index: 6, kind: output, shape index: {1}]
  %s7 = inlined_call_operand.hbm [shape: f32[16,32], index: 7, kind: output, shape index: {2}]
  %8 = xla_tuple %s5, %s6, %s7
  %s9 = sld [smem:[#allocation0]]
  $region50: #{tpu_custom_call.1} parent=0
    _
  %s11 = ssub.s32 1, %s9
  %s12 = scalar_select 0, %s11, %s9
  $region1: #{tpu_custom_call.1} parent=0
    #allocation3 [shape = 'u8[32768]{0}', space=vmem, size = 0x8000, scoped, tag = 'output window, operand 0, single buffered']
    #allocation4 [shape = 's32[1]{0}', space=sflag, size = 0x4, scoped, tag = 'scoped memory for tpu_custom_call.1']
    #allocation5 [shape = 'u8[8192]{0}', space=vmem, size = 0x2000, scoped, tag = 'output window, operand 1, single buffered']
    #allocation6 [shape = 's32[1]{0}', space=sflag, size = 0x4, scoped, tag = 'scoped memory for tpu_custom_call.1']
    #allocation7 [shape = 'u8[8192]{0}', space=vmem, size = 0x2000, scoped, tag = 'output window, operand 2, single buffered']
    %13 = vsyncpa [#allocation4], 0
    %14 = vsyncpa [#allocation6], 0
    // Predicated region
    $region2: #{tpu_custom_call.1} parent=1 // pred_check
      _
    $region3: #{tpu_custom_call.1} parent=1 // pred_check_branch
      %16 = sbr.rel (0) target = $region5
    $region4: #{tpu_custom_call.1} parent=1 // pred_region
      _
    $region5: #{tpu_custom_call.1} parent=1 // pred_fallthru
      _
    // Predicated region
    $region6: #{tpu_custom_call.1} parent=1 // pred_check
      _
    $region7: #{tpu_custom_call.1} parent=1 // pred_check_branch
      %18 = sbr.rel (0) target = $region9
    $region8: #{tpu_custom_call.1} parent=1 // pred_region
      _
    $region9: #{tpu_custom_call.1} parent=1 // pred_fallthru
      _
    // Predicated region
    $region10: #{tpu_custom_call.1} parent=1 // pred_check
      _
    $region11: #{tpu_custom_call.1} parent=1 // pred_check_branch
      %20 = sbr.rel (0) target = $region13
    $region12: #{tpu_custom_call.1} parent=1 // pred_region
      _
    $region13: #{tpu_custom_call.1} parent=1 // pred_fallthru
      _
    // Predicated region
    $region14: #{tpu_custom_call.1} parent=1 // pred_check
      _
    $region15: #{tpu_custom_call.1} parent=1 // pred_check_branch
      %22 = sbr.rel (0) target = $region17
    $region16: #{tpu_custom_call.1} parent=1 // pred_region
      _
    $region17: #{tpu_custom_call.1} parent=1 // pred_fallthru
      _
    // Predicated region
    $region18: #{tpu_custom_call.1} parent=1 // pred_check
      _
    $region19: #{tpu_custom_call.1} parent=1 // pred_check_branch
      %24 = sbr.rel (0) target = $region21
    $region20: #{tpu_custom_call.1} parent=1 // pred_region
      _
    $region21: #{tpu_custom_call.1} parent=1 // pred_fallthru
      _
    %p26 = scmp.eq.s32.totalorder 0, 0
    // Predicated region
    $region22: #{tpu_custom_call.1} parent=1 // pred_check
      %p27 = pneg %p26
    $region23: #{tpu_custom_call.1} parent=1 // pred_check_branch
      %29 = sbr.rel (%p27) target = $region25
    $region24: #{tpu_custom_call.1} parent=1 // pred_region
      %vm30 = vcmask 261120
      %31 = vst.msk [vmem:[#allocation5] sm:$0xff] %vm30, 0.0
      %32 = vst.msk [vmem:[#allocation5 + $0x8] sm:$0xff] %vm30, 0.0
      %33 = vst.msk [vmem:[#allocation7] sm:$0xff] %vm30, 0.0
      %34 = vst.msk [vmem:[#allocation7 + $0x8] sm:$0xff] %vm30, 0.0
    $region25: #{tpu_custom_call.1} parent=1 // pred_fallthru
      _
    %v35 = vld [vmem:[%s0] sm:$0xf]
    %v36 = vld [vmem:[%s0 + $0x4] sm:$0xf]
    %v37 = vld [vmem:[%s0 + $0x8] sm:$0xf]
    %v38 = vld [vmem:[%s0 + $0xc] sm:$0xf]
    %v39 = vld [vmem:[%s0 + $0x10] sm:$0xf]
    %v40 = vld [vmem:[%s0 + $0x14] sm:$0xf]
    %v41 = vld [vmem:[%s0 + $0x18] sm:$0xf]
    %v42 = vld [vmem:[%s0 + $0x1c] sm:$0xf]
    %v43 = vld [vmem:[%s0 + $0x20] sm:$0xf]
    %v44 = vld [vmem:[%s0 + $0x24] sm:$0xf]
    %v45 = vld [vmem:[%s0 + $0x28] sm:$0xf]
    %v46 = vld [vmem:[%s0 + $0x2c] sm:$0xf]
    %v47 = vld [vmem:[%s0 + $0x30] sm:$0xf]
    %v48 = vld [vmem:[%s0 + $0x34] sm:$0xf]
    %v49 = vld [vmem:[%s0 + $0x38] sm:$0xf]
    %v50 = vld [vmem:[%s0 + $0x3c] sm:$0xf]
    %v51 = vld [vmem:[%s2] sm:$0xf]
    %v52 = vld [vmem:[%s2 + $0x4] sm:$0xf]
    %v53 = vld [vmem:[%s4] sm:$0x1]
    %v55 = vlaneseq
    %v56 = vshrl.u32 %v55, 7
    %v57 = vsub.s32 0, %v56
    %v58 = vrot.slane %v53, %v57
    %v76 = vunpack.c.l.b16 %v35
    %v77 = vunpack.c.l.b16 %v36
    %v78 = vunpack.c.l.b16 %v37
    %v79 = vunpack.c.l.b16 %v38
    %v80 = vunpack.c.l.b16 %v39
    %v81 = vunpack.c.l.b16 %v40
    %v82 = vunpack.c.l.b16 %v41
    %v83 = vunpack.c.l.b16 %v42
    %v84 = vunpack.c.l.b16 %v43
    %v85 = vunpack.c.l.b16 %v44
    %v86 = vunpack.c.l.b16 %v45
    %v87 = vunpack.c.l.b16 %v46
    %v88 = vunpack.c.l.b16 %v47
    %v89 = vunpack.c.l.b16 %v48
    %v90 = vunpack.c.l.b16 %v49
    %v91 = vunpack.c.l.b16 %v50
    %v92 = vpack.c.b16 %v77, %v76
    %v93 = vpack.c.b16 %v79, %v78
    %v94 = vpack.c.b16 %v81, %v80
    %v95 = vpack.c.b16 %v83, %v82
    %v96 = vpack.c.b16 %v85, %v84
    %v97 = vpack.c.b16 %v87, %v86
    %v98 = vpack.c.b16 %v89, %v88
    %v99 = vpack.c.b16 %v91, %v90
    %v102 = vunpack.c.l.b16 %v51
    %v103 = vunpack.c.l.b16 %v52
    %v104 = vpack.c.b16 %v103, %v102
    %vm106 = vcmask 130048
    %v108 = vsel %vm106, %v92, 0
    %v111 = vsel %vm106, %v93, 0
    %v114 = vsel %vm106, %v94, 0
    %v117 = vsel %vm106, %v95, 0
    %v120 = vsel %vm106, %v96, 0
    %v123 = vsel %vm106, %v97, 0
    %v126 = vsel %vm106, %v98, 0
    %v129 = vsel %vm106, %v99, 0
    %131 = vmatprep.subr.bf16.mxu0 0
    %132 = vmatpush1.bf16.msra.mxu0 %v104
    %133 = vmatprep.subr.bf16.mxu0 0
    %134 = vmatpush1.bf16.msra.mxu0 0
    %135 = vmatprep.subr.bf16.mxu0 0
    %136 = vmatpush1.bf16.msra.mxu0 0
    %137 = vmatprep.subr.bf16.mxu0 0
    %138 = vmatpush1.bf16.msra.mxu0 0
    %139 = vmatprep.subr.bf16.mxu0 0
    %140 = vmatpush1.bf16.msra.mxu0 0
    %141 = vmatprep.subr.bf16.mxu0 0
    %142 = vmatpush1.bf16.msra.mxu0 0
    %143 = vmatprep.subr.bf16.mxu0 0
    %144 = vmatpush1.bf16.msra.mxu0 0
    %145 = vmatprep.subr.bf16.mxu0 0
    %146 = vmatpush1.bf16.msra.mxu0 0
    %147 = vmatprep.subr.bf16.mxu0 0
    %148 = vmatpush1.bf16.msra.mxu0 0
    %149 = vmatprep.subr.bf16.mxu0 0
    %150 = vmatpush1.bf16.msra.mxu0 0
    %151 = vmatprep.subr.bf16.mxu0 0
    %152 = vmatpush1.bf16.msra.mxu0 0
    %153 = vmatprep.subr.bf16.mxu0 0
    %154 = vmatpush1.bf16.msra.mxu0 0
    %155 = vmatprep.subr.bf16.mxu0 0
    %156 = vmatpush1.bf16.msra.mxu0 0
    %157 = vmatprep.subr.bf16.mxu0 0
    %158 = vmatpush1.bf16.msra.mxu0 0
    %159 = vmatprep.subr.bf16.mxu0 0
    %160 = vmatpush1.bf16.msra.mxu0 0
    %161 = vmatprep.subr.bf16.mxu0 0
    %162 = vmatpush1.bf16.msra.mxu0 0
    %163 = vmatprep.mubr.bf16.mxu0 0
    %164 = vmatmul.mubr.bf16.gmra.mrb[0].mxu0 %v108
    %v165 = vpop.f32.mrb[0].mxu0
    %v166 = vadd.f32 %v58, %v165
    %v167 = vpop.f32.mrb[0].mxu0
    %v168 = vpop.f32.mrb[0].mxu0
    %v169 = vadd.f32 %v58, %v168
    %v170 = vpop.f32.mrb[0].mxu0
    %171 = vmatprep.mubr.bf16.mxu0 0
    %172 = vmatmul.mubr.bf16.gmra.mrb[0].mxu0 %v111
    %v173 = vpop.f32.mrb[0].mxu0
    %v174 = vadd.f32 %v58, %v173
    %v175 = vpop.f32.mrb[0].mxu0
    %v176 = vpop.f32.mrb[0].mxu0
    %v177 = vadd.f32 %v58, %v176
    %v178 = vpop.f32.mrb[0].mxu0
    %179 = vmatprep.mubr.bf16.mxu0 0
    %180 = vmatmul.mubr.bf16.gmra.mrb[0].mxu0 %v114
    %v181 = vpop.f32.mrb[0].mxu0
    %v182 = vadd.f32 %v58, %v181
    %v183 = vpop.f32.mrb[0].mxu0
    %v184 = vpop.f32.mrb[0].mxu0
    %v185 = vadd.f32 %v58, %v184
    %v186 = vpop.f32.mrb[0].mxu0
    %187 = vmatprep.mubr.bf16.mxu0 0
    %188 = vmatmul.mubr.bf16.gmra.mrb[0].mxu0 %v117
    %v189 = vpop.f32.mrb[0].mxu0
    %v190 = vadd.f32 %v58, %v189
    %v191 = vpop.f32.mrb[0].mxu0
    %v192 = vpop.f32.mrb[0].mxu0
    %v193 = vadd.f32 %v58, %v192
    %v194 = vpop.f32.mrb[0].mxu0
    %195 = vmatprep.mubr.bf16.mxu0 0
    %196 = vmatmul.mubr.bf16.gmra.mrb[0].mxu0 %v120
    %v197 = vpop.f32.mrb[0].mxu0
    %v198 = vadd.f32 %v58, %v197
    %v199 = vpop.f32.mrb[0].mxu0
    %v200 = vpop.f32.mrb[0].mxu0
    %v201 = vadd.f32 %v58, %v200
    %v202 = vpop.f32.mrb[0].mxu0
    %203 = vmatprep.mubr.bf16.mxu0 0
    %204 = vmatmul.mubr.bf16.gmra.mrb[0].mxu0 %v123
    %v205 = vpop.f32.mrb[0].mxu0
    %v206 = vadd.f32 %v58, %v205
    %v207 = vpop.f32.mrb[0].mxu0
    %v208 = vpop.f32.mrb[0].mxu0
    %v209 = vadd.f32 %v58, %v208
    %v210 = vpop.f32.mrb[0].mxu0
    %211 = vmatprep.mubr.bf16.mxu0 0
    %212 = vmatmul.mubr.bf16.gmra.mrb[0].mxu0 %v126
    %v213 = vpop.f32.mrb[0].mxu0
    %v214 = vadd.f32 %v58, %v213
    %v215 = vpop.f32.mrb[0].mxu0
    %v216 = vpop.f32.mrb[0].mxu0
    %v217 = vadd.f32 %v58, %v216
    %v218 = vpop.f32.mrb[0].mxu0
    %219 = vmatprep.mubr.bf16.mxu0 0
    %220 = vmatmul.mubr.bf16.gmra.mrb[0].mxu0 %v129
    %v221 = vpop.f32.mrb[0].mxu0
    %v222 = vadd.f32 %v58, %v221
    %v223 = vpop.f32.mrb[0].mxu0
    %v224 = vpop.f32.mrb[0].mxu0
    %v225 = vadd.f32 %v58, %v224
    %v226 = vpop.f32.mrb[0].mxu0
    %227 = vdwg.mxu0
    %v228 = vpack.c.bf16 %v169, %v166
    %v229 = vpack.c.bf16 %v177, %v174
    %v230 = vpack.c.bf16 %v185, %v182
    %v231 = vpack.c.bf16 %v193, %v190
    %v232 = vpack.c.bf16 %v201, %v198
    %v233 = vpack.c.bf16 %v209, %v206
    %v234 = vpack.c.bf16 %v217, %v214
    %v235 = vpack.c.bf16 %v225, %v222
    %236 = vst [vmem:[#allocation2] sm:$0xff] %v228
    %237 = vst [vmem:[#allocation2 + $0x8] sm:$0xff] %v229
    %238 = vst [vmem:[#allocation2 + $0x10] sm:$0xff] %v230
    %239 = vst [vmem:[#allocation2 + $0x18] sm:$0xff] %v231
    %240 = vst [vmem:[#allocation2 + $0x20] sm:$0xff] %v232
    %241 = vst [vmem:[#allocation2 + $0x28] sm:$0xff] %v233
    %242 = vst [vmem:[#allocation2 + $0x30] sm:$0xff] %v234
    %243 = vst [vmem:[#allocation2 + $0x38] sm:$0xff] %v235
    %v244 = vld [vmem:[%s3] sm:$0xf]
    %v245 = vld [vmem:[%s3 + $0x4] sm:$0xf]
    %v246 = vld [vmem:[%s3 + $0x8] sm:$0xf]
    %v247 = vld [vmem:[%s3 + $0xc] sm:$0xf]
    %v248 = vld [vmem:[#allocation5] sm:$0xff]
    %v249 = vld [vmem:[#allocation5 + $0x8] sm:$0xff]
    %v250 = vld [vmem:[#allocation7] sm:$0xff]
    %v251 = vld [vmem:[#allocation7 + $0x8] sm:$0xff]
    %v252 = vld [vmem:[#allocation2] sm:$0xff]
    %v253 = vunpack.c.l.bf16 %v252
    %v254 = vunpack.c.h.bf16 %v252
    %v255 = vpack.c.bf16 %v249, %v248
    %v260 = vunpack.c.l.b16 %v244
    %v261 = vunpack.c.l.b16 %v245
    %v262 = vunpack.c.l.b16 %v246
    %v263 = vunpack.c.l.b16 %v247
    %v264 = vpack.c.b16 %v261, %v260
    %v265 = vpack.c.b16 %v263, %v262
    %vm268 = vcmask 261120
    %v270 = vsel %vm268, %v255, 0
    %272 = vmatprep.subr.bf16.mxu0 0
    %273 = vmatpush1.bf16.msra.mxu0 %v264
    %274 = vmatprep.subr.bf16.mxu0 0
    %275 = vmatpush1.bf16.msra.mxu0 %v265
    %276 = vmatprep.subr.bf16.mxu0 0
    %277 = vmatpush1.bf16.msra.mxu0 0
    %278 = vmatprep.subr.bf16.mxu0 0
    %279 = vmatpush1.bf16.msra.mxu0 0
    %280 = vmatprep.subr.bf16.mxu0 0
    %281 = vmatpush1.bf16.msra.mxu0 0
    %282 = vmatprep.subr.bf16.mxu0 0
    %283 = vmatpush1.bf16.msra.mxu0 0
    %284 = vmatprep.subr.bf16.mxu0 0
    %285 = vmatpush1.bf16.msra.mxu0 0
    %286 = vmatprep.subr.bf16.mxu0 0
    %287 = vmatpush1.bf16.msra.mxu0 0
    %288 = vmatprep.subr.bf16.mxu0 0
    %289 = vmatpush1.bf16.msra.mxu0 0
    %290 = vmatprep.subr.bf16.mxu0 0
    %291 = vmatpush1.bf16.msra.mxu0 0
    %292 = vmatprep.subr.bf16.mxu0 0
    %293 = vmatpush1.bf16.msra.mxu0 0
    %294 = vmatprep.subr.bf16.mxu0 0
    %295 = vmatpush1.bf16.msra.mxu0 0
    %296 = vmatprep.subr.bf16.mxu0 0
    %297 = vmatpush1.bf16.msra.mxu0 0
    %298 = vmatprep.subr.bf16.mxu0 0
    %299 = vmatpush1.bf16.msra.mxu0 0
    %300 = vmatprep.subr.bf16.mxu0 0
    %301 = vmatpush1.bf16.msra.mxu0 0
    %302 = vmatprep.subr.bf16.mxu0 0
    %303 = vmatpush1.bf16.msra.mxu0 0
    %304 = vmatprep.mubr.bf16.mxu0 0
    %305 = vmatmul.mubr.bf16.gmra.mrb[0].mxu0 %v270
    %v306 = vpop.f32.mrb[0].mxu0
    %v307 = vadd.f32 0.0, %v306
    %v308 = vpop.f32.mrb[0].mxu0
    %v309 = vpop.f32.mrb[0].mxu0
    %v310 = vadd.f32 0.0, %v309
    %v311 = vpop.f32.mrb[0].mxu0
    %312 = vdwg.mxu0
    %v313 = vadd.f32 %v253, %v307
    %v314 = vadd.f32 %v254, %v310
    %v315 = vmul.f32 %v313, 0.5
    %v316 = vmul.f32 %v314, 0.5
    %v317 = vtanh.pop %v315
    %v318 = vtanh.pop %v316
    %v319 = vmul.f32 %v317, 0.5
    %v320 = vmul.f32 %v318, 0.5
    %v321 = vadd.f32 %v319, 0.5
    %v322 = vadd.f32 %v320, 0.5
    %v323 = vtanh.pop %v313
    %v324 = vtanh.pop %v314
    %327 = vrot.lane.b32.xlu0 %v250, 32
    %v328 = vpop.permute.xlu0 %327
    %329 = vrot.lane.b32.xlu0 %v251, 32
    %v330 = vpop.permute.xlu0 %329
    %v333 = vmul.f32 %v321, %v328
    %v334 = vmul.f32 %v322, %v330
    %337 = vrot.lane.b32.xlu0 %v323, 32
    %v338 = vpop.permute.xlu0 %337
    %339 = vrot.lane.b32.xlu0 %v324, 32
    %v340 = vpop.permute.xlu0 %339
    %v343 = vmul.f32 %v321, %v338
    %v344 = vmul.f32 %v322, %v340
    %347 = vrot.lane.b32.xlu0 %v343, 32
    %v348 = vpop.permute.xlu0 %347
    %349 = vrot.lane.b32.xlu0 %v344, 32
    %v350 = vpop.permute.xlu0 %349
    %v353 = vadd.f32 %v333, %v348
    %v354 = vadd.f32 %v334, %v350
    %v355 = vtanh.pop %v353
    %v356 = vtanh.pop %v354
    %359 = vrot.lane.b32.xlu0 %v355, 32
    %v360 = vpop.permute.xlu0 %359
    %361 = vrot.lane.b32.xlu0 %v356, 32
    %v362 = vpop.permute.xlu0 %361
    %v365 = vmul.f32 %v321, %v360
    %v366 = vmul.f32 %v322, %v362
    %v367 = vld [vmem:[%s1] sm:$0xff]
    %v368 = vld [vmem:[%s1 + $0x8] sm:$0xff]
    %vm369 = vcmp.gt.f32.partialorder %v367, 0.0
    %vm370 = vcmp.gt.f32.partialorder %v368, 0.0
    %v371 = vsel %vm369, 1, 0
    %v372 = vsel %vm370, 1, 0
    %373 = vset.pattern.permute.xlu0 0
    %374 = vperm.xlu0 %373, %v371
    %v375 = vpop.permute.xlu0 %374
    %376 = vset.pattern.permute.xlu0 0
    %377 = vperm.xlu0 %376, %v372
    %v378 = vpop.permute.xlu0 %377
    %vm379 = vcmp.eq.s32.totalorder %v375, 1
    %vm380 = vcmp.eq.s32.totalorder %v378, 1
    %383 = vrot.lane.b32.xlu0 %v248, 64
    %v384 = vpop.permute.xlu0 %383
    %385 = vrot.lane.b32.xlu0 %v249, 64
    %v386 = vpop.permute.xlu0 %385
    %v389 = vsel %vm379, %v365, %v384
    %v390 = vsel %vm380, %v366, %v386
    %v391 = vsel %vm379, %v353, %v328
    %v392 = vsel %vm380, %v354, %v330
    %v393 = vsel %vm379, %v365, 0.0
    %v394 = vsel %vm380, %v366, 0.0
    %v395 = vpack.c.bf16 %v394, %v393
    %397 = vrot.lane.b32.xlu0 %v395, 64
    %v398 = vpop.permute.xlu0 %397
    %v401 = vsel %vm268, %v398, 0
    %v403 = vunpack.c.l.b16 %v401
    %v404 = vunpack.c.h.b16 %v401
    %v405 = vpack.c.b16 %v403, %v403
    %v406 = vpack.c.b16 %v404, %v404
    %409 = vst [vmem:[#allocation3] sm:$0xf] %v405
    %410 = vst [vmem:[#allocation3 + $0x4] sm:$0xf] %v406
    %s411 = scalar_lea.vmem [#allocation2], 8
    %v412 = vld [vmem:[%s411] sm:$0xff]
    %v413 = vunpack.c.l.bf16 %v412
    %v414 = vunpack.c.h.bf16 %v412
    %v415 = vpack.c.bf16 %v390, %v389
    %417 = vrot.lane.b32.xlu0 %v415, 64
    %v418 = vpop.permute.xlu0 %417
    %v420 = vsel %vm268, %v418, 0
    %422 = vmatprep.subr.bf16.mxu0 0
    %423 = vmatpush1.bf16.msra.mxu0 %v264
    %424 = vmatprep.subr.bf16.mxu0 0
    %425 = vmatpush1.bf16.msra.mxu0 %v265
    %426 = vmatprep.subr.bf16.mxu0 0
    %427 = vmatpush1.bf16.msra.mxu0 0
    %428 = vmatprep.subr.bf16.mxu0 0
    %429 = vmatpush1.bf16.msra.mxu0 0
    %430 = vmatprep.subr.bf16.mxu0 0
    %431 = vmatpush1.bf16.msra.mxu0 0
    %432 = vmatprep.subr.bf16.mxu0 0
    %433 = vmatpush1.bf16.msra.mxu0 0
    %434 = vmatprep.subr.bf16.mxu0 0
    %435 = vmatpush1.bf16.msra.mxu0 0
    %436 = vmatprep.subr.bf16.mxu0 0
    %437 = vmatpush1.bf16.msra.mxu0 0
    %438 = vmatprep.subr.bf16.mxu0 0
    %439 = vmatpush1.bf16.msra.mxu0 0
    %440 = vmatprep.subr.bf16.mxu0 0
    %441 = vmatpush1.bf16.msra.mxu0 0
    %442 = vmatprep.subr.bf16.mxu0 0
    %443 = vmatpush1.bf16.msra.mxu0 0
    %444 = vmatprep.subr.bf16.mxu0 0
    %445 = vmatpush1.bf16.msra.mxu0 0
    %446 = vmatprep.subr.bf16.mxu0 0
    %447 = vmatpush1.bf16.msra.mxu0 0
    %448 = vmatprep.subr.bf16.mxu0 0
    %449 = vmatpush1.bf16.msra.mxu0 0
    %450 = vmatprep.subr.bf16.mxu0 0
    %451 = vmatpush1.bf16.msra.mxu0 0
    %452 = vmatprep.subr.bf16.mxu0 0
    %453 = vmatpush1.bf16.msra.mxu0 0
    %454 = vmatprep.mubr.bf16.mxu0 0
    %455 = vmatmul.mubr.bf16.gmra.mrb[0].mxu0 %v420
    %v456 = vpop.f32.mrb[0].mxu0
    %v457 = vadd.f32 0.0, %v456
    %v458 = vpop.f32.mrb[0].mxu0
    %v459 = vpop.f32.mrb[0].mxu0
    %v460 = vadd.f32 0.0, %v459
    %v461 = vpop.f32.mrb[0].mxu0
    %462 = vdwg.mxu0
    %v463 = vadd.f32 %v413, %v457
    %v464 = vadd.f32 %v414, %v460
    %v465 = vmul.f32 %v463, 0.5
    %v466 = vmul.f32 %v464, 0.5
    %v467 = vtanh.pop %v465
    %v468 = vtanh.pop %v466
    %v469 = vmul.f32 %v467, 0.5
    %v470 = vmul.f32 %v468, 0.5
    %v471 = vadd.f32 %v469, 0.5
    %v472 = vadd.f32 %v470, 0.5
    %v473 = vtanh.pop %v463
    %v474 = vtanh.pop %v464
    %v475 = vmul.f32 %v471, %v391
    %v476 = vmul.f32 %v472, %v392
    %479 = vrot.lane.b32.xlu0 %v473, 32
    %v480 = vpop.permute.xlu0 %479
    %481 = vrot.lane.b32.xlu0 %v474, 32
    %v482 = vpop.permute.xlu0 %481
    %v485 = vmul.f32 %v471, %v480
    %v486 = vmul.f32 %v472, %v482
    %489 = vrot.lane.b32.xlu0 %v485, 32
    %v490 = vpop.permute.xlu0 %489
    %491 = vrot.lane.b32.xlu0 %v486, 32
    %v492 = vpop.permute.xlu0 %491
    %v495 = vadd.f32 %v475, %v490
    %v496 = vadd.f32 %v476, %v492
    %v497 = vtanh.pop %v495
    %v498 = vtanh.pop %v496
    %501 = vrot.lane.b32.xlu0 %v497, 32
    %v502 = vpop.permute.xlu0 %501
    %503 = vrot.lane.b32.xlu0 %v498, 32
    %v504 = vpop.permute.xlu0 %503
    %v507 = vmul.f32 %v471, %v502
    %v508 = vmul.f32 %v472, %v504
    %s509 = scalar_lea.vmem %s1, 16
    %v510 = vld [vmem:[%s509] sm:$0xff]
    %v511 = vld [vmem:[%s509 + $0x8] sm:$0xff]
    %vm512 = vcmp.gt.f32.partialorder %v510, 0.0
    %vm513 = vcmp.gt.f32.partialorder %v511, 0.0
    %v514 = vsel %vm512, 1, 0
    %v515 = vsel %vm513, 1, 0
    %516 = vset.pattern.permute.xlu0 0
    %517 = vperm.xlu0 %516, %v514
    %v518 = vpop.permute.xlu0 %517
    %519 = vset.pattern.permute.xlu0 0
    %520 = vperm.xlu0 %519, %v515
    %v521 = vpop.permute.xlu0 %520
    %vm522 = vcmp.eq.s32.totalorder %v518, 1
    %vm523 = vcmp.eq.s32.totalorder %v521, 1
    %v524 = vsel %vm522, %v507, %v389
    %v525 = vsel %vm523, %v508, %v390
    %v526 = vsel %vm522, %v495, %v391
    %v527 = vsel %vm523, %v496, %v392
    %v528 = vsel %vm522, %v507, 0.0
    %v529 = vsel %vm523, %v508, 0.0
    %v530 = vpack.c.bf16 %v529, %v528
    %532 = vrot.lane.b32.xlu0 %v530, 64
    %v533 = vpop.permute.xlu0 %532
    %v535 = vsel %vm268, %v533, 0
    %v537 = vunpack.c.l.b16 %v535
    %v538 = vunpack.c.h.b16 %v535
    %v539 = vpack.c.b16 %v537, %v537
    %v540 = vpack.c.b16 %v538, %v538
    %s543 = scalar_lea.vmem [#allocation3], 8
    %544 = vst [vmem:[%s543] sm:$0xf] %v539
    %545 = vst [vmem:[%s543 + $0x4] sm:$0xf] %v540
    %s546 = scalar_lea.vmem [#allocation2], 16
    %v547 = vld [vmem:[%s546] sm:$0xff]
    %v548 = vunpack.c.l.bf16 %v547
    %v549 = vunpack.c.h.bf16 %v547
    %v550 = vpack.c.bf16 %v525, %v524
    %552 = vrot.lane.b32.xlu0 %v550, 64
    %v553 = vpop.permute.xlu0 %552
    %v555 = vsel %vm268, %v553, 0
    %557 = vmatprep.subr.bf16.mxu0 0
    %558 = vmatpush1.bf16.msra.mxu0 %v264
    %559 = vmatprep.subr.bf16.mxu0 0
    %560 = vmatpush1.bf16.msra.mxu0 %v265
    %561 = vmatprep.subr.bf16.mxu0 0
    %562 = vmatpush1.bf16.msra.mxu0 0
    %563 = vmatprep.subr.bf16.mxu0 0
    %564 = vmatpush1.bf16.msra.mxu0 0
    %565 = vmatprep.subr.bf16.mxu0 0
    %566 = vmatpush1.bf16.msra.mxu0 0
    %567 = vmatprep.subr.bf16.mxu0 0
    %568 = vmatpush1.bf16.msra.mxu0 0
    %569 = vmatprep.subr.bf16.mxu0 0
    %570 = vmatpush1.bf16.msra.mxu0 0
    %571 = vmatprep.subr.bf16.mxu0 0
    %572 = vmatpush1.bf16.msra.mxu0 0
    %573 = vmatprep.subr.bf16.mxu0 0
    %574 = vmatpush1.bf16.msra.mxu0 0
    %575 = vmatprep.subr.bf16.mxu0 0
    %576 = vmatpush1.bf16.msra.mxu0 0
    %577 = vmatprep.subr.bf16.mxu0 0
    %578 = vmatpush1.bf16.msra.mxu0 0
    %579 = vmatprep.subr.bf16.mxu0 0
    %580 = vmatpush1.bf16.msra.mxu0 0
    %581 = vmatprep.subr.bf16.mxu0 0
    %582 = vmatpush1.bf16.msra.mxu0 0
    %583 = vmatprep.subr.bf16.mxu0 0
    %584 = vmatpush1.bf16.msra.mxu0 0
    %585 = vmatprep.subr.bf16.mxu0 0
    %586 = vmatpush1.bf16.msra.mxu0 0
    %587 = vmatprep.subr.bf16.mxu0 0
    %588 = vmatpush1.bf16.msra.mxu0 0
    %589 = vmatprep.mubr.bf16.mxu0 0
    %590 = vmatmul.mubr.bf16.gmra.mrb[0].mxu0 %v555
    %v591 = vpop.f32.mrb[0].mxu0
    %v592 = vadd.f32 0.0, %v591
    %v593 = vpop.f32.mrb[0].mxu0
    %v594 = vpop.f32.mrb[0].mxu0
    %v595 = vadd.f32 0.0, %v594
    %v596 = vpop.f32.mrb[0].mxu0
    %597 = vdwg.mxu0
    %v598 = vadd.f32 %v548, %v592
    %v599 = vadd.f32 %v549, %v595
    %v600 = vmul.f32 %v598, 0.5
    %v601 = vmul.f32 %v599, 0.5
    %v602 = vtanh.pop %v600
    %v603 = vtanh.pop %v601
    %v604 = vmul.f32 %v602, 0.5
    %v605 = vmul.f32 %v603, 0.5
    %v606 = vadd.f32 %v604, 0.5
    %v607 = vadd.f32 %v605, 0.5
    %v608 = vtanh.pop %v598
    %v609 = vtanh.pop %v599
    %v610 = vmul.f32 %v606, %v526
    %v611 = vmul.f32 %v607, %v527
    %614 = vrot.lane.b32.xlu0 %v608, 32
    %v615 = vpop.permute.xlu0 %614
    %616 = vrot.lane.b32.xlu0 %v609, 32
    %v617 = vpop.permute.xlu0 %616
    %v620 = vmul.f32 %v606, %v615
    %v621 = vmul.f32 %v607, %v617
    %624 = vrot.lane.b32.xlu0 %v620, 32
    %v625 = vpop.permute.xlu0 %624
    %626 = vrot.lane.b32.xlu0 %v621, 32
    %v627 = vpop.permute.xlu0 %626
    %v630 = vadd.f32 %v610, %v625
    %v631 = vadd.f32 %v611, %v627
    %v632 = vtanh.pop %v630
    %v633 = vtanh.pop %v631
    %636 = vrot.lane.b32.xlu0 %v632, 32
    %v637 = vpop.permute.xlu0 %636
    %638 = vrot.lane.b32.xlu0 %v633, 32
    %v639 = vpop.permute.xlu0 %638
    %v642 = vmul.f32 %v606, %v637
    %v643 = vmul.f32 %v607, %v639
    %s644 = scalar_lea.vmem %s1, 32
    %v645 = vld [vmem:[%s644] sm:$0xff]
    %v646 = vld [vmem:[%s644 + $0x8] sm:$0xff]
    %vm647 = vcmp.gt.f32.partialorder %v645, 0.0
    %vm648 = vcmp.gt.f32.partialorder %v646, 0.0
    %v649 = vsel %vm647, 1, 0
    %v650 = vsel %vm648, 1, 0
    %651 = vset.pattern.permute.xlu0 0
    %652 = vperm.xlu0 %651, %v649
    %v653 = vpop.permute.xlu0 %652
    %654 = vset.pattern.permute.xlu0 0
    %655 = vperm.xlu0 %654, %v650
    %v656 = vpop.permute.xlu0 %655
    %vm657 = vcmp.eq.s32.totalorder %v653, 1
    %vm658 = vcmp.eq.s32.totalorder %v656, 1
    %v659 = vsel %vm657, %v642, %v524
    %v660 = vsel %vm658, %v643, %v525
    %v661 = vsel %vm657, %v630, %v526
    %v662 = vsel %vm658, %v631, %v527
    %v663 = vsel %vm657, %v642, 0.0
    %v664 = vsel %vm658, %v643, 0.0
    %v665 = vpack.c.bf16 %v664, %v663
    %667 = vrot.lane.b32.xlu0 %v665, 64
    %v668 = vpop.permute.xlu0 %667
    %v670 = vsel %vm268, %v668, 0
    %v672 = vunpack.c.l.b16 %v670
    %v673 = vunpack.c.h.b16 %v670
    %v674 = vpack.c.b16 %v672, %v672
    %v675 = vpack.c.b16 %v673, %v673
    %s678 = scalar_lea.vmem [#allocation3], 16
    %679 = vst [vmem:[%s678] sm:$0xf] %v674
    %680 = vst [vmem:[%s678 + $0x4] sm:$0xf] %v675
    %s681 = scalar_lea.vmem [#allocation2], 24
    %v682 = vld [vmem:[%s681] sm:$0xff]
    %v683 = vunpack.c.l.bf16 %v682
    %v684 = vunpack.c.h.bf16 %v682
    %v685 = vpack.c.bf16 %v660, %v659
    %687 = vrot.lane.b32.xlu0 %v685, 64
    %v688 = vpop.permute.xlu0 %687
    %v690 = vsel %vm268, %v688, 0
    %692 = vmatprep.subr.bf16.mxu0 0
    %693 = vmatpush1.bf16.msra.mxu0 %v264
    %694 = vmatprep.subr.bf16.mxu0 0
    %695 = vmatpush1.bf16.msra.mxu0 %v265
    %696 = vmatprep.subr.bf16.mxu0 0
    %697 = vmatpush1.bf16.msra.mxu0 0
    %698 = vmatprep.subr.bf16.mxu0 0
    %699 = vmatpush1.bf16.msra.mxu0 0
    %700 = vmatprep.subr.bf16.mxu0 0
    %701 = vmatpush1.bf16.msra.mxu0 0
    %702 = vmatprep.subr.bf16.mxu0 0
    %703 = vmatpush1.bf16.msra.mxu0 0
    %704 = vmatprep.subr.bf16.mxu0 0
    %705 = vmatpush1.bf16.msra.mxu0 0
    %706 = vmatprep.subr.bf16.mxu0 0
    %707 = vmatpush1.bf16.msra.mxu0 0
    %708 = vmatprep.subr.bf16.mxu0 0
    %709 = vmatpush1.bf16.msra.mxu0 0
    %710 = vmatprep.subr.bf16.mxu0 0
    %711 = vmatpush1.bf16.msra.mxu0 0
    %712 = vmatprep.subr.bf16.mxu0 0
    %713 = vmatpush1.bf16.msra.mxu0 0
    %714 = vmatprep.subr.bf16.mxu0 0
    %715 = vmatpush1.bf16.msra.mxu0 0
    %716 = vmatprep.subr.bf16.mxu0 0
    %717 = vmatpush1.bf16.msra.mxu0 0
    %718 = vmatprep.subr.bf16.mxu0 0
    %719 = vmatpush1.bf16.msra.mxu0 0
    %720 = vmatprep.subr.bf16.mxu0 0
    %721 = vmatpush1.bf16.msra.mxu0 0
    %722 = vmatprep.subr.bf16.mxu0 0
    %723 = vmatpush1.bf16.msra.mxu0 0
    %724 = vmatprep.mubr.bf16.mxu0 0
    %725 = vmatmul.mubr.bf16.gmra.mrb[0].mxu0 %v690
    %v726 = vpop.f32.mrb[0].mxu0
    %v727 = vadd.f32 0.0, %v726
    %v728 = vpop.f32.mrb[0].mxu0
    %v729 = vpop.f32.mrb[0].mxu0
    %v730 = vadd.f32 0.0, %v729
    %v731 = vpop.f32.mrb[0].mxu0
    %732 = vdwg.mxu0
    %v733 = vadd.f32 %v683, %v727
    %v734 = vadd.f32 %v684, %v730
    %v735 = vmul.f32 %v733, 0.5
    %v736 = vmul.f32 %v734, 0.5
    %v737 = vtanh.pop %v735
    %v738 = vtanh.pop %v736
    %v739 = vmul.f32 %v737, 0.5
    %v740 = vmul.f32 %v738, 0.5
    %v741 = vadd.f32 %v739, 0.5
    %v742 = vadd.f32 %v740, 0.5
    %v743 = vtanh.pop %v733
    %v744 = vtanh.pop %v734
    %v745 = vmul.f32 %v741, %v661
    %v746 = vmul.f32 %v742, %v662
    %749 = vrot.lane.b32.xlu0 %v743, 32
    %v750 = vpop.permute.xlu0 %749
    %751 = vrot.lane.b32.xlu0 %v744, 32
    %v752 = vpop.permute.xlu0 %751
    %v755 = vmul.f32 %v741, %v750
    %v756 = vmul.f32 %v742, %v752
    %759 = vrot.lane.b32.xlu0 %v755, 32
    %v760 = vpop.permute.xlu0 %759
    %761 = vrot.lane.b32.xlu0 %v756, 32
    %v762 = vpop.permute.xlu0 %761
    %v765 = vadd.f32 %v745, %v760
    %v766 = vadd.f32 %v746, %v762
    %v767 = vtanh.pop %v765
    %v768 = vtanh.pop %v766
    %771 = vrot.lane.b32.xlu0 %v767, 32
    %v772 = vpop.permute.xlu0 %771
    %773 = vrot.lane.b32.xlu0 %v768, 32
    %v774 = vpop.permute.xlu0 %773
    %v777 = vmul.f32 %v741, %v772
    %v778 = vmul.f32 %v742, %v774
    %s779 = scalar_lea.vmem %s1, 48
    %v780 = vld [vmem:[%s779] sm:$0xff]
    %v781 = vld [vmem:[%s779 + $0x8] sm:$0xff]
    %vm782 = vcmp.gt.f32.partialorder %v780, 0.0
    %vm783 = vcmp.gt.f32.partialorder %v781, 0.0
    %v784 = vsel %vm782, 1, 0
    %v785 = vsel %vm783, 1, 0
    %786 = vset.pattern.permute.xlu0 0
    %787 = vperm.xlu0 %786, %v784
    %v788 = vpop.permute.xlu0 %787
    %789 = vset.pattern.permute.xlu0 0
    %790 = vperm.xlu0 %789, %v785
    %v791 = vpop.permute.xlu0 %790
    %vm792 = vcmp.eq.s32.totalorder %v788, 1
    %vm793 = vcmp.eq.s32.totalorder %v791, 1
    %v794 = vsel %vm792, %v777, %v659
    %v795 = vsel %vm793, %v778, %v660
    %v796 = vsel %vm792, %v765, %v661
    %v797 = vsel %vm793, %v766, %v662
    %v798 = vsel %vm792, %v777, 0.0
    %v799 = vsel %vm793, %v778, 0.0
    %v800 = vpack.c.bf16 %v799, %v798
    %802 = vrot.lane.b32.xlu0 %v800, 64
    %v803 = vpop.permute.xlu0 %802
    %v805 = vsel %vm268, %v803, 0
    %v807 = vunpack.c.l.b16 %v805
    %v808 = vunpack.c.h.b16 %v805
    %v809 = vpack.c.b16 %v807, %v807
    %v810 = vpack.c.b16 %v808, %v808
    %s813 = scalar_lea.vmem [#allocation3], 24
    %814 = vst [vmem:[%s813] sm:$0xf] %v809
    %815 = vst [vmem:[%s813 + $0x4] sm:$0xf] %v810
    %s816 = scalar_lea.vmem [#allocation2], 32
    %v817 = vld [vmem:[%s816] sm:$0xff]
    %v818 = vunpack.c.l.bf16 %v817
    %v819 = vunpack.c.h.bf16 %v817
    %v820 = vpack.c.bf16 %v795, %v794
    %822 = vrot.lane.b32.xlu0 %v820, 64
    %v823 = vpop.permute.xlu0 %822
    %v825 = vsel %vm268, %v823, 0
    %827 = vmatprep.subr.bf16.mxu0 0
    %828 = vmatpush1.bf16.msra.mxu0 %v264
    %829 = vmatprep.subr.bf16.mxu0 0
    %830 = vmatpush1.bf16.msra.mxu0 %v265
    %831 = vmatprep.subr.bf16.mxu0 0
    %832 = vmatpush1.bf16.msra.mxu0 0
    %833 = vmatprep.subr.bf16.mxu0 0
    %834 = vmatpush1.bf16.msra.mxu0 0
    %835 = vmatprep.subr.bf16.mxu0 0
    %836 = vmatpush1.bf16.msra.mxu0 0
    %837 = vmatprep.subr.bf16.mxu0 0
    %838 = vmatpush1.bf16.msra.mxu0 0
    %839 = vmatprep.subr.bf16.mxu0 0
    %840 = vmatpush1.bf16.msra.mxu0 0
    %841 = vmatprep.subr.bf16.mxu0 0
    %842 = vmatpush1.bf16.msra.mxu0 0
    %843 = vmatprep.subr.bf16.mxu0 0
    %844 = vmatpush1.bf16.msra.mxu0 0
    %845 = vmatprep.subr.bf16.mxu0 0
    %846 = vmatpush1.bf16.msra.mxu0 0
    %847 = vmatprep.subr.bf16.mxu0 0
    %848 = vmatpush1.bf16.msra.mxu0 0
    %849 = vmatprep.subr.bf16.mxu0 0
    %850 = vmatpush1.bf16.msra.mxu0 0
    %851 = vmatprep.subr.bf16.mxu0 0
    %852 = vmatpush1.bf16.msra.mxu0 0
    %853 = vmatprep.subr.bf16.mxu0 0
    %854 = vmatpush1.bf16.msra.mxu0 0
    %855 = vmatprep.subr.bf16.mxu0 0
    %856 = vmatpush1.bf16.msra.mxu0 0
    %857 = vmatprep.subr.bf16.mxu0 0
    %858 = vmatpush1.bf16.msra.mxu0 0
    %859 = vmatprep.mubr.bf16.mxu0 0
    %860 = vmatmul.mubr.bf16.gmra.mrb[0].mxu0 %v825
    %v861 = vpop.f32.mrb[0].mxu0
    %v862 = vadd.f32 0.0, %v861
    %v863 = vpop.f32.mrb[0].mxu0
    %v864 = vpop.f32.mrb[0].mxu0
    %v865 = vadd.f32 0.0, %v864
    %v866 = vpop.f32.mrb[0].mxu0
    %867 = vdwg.mxu0
    %v868 = vadd.f32 %v818, %v862
    %v869 = vadd.f32 %v819, %v865
    %v870 = vmul.f32 %v868, 0.5
    %v871 = vmul.f32 %v869, 0.5
    %v872 = vtanh.pop %v870
    %v873 = vtanh.pop %v871
    %v874 = vmul.f32 %v872, 0.5
    %v875 = vmul.f32 %v873, 0.5
    %v876 = vadd.f32 %v874, 0.5
    %v877 = vadd.f32 %v875, 0.5
    %v878 = vtanh.pop %v868
    %v879 = vtanh.pop %v869
    %v880 = vmul.f32 %v876, %v796
    %v881 = vmul.f32 %v877, %v797
    %884 = vrot.lane.b32.xlu0 %v878, 32
    %v885 = vpop.permute.xlu0 %884
    %886 = vrot.lane.b32.xlu0 %v879, 32
    %v887 = vpop.permute.xlu0 %886
    %v890 = vmul.f32 %v876, %v885
    %v891 = vmul.f32 %v877, %v887
    %894 = vrot.lane.b32.xlu0 %v890, 32
    %v895 = vpop.permute.xlu0 %894
    %896 = vrot.lane.b32.xlu0 %v891, 32
    %v897 = vpop.permute.xlu0 %896
    %v900 = vadd.f32 %v880, %v895
    %v901 = vadd.f32 %v881, %v897
    %v902 = vtanh.pop %v900
    %v903 = vtanh.pop %v901
    %906 = vrot.lane.b32.xlu0 %v902, 32
    %v907 = vpop.permute.xlu0 %906
    %908 = vrot.lane.b32.xlu0 %v903, 32
    %v909 = vpop.permute.xlu0 %908
    %v912 = vmul.f32 %v876, %v907
    %v913 = vmul.f32 %v877, %v909
    %s914 = scalar_lea.vmem %s1, 64
    %v915 = vld [vmem:[%s914] sm:$0xff]
    %v916 = vld [vmem:[%s914 + $0x8] sm:$0xff]
    %vm917 = vcmp.gt.f32.partialorder %v915, 0.0
    %vm918 = vcmp.gt.f32.partialorder %v916, 0.0
    %v919 = vsel %vm917, 1, 0
    %v920 = vsel %vm918, 1, 0
    %921 = vset.pattern.permute.xlu0 0
    %922 = vperm.xlu0 %921, %v919
    %v923 = vpop.permute.xlu0 %922
    %924 = vset.pattern.permute.xlu0 0
    %925 = vperm.xlu0 %924, %v920
    %v926 = vpop.permute.xlu0 %925
    %vm927 = vcmp.eq.s32.totalorder %v923, 1
    %vm928 = vcmp.eq.s32.totalorder %v926, 1
    %v929 = vsel %vm927, %v912, %v794
    %v930 = vsel %vm928, %v913, %v795
    %v931 = vsel %vm927, %v900, %v796
    %v932 = vsel %vm928, %v901, %v797
    %v933 = vsel %vm927, %v912, 0.0
    %v934 = vsel %vm928, %v913, 0.0
    %v935 = vpack.c.bf16 %v934, %v933
    %937 = vrot.lane.b32.xlu0 %v935, 64
    %v938 = vpop.permute.xlu0 %937
    %v940 = vsel %vm268, %v938, 0
    %v942 = vunpack.c.l.b16 %v940
    %v943 = vunpack.c.h.b16 %v940
    %v944 = vpack.c.b16 %v942, %v942
    %v945 = vpack.c.b16 %v943, %v943
    %s948 = scalar_lea.vmem [#allocation3], 32
    %949 = vst [vmem:[%s948] sm:$0xf] %v944
    %950 = vst [vmem:[%s948 + $0x4] sm:$0xf] %v945
    %s951 = scalar_lea.vmem [#allocation2], 40
    %v952 = vld [vmem:[%s951] sm:$0xff]
    %v953 = vunpack.c.l.bf16 %v952
    %v954 = vunpack.c.h.bf16 %v952
    %v955 = vpack.c.bf16 %v930, %v929
    %957 = vrot.lane.b32.xlu0 %v955, 64
    %v958 = vpop.permute.xlu0 %957
    %v960 = vsel %vm268, %v958, 0
    %962 = vmatprep.subr.bf16.mxu0 0
    %963 = vmatpush1.bf16.msra.mxu0 %v264
    %964 = vmatprep.subr.bf16.mxu0 0
    %965 = vmatpush1.bf16.msra.mxu0 %v265
    %966 = vmatprep.subr.bf16.mxu0 0
    %967 = vmatpush1.bf16.msra.mxu0 0
    %968 = vmatprep.subr.bf16.mxu0 0
    %969 = vmatpush1.bf16.msra.mxu0 0
    %970 = vmatprep.subr.bf16.mxu0 0
    %971 = vmatpush1.bf16.msra.mxu0 0
    %972 = vmatprep.subr.bf16.mxu0 0
    %973 = vmatpush1.bf16.msra.mxu0 0
    %974 = vmatprep.subr.bf16.mxu0 0
    %975 = vmatpush1.bf16.msra.mxu0 0
    %976 = vmatprep.subr.bf16.mxu0 0
    %977 = vmatpush1.bf16.msra.mxu0 0
    %978 = vmatprep.subr.bf16.mxu0 0
    %979 = vmatpush1.bf16.msra.mxu0 0
    %980 = vmatprep.subr.bf16.mxu0 0
    %981 = vmatpush1.bf16.msra.mxu0 0
    %982 = vmatprep.subr.bf16.mxu0 0
    %983 = vmatpush1.bf16.msra.mxu0 0
    %984 = vmatprep.subr.bf16.mxu0 0
    %985 = vmatpush1.bf16.msra.mxu0 0
    %986 = vmatprep.subr.bf16.mxu0 0
    %987 = vmatpush1.bf16.msra.mxu0 0
    %988 = vmatprep.subr.bf16.mxu0 0
    %989 = vmatpush1.bf16.msra.mxu0 0
    %990 = vmatprep.subr.bf16.mxu0 0
    %991 = vmatpush1.bf16.msra.mxu0 0
    %992 = vmatprep.subr.bf16.mxu0 0
    %993 = vmatpush1.bf16.msra.mxu0 0
    %994 = vmatprep.mubr.bf16.mxu0 0
    %995 = vmatmul.mubr.bf16.gmra.mrb[0].mxu0 %v960
    %v996 = vpop.f32.mrb[0].mxu0
    %v997 = vadd.f32 0.0, %v996
    %v998 = vpop.f32.mrb[0].mxu0
    %v999 = vpop.f32.mrb[0].mxu0
    %v1000 = vadd.f32 0.0, %v999
    %v1001 = vpop.f32.mrb[0].mxu0
    %1002 = vdwg.mxu0
    %v1003 = vadd.f32 %v953, %v997
    %v1004 = vadd.f32 %v954, %v1000
    %v1005 = vmul.f32 %v1003, 0.5
    %v1006 = vmul.f32 %v1004, 0.5
    %v1007 = vtanh.pop %v1005
    %v1008 = vtanh.pop %v1006
    %v1009 = vmul.f32 %v1007, 0.5
    %v1010 = vmul.f32 %v1008, 0.5
    %v1011 = vadd.f32 %v1009, 0.5
    %v1012 = vadd.f32 %v1010, 0.5
    %v1013 = vtanh.pop %v1003
    %v1014 = vtanh.pop %v1004
    %v1015 = vmul.f32 %v1011, %v931
    %v1016 = vmul.f32 %v1012, %v932
    %1019 = vrot.lane.b32.xlu0 %v1013, 32
    %v1020 = vpop.permute.xlu0 %1019
    %1021 = vrot.lane.b32.xlu0 %v1014, 32
    %v1022 = vpop.permute.xlu0 %1021
    %v1025 = vmul.f32 %v1011, %v1020
    %v1026 = vmul.f32 %v1012, %v1022
    %1029 = vrot.lane.b32.xlu0 %v1025, 32
    %v1030 = vpop.permute.xlu0 %1029
    %1031 = vrot.lane.b32.xlu0 %v1026, 32
    %v1032 = vpop.permute.xlu0 %1031
    %v1035 = vadd.f32 %v1015, %v1030
    %v1036 = vadd.f32 %v1016, %v1032
    %v1037 = vtanh.pop %v1035
    %v1038 = vtanh.pop %v1036
    %1041 = vrot.lane.b32.xlu0 %v1037, 32
    %v1042 = vpop.permute.xlu0 %1041
    %1043 = vrot.lane.b32.xlu0 %v1038, 32
    %v1044 = vpop.permute.xlu0 %1043
    %v1047 = vmul.f32 %v1011, %v1042
    %v1048 = vmul.f32 %v1012, %v1044
    %s1049 = scalar_lea.vmem %s1, 80
    %v1050 = vld [vmem:[%s1049] sm:$0xff]
    %v1051 = vld [vmem:[%s1049 + $0x8] sm:$0xff]
    %vm1052 = vcmp.gt.f32.partialorder %v1050, 0.0
    %vm1053 = vcmp.gt.f32.partialorder %v1051, 0.0
    %v1054 = vsel %vm1052, 1, 0
    %v1055 = vsel %vm1053, 1, 0
    %1056 = vset.pattern.permute.xlu0 0
    %1057 = vperm.xlu0 %1056, %v1054
    %v1058 = vpop.permute.xlu0 %1057
    %1059 = vset.pattern.permute.xlu0 0
    %1060 = vperm.xlu0 %1059, %v1055
    %v1061 = vpop.permute.xlu0 %1060
    %vm1062 = vcmp.eq.s32.totalorder %v1058, 1
    %vm1063 = vcmp.eq.s32.totalorder %v1061, 1
    %v1064 = vsel %vm1062, %v1047, %v929
    %v1065 = vsel %vm1063, %v1048, %v930
    %v1066 = vsel %vm1062, %v1035, %v931
    %v1067 = vsel %vm1063, %v1036, %v932
    %v1068 = vsel %vm1062, %v1047, 0.0
    %v1069 = vsel %vm1063, %v1048, 0.0
    %v1070 = vpack.c.bf16 %v1069, %v1068
    %1072 = vrot.lane.b32.xlu0 %v1070, 64
    %v1073 = vpop.permute.xlu0 %1072
    %v1075 = vsel %vm268, %v1073, 0
    %v1077 = vunpack.c.l.b16 %v1075
    %v1078 = vunpack.c.h.b16 %v1075
    %v1079 = vpack.c.b16 %v1077, %v1077
    %v1080 = vpack.c.b16 %v1078, %v1078
    %s1083 = scalar_lea.vmem [#allocation3], 40
    %1084 = vst [vmem:[%s1083] sm:$0xf] %v1079
    %1085 = vst [vmem:[%s1083 + $0x4] sm:$0xf] %v1080
    %s1086 = scalar_lea.vmem [#allocation2], 48
    %v1087 = vld [vmem:[%s1086] sm:$0xff]
    %v1088 = vunpack.c.l.bf16 %v1087
    %v1089 = vunpack.c.h.bf16 %v1087
    %v1090 = vpack.c.bf16 %v1065, %v1064
    %1092 = vrot.lane.b32.xlu0 %v1090, 64
    %v1093 = vpop.permute.xlu0 %1092
    %v1095 = vsel %vm268, %v1093, 0
    %1097 = vmatprep.subr.bf16.mxu0 0
    %1098 = vmatpush1.bf16.msra.mxu0 %v264
    %1099 = vmatprep.subr.bf16.mxu0 0
    %1100 = vmatpush1.bf16.msra.mxu0 %v265
    %1101 = vmatprep.subr.bf16.mxu0 0
    %1102 = vmatpush1.bf16.msra.mxu0 0
    %1103 = vmatprep.subr.bf16.mxu0 0
    %1104 = vmatpush1.bf16.msra.mxu0 0
    %1105 = vmatprep.subr.bf16.mxu0 0
    %1106 = vmatpush1.bf16.msra.mxu0 0
    %1107 = vmatprep.subr.bf16.mxu0 0
    %1108 = vmatpush1.bf16.msra.mxu0 0
    %1109 = vmatprep.subr.bf16.mxu0 0
    %1110 = vmatpush1.bf16.msra.mxu0 0
    %1111 = vmatprep.subr.bf16.mxu0 0
    %1112 = vmatpush1.bf16.msra.mxu0 0
    %1113 = vmatprep.subr.bf16.mxu0 0
    %1114 = vmatpush1.bf16.msra.mxu0 0
    %1115 = vmatprep.subr.bf16.mxu0 0
    %1116 = vmatpush1.bf16.msra.mxu0 0
    %1117 = vmatprep.subr.bf16.mxu0 0
    %1118 = vmatpush1.bf16.msra.mxu0 0
    %1119 = vmatprep.subr.bf16.mxu0 0
    %1120 = vmatpush1.bf16.msra.mxu0 0
    %1121 = vmatprep.subr.bf16.mxu0 0
    %1122 = vmatpush1.bf16.msra.mxu0 0
    %1123 = vmatprep.subr.bf16.mxu0 0
    %1124 = vmatpush1.bf16.msra.mxu0 0
    %1125 = vmatprep.subr.bf16.mxu0 0
    %1126 = vmatpush1.bf16.msra.mxu0 0
    %1127 = vmatprep.subr.bf16.mxu0 0
    %1128 = vmatpush1.bf16.msra.mxu0 0
    %1129 = vmatprep.mubr.bf16.mxu0 0
    %1130 = vmatmul.mubr.bf16.gmra.mrb[0].mxu0 %v1095
    %v1131 = vpop.f32.mrb[0].mxu0
    %v1132 = vadd.f32 0.0, %v1131
    %v1133 = vpop.f32.mrb[0].mxu0
    %v1134 = vpop.f32.mrb[0].mxu0
    %v1135 = vadd.f32 0.0, %v1134
    %v1136 = vpop.f32.mrb[0].mxu0
    %1137 = vdwg.mxu0
    %v1138 = vadd.f32 %v1088, %v1132
    %v1139 = vadd.f32 %v1089, %v1135
    %v1140 = vmul.f32 %v1138, 0.5
    %v1141 = vmul.f32 %v1139, 0.5
    %v1142 = vtanh.pop %v1140
    %v1143 = vtanh.pop %v1141
    %v1144 = vmul.f32 %v1142, 0.5
    %v1145 = vmul.f32 %v1143, 0.5
    %v1146 = vadd.f32 %v1144, 0.5
    %v1147 = vadd.f32 %v1145, 0.5
    %v1148 = vtanh.pop %v1138
    %v1149 = vtanh.pop %v1139
    %v1150 = vmul.f32 %v1146, %v1066
    %v1151 = vmul.f32 %v1147, %v1067
    %1154 = vrot.lane.b32.xlu0 %v1148, 32
    %v1155 = vpop.permute.xlu0 %1154
    %1156 = vrot.lane.b32.xlu0 %v1149, 32
    %v1157 = vpop.permute.xlu0 %1156
    %v1160 = vmul.f32 %v1146, %v1155
    %v1161 = vmul.f32 %v1147, %v1157
    %1164 = vrot.lane.b32.xlu0 %v1160, 32
    %v1165 = vpop.permute.xlu0 %1164
    %1166 = vrot.lane.b32.xlu0 %v1161, 32
    %v1167 = vpop.permute.xlu0 %1166
    %v1170 = vadd.f32 %v1150, %v1165
    %v1171 = vadd.f32 %v1151, %v1167
    %v1172 = vtanh.pop %v1170
    %v1173 = vtanh.pop %v1171
    %1176 = vrot.lane.b32.xlu0 %v1172, 32
    %v1177 = vpop.permute.xlu0 %1176
    %1178 = vrot.lane.b32.xlu0 %v1173, 32
    %v1179 = vpop.permute.xlu0 %1178
    %v1182 = vmul.f32 %v1146, %v1177
    %v1183 = vmul.f32 %v1147, %v1179
    %s1184 = scalar_lea.vmem %s1, 96
    %v1185 = vld [vmem:[%s1184] sm:$0xff]
    %v1186 = vld [vmem:[%s1184 + $0x8] sm:$0xff]
    %vm1187 = vcmp.gt.f32.partialorder %v1185, 0.0
    %vm1188 = vcmp.gt.f32.partialorder %v1186, 0.0
    %v1189 = vsel %vm1187, 1, 0
    %v1190 = vsel %vm1188, 1, 0
    %1191 = vset.pattern.permute.xlu0 0
    %1192 = vperm.xlu0 %1191, %v1189
    %v1193 = vpop.permute.xlu0 %1192
    %1194 = vset.pattern.permute.xlu0 0
    %1195 = vperm.xlu0 %1194, %v1190
    %v1196 = vpop.permute.xlu0 %1195
    %vm1197 = vcmp.eq.s32.totalorder %v1193, 1
    %vm1198 = vcmp.eq.s32.totalorder %v1196, 1
    %v1199 = vsel %vm1197, %v1182, %v1064
    %v1200 = vsel %vm1198, %v1183, %v1065
    %v1201 = vsel %vm1197, %v1170, %v1066
    %v1202 = vsel %vm1198, %v1171, %v1067
    %v1203 = vsel %vm1197, %v1182, 0.0
    %v1204 = vsel %vm1198, %v1183, 0.0
    %v1205 = vpack.c.bf16 %v1204, %v1203
    %1207 = vrot.lane.b32.xlu0 %v1205, 64
    %v1208 = vpop.permute.xlu0 %1207
    %v1210 = vsel %vm268, %v1208, 0
    %v1212 = vunpack.c.l.b16 %v1210
    %v1213 = vunpack.c.h.b16 %v1210
    %v1214 = vpack.c.b16 %v1212, %v1212
    %v1215 = vpack.c.b16 %v1213, %v1213
    %s1218 = scalar_lea.vmem [#allocation3], 48
    %1219 = vst [vmem:[%s1218] sm:$0xf] %v1214
    %1220 = vst [vmem:[%s1218 + $0x4] sm:$0xf] %v1215
    %s1221 = scalar_lea.vmem [#allocation2], 56
    %v1222 = vld [vmem:[%s1221] sm:$0xff]
    %v1223 = vunpack.c.l.bf16 %v1222
    %v1224 = vunpack.c.h.bf16 %v1222
    %v1225 = vpack.c.bf16 %v1200, %v1199
    %1227 = vrot.lane.b32.xlu0 %v1225, 64
    %v1228 = vpop.permute.xlu0 %1227
    %v1230 = vsel %vm268, %v1228, 0
    %1232 = vmatprep.subr.bf16.mxu0 0
    %1233 = vmatpush1.bf16.msra.mxu0 %v264
    %1234 = vmatprep.subr.bf16.mxu0 0
    %1235 = vmatpush1.bf16.msra.mxu0 %v265
    %1236 = vmatprep.subr.bf16.mxu0 0
    %1237 = vmatpush1.bf16.msra.mxu0 0
    %1238 = vmatprep.subr.bf16.mxu0 0
    %1239 = vmatpush1.bf16.msra.mxu0 0
    %1240 = vmatprep.subr.bf16.mxu0 0
    %1241 = vmatpush1.bf16.msra.mxu0 0
    %1242 = vmatprep.subr.bf16.mxu0 0
    %1243 = vmatpush1.bf16.msra.mxu0 0
    %1244 = vmatprep.subr.bf16.mxu0 0
    %1245 = vmatpush1.bf16.msra.mxu0 0
    %1246 = vmatprep.subr.bf16.mxu0 0
    %1247 = vmatpush1.bf16.msra.mxu0 0
    %1248 = vmatprep.subr.bf16.mxu0 0
    %1249 = vmatpush1.bf16.msra.mxu0 0
    %1250 = vmatprep.subr.bf16.mxu0 0
    %1251 = vmatpush1.bf16.msra.mxu0 0
    %1252 = vmatprep.subr.bf16.mxu0 0
    %1253 = vmatpush1.bf16.msra.mxu0 0
    %1254 = vmatprep.subr.bf16.mxu0 0
    %1255 = vmatpush1.bf16.msra.mxu0 0
    %1256 = vmatprep.subr.bf16.mxu0 0
    %1257 = vmatpush1.bf16.msra.mxu0 0
    %1258 = vmatprep.subr.bf16.mxu0 0
    %1259 = vmatpush1.bf16.msra.mxu0 0
    %1260 = vmatprep.subr.bf16.mxu0 0
    %1261 = vmatpush1.bf16.msra.mxu0 0
    %1262 = vmatprep.subr.bf16.mxu0 0
    %1263 = vmatpush1.bf16.msra.mxu0 0
    %1264 = vmatprep.mubr.bf16.mxu0 0
    %1265 = vmatmul.mubr.bf16.gmra.mrb[0].mxu0 %v1230
    %v1266 = vpop.f32.mrb[0].mxu0
    %v1267 = vadd.f32 0.0, %v1266
    %v1268 = vpop.f32.mrb[0].mxu0
    %v1269 = vpop.f32.mrb[0].mxu0
    %v1270 = vadd.f32 0.0, %v1269
    %v1271 = vpop.f32.mrb[0].mxu0
    %1272 = vdwg.mxu0
    %v1273 = vadd.f32 %v1223, %v1267
    %v1274 = vadd.f32 %v1224, %v1270
    %v1275 = vmul.f32 %v1273, 0.5
    %v1276 = vmul.f32 %v1274, 0.5
    %v1277 = vtanh.pop %v1275
    %v1278 = vtanh.pop %v1276
    %v1279 = vmul.f32 %v1277, 0.5
    %v1280 = vmul.f32 %v1278, 0.5
    %v1281 = vadd.f32 %v1279, 0.5
    %v1282 = vadd.f32 %v1280, 0.5
    %v1283 = vtanh.pop %v1273
    %v1284 = vtanh.pop %v1274
    %v1285 = vmul.f32 %v1281, %v1201
    %v1286 = vmul.f32 %v1282, %v1202
    %1289 = vrot.lane.b32.xlu0 %v1283, 32
    %v1290 = vpop.permute.xlu0 %1289
    %1291 = vrot.lane.b32.xlu0 %v1284, 32
    %v1292 = vpop.permute.xlu0 %1291
    %v1295 = vmul.f32 %v1281, %v1290
    %v1296 = vmul.f32 %v1282, %v1292
    %1299 = vrot.lane.b32.xlu0 %v1295, 32
    %v1300 = vpop.permute.xlu0 %1299
    %1301 = vrot.lane.b32.xlu0 %v1296, 32
    %v1302 = vpop.permute.xlu0 %1301
    %v1305 = vadd.f32 %v1285, %v1300
    %v1306 = vadd.f32 %v1286, %v1302
    %v1307 = vtanh.pop %v1305
    %v1308 = vtanh.pop %v1306
    %1311 = vrot.lane.b32.xlu0 %v1307, 32
    %v1312 = vpop.permute.xlu0 %1311
    %1313 = vrot.lane.b32.xlu0 %v1308, 32
    %v1314 = vpop.permute.xlu0 %1313
    %v1317 = vmul.f32 %v1281, %v1312
    %v1318 = vmul.f32 %v1282, %v1314
    %s1319 = scalar_lea.vmem %s1, 112
    %v1320 = vld [vmem:[%s1319] sm:$0xff]
    %v1321 = vld [vmem:[%s1319 + $0x8] sm:$0xff]
    %vm1322 = vcmp.gt.f32.partialorder %v1320, 0.0
    %vm1323 = vcmp.gt.f32.partialorder %v1321, 0.0
    %v1324 = vsel %vm1322, 1, 0
    %v1325 = vsel %vm1323, 1, 0
    %1326 = vset.pattern.permute.xlu0 0
    %1327 = vperm.xlu0 %1326, %v1324
    %v1328 = vpop.permute.xlu0 %1327
    %1329 = vset.pattern.permute.xlu0 0
    %1330 = vperm.xlu0 %1329, %v1325
    %v1331 = vpop.permute.xlu0 %1330
    %vm1332 = vcmp.eq.s32.totalorder %v1328, 1
    %vm1333 = vcmp.eq.s32.totalorder %v1331, 1
    %v1334 = vsel %vm1332, %v1317, %v1199
    %v1335 = vsel %vm1333, %v1318, %v1200
    %v1336 = vsel %vm1332, %v1305, %v1201
    %v1337 = vsel %vm1333, %v1306, %v1202
    %v1338 = vsel %vm1332, %v1317, 0.0
    %v1339 = vsel %vm1333, %v1318, 0.0
    %v1340 = vpack.c.bf16 %v1339, %v1338
    %1342 = vrot.lane.b32.xlu0 %v1340, 64
    %v1343 = vpop.permute.xlu0 %1342
    %v1345 = vsel %vm268, %v1343, 0
    %v1347 = vunpack.c.l.b16 %v1345
    %v1348 = vunpack.c.h.b16 %v1345
    %v1349 = vpack.c.b16 %v1347, %v1347
    %v1350 = vpack.c.b16 %v1348, %v1348
    %s1353 = scalar_lea.vmem [#allocation3], 56
    %1354 = vst [vmem:[%s1353] sm:$0xf] %v1349
    %1355 = vst [vmem:[%s1353 + $0x4] sm:$0xf] %v1350
    %1358 = vrot.lane.b32.xlu0 %v1334, 64
    %v1359 = vpop.permute.xlu0 %1358
    %1360 = vrot.lane.b32.xlu0 %v1335, 64
    %v1361 = vpop.permute.xlu0 %1360
    %1364 = vst.msk [vmem:[#allocation5] sm:$0xff] %vm268, %v1359
    %1365 = vst.msk [vmem:[#allocation5 + $0x8] sm:$0xff] %vm268, %v1361
    %1368 = vrot.lane.b32.xlu0 %v1336, 96
    %v1369 = vpop.permute.xlu0 %1368
    %1370 = vrot.lane.b32.xlu0 %v1337, 96
    %v1371 = vpop.permute.xlu0 %1370
    %1374 = vst.msk [vmem:[#allocation7] sm:$0xff] %vm268, %v1369
    %1375 = vst.msk [vmem:[#allocation7 + $0x8] sm:$0xff] %vm268, %v1371
    // Predicated region
    $region26: #{tpu_custom_call.1} parent=1 // pred_check
      _
    $region27: #{tpu_custom_call.1} parent=1 // pred_check_branch
      %1377 = sbr.rel (0) target = $region29
    $region28: #{tpu_custom_call.1} parent=1 // pred_region
      %s1379 = ssub.s32 1024, 1024
      %1380 = vsyncadd [#allocation4], %s1379
      %s1381 = sshll.u32 [#allocation3], 4
      %s1382 = int_to_ptr.vmem [resolvable:$true] %s1381
      %1387 = dma.vmem_to_hbm [thread:$0]  %s1382, 1024, %s5, [#allocation4], 64, 64, 4
    $region29: #{tpu_custom_call.1} parent=1 // pred_fallthru
      _
    // Predicated region
    $region30: #{tpu_custom_call.1} parent=1 // pred_check
      _
    $region31: #{tpu_custom_call.1} parent=1 // pred_check_branch
      %1389 = sbr.rel (0) target = $region33
    $region32: #{tpu_custom_call.1} parent=1 // pred_region
      %s1391 = ssub.s32 256, 256
      %1392 = vsyncadd [#allocation6], %s1391
      %s1393 = sshll.u32 [#allocation5], 4
      %s1394 = int_to_ptr.vmem [resolvable:$true] %s1393
      %1399 = dma.vmem_to_hbm [thread:$0]  %s1394, 256, %s6, [#allocation6], 128, 128, 8
    $region33: #{tpu_custom_call.1} parent=1 // pred_fallthru
      _
    // Predicated region
    $region34: #{tpu_custom_call.1} parent=1 // pred_check
      _
    $region35: #{tpu_custom_call.1} parent=1 // pred_check_branch
      %1401 = sbr.rel (0) target = $region37
    $region36: #{tpu_custom_call.1} parent=1 // pred_region
      %s1403 = ssub.s32 256, 256
      %1404 = vsyncadd [#allocation6], %s1403
      %s1405 = sshll.u32 [#allocation7], 4
      %s1406 = int_to_ptr.vmem [resolvable:$true] %s1405
      %1411 = dma.vmem_to_hbm [thread:$0]  %s1406, 256, %s7, [#allocation6], 128, 128, 8
    $region37: #{tpu_custom_call.1} parent=1 // pred_fallthru
      _
    // Predicated region
    $region38: #{tpu_custom_call.1} parent=1 // pred_check
      _
    $region39: #{tpu_custom_call.1} parent=1 // pred_check_branch
      %1413 = sbr.rel (0) target = $region41
    $region40: #{tpu_custom_call.1} parent=1 // pred_region
      %1414 = dma.done [#allocation4], 1024
    $region41: #{tpu_custom_call.1} parent=1 // pred_fallthru
      _
    // Predicated region
    $region42: #{tpu_custom_call.1} parent=1 // pred_check
      _
    $region43: #{tpu_custom_call.1} parent=1 // pred_check_branch
      %1416 = sbr.rel (0) target = $region45
    $region44: #{tpu_custom_call.1} parent=1 // pred_region
      %1417 = dma.done [#allocation6], 256
    $region45: #{tpu_custom_call.1} parent=1 // pred_fallthru
      _
    // Predicated region
    $region46: #{tpu_custom_call.1} parent=1 // pred_check
      _
    $region47: #{tpu_custom_call.1} parent=1 // pred_check_branch
      %1419 = sbr.rel (0) target = $region49
    $region48: #{tpu_custom_call.1} parent=1 // pred_region
      %1420 = dma.done [#allocation6], 256
    $region49: #{tpu_custom_call.1} parent=1 // pred_fallthru
      _
    %1421 = vsyncpa [#allocation4], 1
    %1422 = vsyncpa [#allocation6], 1

</llo_original>
